<compile_context>
chip_gen: v6e
topology: v6e:2x2x1
jax: 0.10.0
libtpu: 0.0.40
codegen_flags: <defaults>
</compile_context>

<pallas_src>
import functools

import jax
import jax.numpy as jnp
from jax.experimental import pallas as pl
from jax.experimental.pallas import tpu as pltpu


def _pagerank_network_kernel(p_ref, x_ref,
                             w1_ref, b1_ref,
                             w2_ref, b2_ref,
                             w3_ref, b3_ref,
                             out_ref,
                             *, iterations, alpha):
    """Fused 3-layer APPNP forward. All operands resident in VMEM."""
    # Hoisted, shared across all 3 * iterations propagation matmuls.
    p_scaled = (1.0 - alpha) * p_ref[...]

    def appnp_layer(x, w_ref, b_ref, act):
        # H = X @ W + b  (MXU matmul, f32 accumulate)
        h = jnp.dot(x, w_ref[...],
                    preferred_element_type=jnp.float32) + b_ref[...]
        if act:
            h = jnp.maximum(h, 0.0)
        ah = alpha * h            # hoisted out of the power-iteration loop
        z = h
        # Z_{k+1} = (1-alpha) * P @ Z_k + alpha * H, fully unrolled
        # (iterations is a compile-time constant, Z is only a few vregs).
        for _ in range(iterations):
            z = jnp.dot(p_scaled, z,
                        preferred_element_type=jnp.float32) + ah
        return z

    a1 = appnp_layer(x_ref[...], w1_ref, b1_ref, act=True)
    a2 = appnp_layer(a1, w2_ref, b2_ref, act=True)
    a3 = appnp_layer(a2, w3_ref, b3_ref, act=False)

    # log_softmax over the class axis (axis=1), max-shifted for stability.
    m = jnp.max(a3, axis=1, keepdims=True)
    lse = jnp.log(jnp.sum(jnp.exp(a3 - m), axis=1, keepdims=True)) + m
    out_ref[...] = a3 - lse


def page_rank_network_forward(P, X, params, *, iterations, alpha):
    """Full PageRankNetwork forward (eval mode), one fused Pallas kernel."""
    N = P.shape[0]
    C = params["W3"].shape[1]
    kernel = functools.partial(_pagerank_network_kernel,
                               iterations=iterations, alpha=alpha)
    return pl.pallas_call(
        kernel,
        out_shape=jax.ShapeDtypeStruct((N, C), jnp.float32),
        # No grid: whole (small) arrays are DMA'd into VMEM once and the body
        # runs a single time; all intermediates stay in vregs/VMEM.
        compiler_params=pltpu.CompilerParams(vmem_limit_bytes=64 << 20),
    )(P, X,
      params["W1"], params["b1"],
      params["W2"], params["b2"],
      params["W3"], params["b3"])


# ---------------- reference (pure JAX) for correctness check ----------------
def _ref_layer(P, X, W, b, *, iterations, alpha, act):
    h = X @ W + b
    if act:
        h = jnp.maximum(h, 0.0)
    z = h
    for _ in range(iterations):
        z = (1.0 - alpha) * (P @ z) + alpha * h
    return z


def _ref_forward(P, X, params, *, iterations, alpha):
    a1 = _ref_layer(P, X, params["W1"], params["b1"],
                    iterations=iterations, alpha=alpha, act=True)
    a2 = _ref_layer(P, a1, params["W2"], params["b2"],
                    iterations=iterations, alpha=alpha, act=True)
    a3 = _ref_layer(P, a2, params["W3"], params["b3"],
                    iterations=iterations, alpha=alpha, act=False)
    return jax.nn.log_softmax(a3, axis=1)


# ---------------- parameter / input construction ----------------
def _xavier_uniform(key, shape):
    fan_in, fan_out = shape
    limit = (6.0 / (fan_in + fan_out)) ** 0.5
    return jax.random.uniform(key, shape, jnp.float32, -limit, limit)


if __name__ == "__main__":
    # Small graph consistent with the module: N nodes, F features,
    # hidden layers [32, 16], 8 classes, 10 power iterations, alpha=0.1.
    N, F = 64, 32
    L0, L1, C = 32, 16, 8
    ITERATIONS, ALPHA = 10, 0.1

    key = jax.random.PRNGKey(0)
    k_adj, k_x, k_w1, k_b1, k_w2, k_b2, k_w3, k_b3 = jax.random.split(key, 8)

    # Symmetric-normalized adjacency with self loops: D^-1/2 (A + I) D^-1/2
    a = (jax.random.uniform(k_adj, (N, N)) > 0.85).astype(jnp.float32)
    a = jnp.maximum(a, a.T) + jnp.eye(N, dtype=jnp.float32)
    d_inv_sqrt = 1.0 / jnp.sqrt(jnp.sum(a, axis=1))
    P = a * d_inv_sqrt[:, None] * d_inv_sqrt[None, :]

    X = jax.random.normal(k_x, (N, F), dtype=jnp.float32)

    params = {
        "W1": _xavier_uniform(k_w1, (F, L0)),  "b1": _xavier_uniform(k_b1, (1, L0)),
        "W2": _xavier_uniform(k_w2, (L0, L1)), "b2": _xavier_uniform(k_b2, (1, L1)),
        "W3": _xavier_uniform(k_w3, (L1, C)),  "b3": _xavier_uniform(k_b3, (1, C)),
    }

    out = page_rank_network_forward(P, X, params,
                                    iterations=ITERATIONS, alpha=ALPHA)
    out = jax.block_until_ready(out)

    ref = _ref_forward(P, X, params, iterations=ITERATIONS, alpha=ALPHA)
    assert out.shape == (N, C)
    assert jnp.allclose(out, ref, atol=1e-4, rtol=1e-4), \
        f"max abs err {jnp.max(jnp.abs(out - ref))}"

    print("KERNEL_OK")
</pallas_src>

<mosaic_0001>
module attributes {stable_mosaic.version = 11 : i64} {
  func.func @_pagerank_network_kernel(%arg0: memref<64x64xf32, #tpu.memory_space<vmem>>, %arg1: memref<64x32xf32, #tpu.memory_space<vmem>>, %arg2: memref<32x32xf32, #tpu.memory_space<vmem>>, %arg3: memref<1x32xf32, #tpu.memory_space<vmem>>, %arg4: memref<32x16xf32, #tpu.memory_space<vmem>>, %arg5: memref<1x16xf32, #tpu.memory_space<vmem>>, %arg6: memref<16x8xf32, #tpu.memory_space<vmem>>, %arg7: memref<1x8xf32, #tpu.memory_space<vmem>>, %arg8: memref<64x8xf32, #tpu.memory_space<vmem>>) attributes {dimension_semantics = [], scalar_prefetch = 0 : i64, scratch_operands = 0 : i64, tpu.core_type = #tpu.core_type<tc>} {
    %c0 = arith.constant 0 : index
    %c0_0 = arith.constant 0 : index
    %0 = vector.load %arg0[%c0, %c0_0] : memref<64x64xf32, #tpu.memory_space<vmem>>, vector<64x64xf32>
    %cst = arith.constant 0.899999976 : f32
    %1 = vector.broadcast %cst : f32 to vector<64x64xf32>
    %2 = arith.mulf %1, %0 : vector<64x64xf32>
    %c0_1 = arith.constant 0 : index
    %c0_2 = arith.constant 0 : index
    %3 = vector.load %arg1[%c0_1, %c0_2] : memref<64x32xf32, #tpu.memory_space<vmem>>, vector<64x32xf32>
    %c0_3 = arith.constant 0 : index
    %c0_4 = arith.constant 0 : index
    %4 = vector.load %arg2[%c0_3, %c0_4] : memref<32x32xf32, #tpu.memory_space<vmem>>, vector<32x32xf32>
    %cst_5 = arith.constant dense<0.000000e+00> : vector<64x32xf32>
    %5 = tpu.matmul %3, %4, %cst_5 {dimension_numbers = #tpu.dot_dimension_numbers<[1], [0], [0], [1], [0, 0, 1, 1], [], []>} : vector<64x32xf32>, vector<32x32xf32>, vector<64x32xf32> -> vector<64x32xf32>
    %c0_6 = arith.constant 0 : index
    %c0_7 = arith.constant 0 : index
    %6 = vector.load %arg3[%c0_6, %c0_7] : memref<1x32xf32, #tpu.memory_space<vmem>>, vector<1x32xf32>
    %7 = vector.broadcast %6 : vector<1x32xf32> to vector<64x32xf32>
    %8 = arith.addf %5, %7 : vector<64x32xf32>
    %cst_8 = arith.constant 0.000000e+00 : f32
    %9 = vector.broadcast %cst_8 : f32 to vector<64x32xf32>
    %10 = arith.maximumf %8, %9 : vector<64x32xf32>
    %cst_9 = arith.constant 1.000000e-01 : f32
    %11 = vector.broadcast %cst_9 : f32 to vector<64x32xf32>
    %12 = arith.mulf %11, %10 : vector<64x32xf32>
    %cst_10 = arith.constant dense<0.000000e+00> : vector<64x32xf32>
    %13 = tpu.matmul %2, %10, %cst_10 {dimension_numbers = #tpu.dot_dimension_numbers<[1], [0], [0], [1], [0, 0, 1, 1], [], []>} : vector<64x64xf32>, vector<64x32xf32>, vector<64x32xf32> -> vector<64x32xf32>
    %14 = arith.addf %13, %12 : vector<64x32xf32>
    %cst_11 = arith.constant dense<0.000000e+00> : vector<64x32xf32>
    %15 = tpu.matmul %2, %14, %cst_11 {dimension_numbers = #tpu.dot_dimension_numbers<[1], [0], [0], [1], [0, 0, 1, 1], [], []>} : vector<64x64xf32>, vector<64x32xf32>, vector<64x32xf32> -> vector<64x32xf32>
    %16 = arith.addf %15, %12 : vector<64x32xf32>
    %cst_12 = arith.constant dense<0.000000e+00> : vector<64x32xf32>
    %17 = tpu.matmul %2, %16, %cst_12 {dimension_numbers = #tpu.dot_dimension_numbers<[1], [0], [0], [1], [0, 0, 1, 1], [], []>} : vector<64x64xf32>, vector<64x32xf32>, vector<64x32xf32> -> vector<64x32xf32>
    %18 = arith.addf %17, %12 : vector<64x32xf32>
    %cst_13 = arith.constant dense<0.000000e+00> : vector<64x32xf32>
    %19 = tpu.matmul %2, %18, %cst_13 {dimension_numbers = #tpu.dot_dimension_numbers<[1], [0], [0], [1], [0, 0, 1, 1], [], []>} : vector<64x64xf32>, vector<64x32xf32>, vector<64x32xf32> -> vector<64x32xf32>
    %20 = arith.addf %19, %12 : vector<64x32xf32>
    %cst_14 = arith.constant dense<0.000000e+00> : vector<64x32xf32>
    %21 = tpu.matmul %2, %20, %cst_14 {dimension_numbers = #tpu.dot_dimension_numbers<[1], [0], [0], [1], [0, 0, 1, 1], [], []>} : vector<64x64xf32>, vector<64x32xf32>, vector<64x32xf32> -> vector<64x32xf32>
    %22 = arith.addf %21, %12 : vector<64x32xf32>
    %cst_15 = arith.constant dense<0.000000e+00> : vector<64x32xf32>
    %23 = tpu.matmul %2, %22, %cst_15 {dimension_numbers = #tpu.dot_dimension_numbers<[1], [0], [0], [1], [0, 0, 1, 1], [], []>} : vector<64x64xf32>, vector<64x32xf32>, vector<64x32xf32> -> vector<64x32xf32>
    %24 = arith.addf %23, %12 : vector<64x32xf32>
    %cst_16 = arith.constant dense<0.000000e+00> : vector<64x32xf32>
    %25 = tpu.matmul %2, %24, %cst_16 {dimension_numbers = #tpu.dot_dimension_numbers<[1], [0], [0], [1], [0, 0, 1, 1], [], []>} : vector<64x64xf32>, vector<64x32xf32>, vector<64x32xf32> -> vector<64x32xf32>
    %26 = arith.addf %25, %12 : vector<64x32xf32>
    %cst_17 = arith.constant dense<0.000000e+00> : vector<64x32xf32>
    %27 = tpu.matmul %2, %26, %cst_17 {dimension_numbers = #tpu.dot_dimension_numbers<[1], [0], [0], [1], [0, 0, 1, 1], [], []>} : vector<64x64xf32>, vector<64x32xf32>, vector<64x32xf32> -> vector<64x32xf32>
    %28 = arith.addf %27, %12 : vector<64x32xf32>
    %cst_18 = arith.constant dense<0.000000e+00> : vector<64x32xf32>
    %29 = tpu.matmul %2, %28, %cst_18 {dimension_numbers = #tpu.dot_dimension_numbers<[1], [0], [0], [1], [0, 0, 1, 1], [], []>} : vector<64x64xf32>, vector<64x32xf32>, vector<64x32xf32> -> vector<64x32xf32>
    %30 = arith.addf %29, %12 : vector<64x32xf32>
    %cst_19 = arith.constant dense<0.000000e+00> : vector<64x32xf32>
    %31 = tpu.matmul %2, %30, %cst_19 {dimension_numbers = #tpu.dot_dimension_numbers<[1], [0], [0], [1], [0, 0, 1, 1], [], []>} : vector<64x64xf32>, vector<64x32xf32>, vector<64x32xf32> -> vector<64x32xf32>
    %32 = arith.addf %31, %12 : vector<64x32xf32>
    %c0_20 = arith.constant 0 : index
    %c0_21 = arith.constant 0 : index
    %33 = vector.load %arg4[%c0_20, %c0_21] : memref<32x16xf32, #tpu.memory_space<vmem>>, vector<32x16xf32>
    %cst_22 = arith.constant dense<0.000000e+00> : vector<64x16xf32>
    %34 = tpu.matmul %32, %33, %cst_22 {dimension_numbers = #tpu.dot_dimension_numbers<[1], [0], [0], [1], [0, 0, 1, 1], [], []>} : vector<64x32xf32>, vector<32x16xf32>, vector<64x16xf32> -> vector<64x16xf32>
    %c0_23 = arith.constant 0 : index
    %c0_24 = arith.constant 0 : index
    %35 = vector.load %arg5[%c0_23, %c0_24] : memref<1x16xf32, #tpu.memory_space<vmem>>, vector<1x16xf32>
    %36 = vector.broadcast %35 : vector<1x16xf32> to vector<64x16xf32>
    %37 = arith.addf %34, %36 : vector<64x16xf32>
    %cst_25 = arith.constant 0.000000e+00 : f32
    %38 = vector.broadcast %cst_25 : f32 to vector<64x16xf32>
    %39 = arith.maximumf %37, %38 : vector<64x16xf32>
    %cst_26 = arith.constant 1.000000e-01 : f32
    %40 = vector.broadcast %cst_26 : f32 to vector<64x16xf32>
    %41 = arith.mulf %40, %39 : vector<64x16xf32>
    %cst_27 = arith.constant dense<0.000000e+00> : vector<64x16xf32>
    %42 = tpu.matmul %2, %39, %cst_27 {dimension_numbers = #tpu.dot_dimension_numbers<[1], [0], [0], [1], [0, 0, 1, 1], [], []>} : vector<64x64xf32>, vector<64x16xf32>, vector<64x16xf32> -> vector<64x16xf32>
    %43 = arith.addf %42, %41 : vector<64x16xf32>
    %cst_28 = arith.constant dense<0.000000e+00> : vector<64x16xf32>
    %44 = tpu.matmul %2, %43, %cst_28 {dimension_numbers = #tpu.dot_dimension_numbers<[1], [0], [0], [1], [0, 0, 1, 1], [], []>} : vector<64x64xf32>, vector<64x16xf32>, vector<64x16xf32> -> vector<64x16xf32>
    %45 = arith.addf %44, %41 : vector<64x16xf32>
    %cst_29 = arith.constant dense<0.000000e+00> : vector<64x16xf32>
    %46 = tpu.matmul %2, %45, %cst_29 {dimension_numbers = #tpu.dot_dimension_numbers<[1], [0], [0], [1], [0, 0, 1, 1], [], []>} : vector<64x64xf32>, vector<64x16xf32>, vector<64x16xf32> -> vector<64x16xf32>
    %47 = arith.addf %46, %41 : vector<64x16xf32>
    %cst_30 = arith.constant dense<0.000000e+00> : vector<64x16xf32>
    %48 = tpu.matmul %2, %47, %cst_30 {dimension_numbers = #tpu.dot_dimension_numbers<[1], [0], [0], [1], [0, 0, 1, 1], [], []>} : vector<64x64xf32>, vector<64x16xf32>, vector<64x16xf32> -> vector<64x16xf32>
    %49 = arith.addf %48, %41 : vector<64x16xf32>
    %cst_31 = arith.constant dense<0.000000e+00> : vector<64x16xf32>
    %50 = tpu.matmul %2, %49, %cst_31 {dimension_numbers = #tpu.dot_dimension_numbers<[1], [0], [0], [1], [0, 0, 1, 1], [], []>} : vector<64x64xf32>, vector<64x16xf32>, vector<64x16xf32> -> vector<64x16xf32>
    %51 = arith.addf %50, %41 : vector<64x16xf32>
    %cst_32 = arith.constant dense<0.000000e+00> : vector<64x16xf32>
    %52 = tpu.matmul %2, %51, %cst_32 {dimension_numbers = #tpu.dot_dimension_numbers<[1], [0], [0], [1], [0, 0, 1, 1], [], []>} : vector<64x64xf32>, vector<64x16xf32>, vector<64x16xf32> -> vector<64x16xf32>
    %53 = arith.addf %52, %41 : vector<64x16xf32>
    %cst_33 = arith.constant dense<0.000000e+00> : vector<64x16xf32>
    %54 = tpu.matmul %2, %53, %cst_33 {dimension_numbers = #tpu.dot_dimension_numbers<[1], [0], [0], [1], [0, 0, 1, 1], [], []>} : vector<64x64xf32>, vector<64x16xf32>, vector<64x16xf32> -> vector<64x16xf32>
    %55 = arith.addf %54, %41 : vector<64x16xf32>
    %cst_34 = arith.constant dense<0.000000e+00> : vector<64x16xf32>
    %56 = tpu.matmul %2, %55, %cst_34 {dimension_numbers = #tpu.dot_dimension_numbers<[1], [0], [0], [1], [0, 0, 1, 1], [], []>} : vector<64x64xf32>, vector<64x16xf32>, vector<64x16xf32> -> vector<64x16xf32>
    %57 = arith.addf %56, %41 : vector<64x16xf32>
    %cst_35 = arith.constant dense<0.000000e+00> : vector<64x16xf32>
    %58 = tpu.matmul %2, %57, %cst_35 {dimension_numbers = #tpu.dot_dimension_numbers<[1], [0], [0], [1], [0, 0, 1, 1], [], []>} : vector<64x64xf32>, vector<64x16xf32>, vector<64x16xf32> -> vector<64x16xf32>
    %59 = arith.addf %58, %41 : vector<64x16xf32>
    %cst_36 = arith.constant dense<0.000000e+00> : vector<64x16xf32>
    %60 = tpu.matmul %2, %59, %cst_36 {dimension_numbers = #tpu.dot_dimension_numbers<[1], [0], [0], [1], [0, 0, 1, 1], [], []>} : vector<64x64xf32>, vector<64x16xf32>, vector<64x16xf32> -> vector<64x16xf32>
    %61 = arith.addf %60, %41 : vector<64x16xf32>
    %c0_37 = arith.constant 0 : index
    %c0_38 = arith.constant 0 : index
    %62 = vector.load %arg6[%c0_37, %c0_38] : memref<16x8xf32, #tpu.memory_space<vmem>>, vector<16x8xf32>
    %cst_39 = arith.constant dense<0.000000e+00> : vector<64x8xf32>
    %63 = tpu.matmul %61, %62, %cst_39 {dimension_numbers = #tpu.dot_dimension_numbers<[1], [0], [0], [1], [0, 0, 1, 1], [], []>} : vector<64x16xf32>, vector<16x8xf32>, vector<64x8xf32> -> vector<64x8xf32>
    %c0_40 = arith.constant 0 : index
    %c0_41 = arith.constant 0 : index
    %64 = vector.load %arg7[%c0_40, %c0_41] : memref<1x8xf32, #tpu.memory_space<vmem>>, vector<1x8xf32>
    %65 = vector.broadcast %64 : vector<1x8xf32> to vector<64x8xf32>
    %66 = arith.addf %63, %65 : vector<64x8xf32>
    %cst_42 = arith.constant 1.000000e-01 : f32
    %67 = vector.broadcast %cst_42 : f32 to vector<64x8xf32>
    %68 = arith.mulf %67, %66 : vector<64x8xf32>
    %cst_43 = arith.constant dense<0.000000e+00> : vector<64x8xf32>
    %69 = tpu.matmul %2, %66, %cst_43 {dimension_numbers = #tpu.dot_dimension_numbers<[1], [0], [0], [1], [0, 0, 1, 1], [], []>} : vector<64x64xf32>, vector<64x8xf32>, vector<64x8xf32> -> vector<64x8xf32>
    %70 = arith.addf %69, %68 : vector<64x8xf32>
    %cst_44 = arith.constant dense<0.000000e+00> : vector<64x8xf32>
    %71 = tpu.matmul %2, %70, %cst_44 {dimension_numbers = #tpu.dot_dimension_numbers<[1], [0], [0], [1], [0, 0, 1, 1], [], []>} : vector<64x64xf32>, vector<64x8xf32>, vector<64x8xf32> -> vector<64x8xf32>
    %72 = arith.addf %71, %68 : vector<64x8xf32>
    %cst_45 = arith.constant dense<0.000000e+00> : vector<64x8xf32>
    %73 = tpu.matmul %2, %72, %cst_45 {dimension_numbers = #tpu.dot_dimension_numbers<[1], [0], [0], [1], [0, 0, 1, 1], [], []>} : vector<64x64xf32>, vector<64x8xf32>, vector<64x8xf32> -> vector<64x8xf32>
    %74 = arith.addf %73, %68 : vector<64x8xf32>
    %cst_46 = arith.constant dense<0.000000e+00> : vector<64x8xf32>
    %75 = tpu.matmul %2, %74, %cst_46 {dimension_numbers = #tpu.dot_dimension_numbers<[1], [0], [0], [1], [0, 0, 1, 1], [], []>} : vector<64x64xf32>, vector<64x8xf32>, vector<64x8xf32> -> vector<64x8xf32>
    %76 = arith.addf %75, %68 : vector<64x8xf32>
    %cst_47 = arith.constant dense<0.000000e+00> : vector<64x8xf32>
    %77 = tpu.matmul %2, %76, %cst_47 {dimension_numbers = #tpu.dot_dimension_numbers<[1], [0], [0], [1], [0, 0, 1, 1], [], []>} : vector<64x64xf32>, vector<64x8xf32>, vector<64x8xf32> -> vector<64x8xf32>
    %78 = arith.addf %77, %68 : vector<64x8xf32>
    %cst_48 = arith.constant dense<0.000000e+00> : vector<64x8xf32>
    %79 = tpu.matmul %2, %78, %cst_48 {dimension_numbers = #tpu.dot_dimension_numbers<[1], [0], [0], [1], [0, 0, 1, 1], [], []>} : vector<64x64xf32>, vector<64x8xf32>, vector<64x8xf32> -> vector<64x8xf32>
    %80 = arith.addf %79, %68 : vector<64x8xf32>
    %cst_49 = arith.constant dense<0.000000e+00> : vector<64x8xf32>
    %81 = tpu.matmul %2, %80, %cst_49 {dimension_numbers = #tpu.dot_dimension_numbers<[1], [0], [0], [1], [0, 0, 1, 1], [], []>} : vector<64x64xf32>, vector<64x8xf32>, vector<64x8xf32> -> vector<64x8xf32>
    %82 = arith.addf %81, %68 : vector<64x8xf32>
    %cst_50 = arith.constant dense<0.000000e+00> : vector<64x8xf32>
    %83 = tpu.matmul %2, %82, %cst_50 {dimension_numbers = #tpu.dot_dimension_numbers<[1], [0], [0], [1], [0, 0, 1, 1], [], []>} : vector<64x64xf32>, vector<64x8xf32>, vector<64x8xf32> -> vector<64x8xf32>
    %84 = arith.addf %83, %68 : vector<64x8xf32>
    %cst_51 = arith.constant dense<0.000000e+00> : vector<64x8xf32>
    %85 = tpu.matmul %2, %84, %cst_51 {dimension_numbers = #tpu.dot_dimension_numbers<[1], [0], [0], [1], [0, 0, 1, 1], [], []>} : vector<64x64xf32>, vector<64x8xf32>, vector<64x8xf32> -> vector<64x8xf32>
    %86 = arith.addf %85, %68 : vector<64x8xf32>
    %cst_52 = arith.constant dense<0.000000e+00> : vector<64x8xf32>
    %87 = tpu.matmul %2, %86, %cst_52 {dimension_numbers = #tpu.dot_dimension_numbers<[1], [0], [0], [1], [0, 0, 1, 1], [], []>} : vector<64x64xf32>, vector<64x8xf32>, vector<64x8xf32> -> vector<64x8xf32>
    %88 = arith.addf %87, %68 : vector<64x8xf32>
    %cst_53 = arith.constant dense<0xFF800000> : vector<64xf32>
    %89 = vector.multi_reduction <maximumf>, %88, %cst_53 [1] : vector<64x8xf32> to vector<64xf32>
    %90 = vector.shape_cast %89 : vector<64xf32> to vector<64x1xf32>
    %91 = vector.broadcast %90 : vector<64x1xf32> to vector<64x8xf32>
    %92 = arith.subf %88, %91 : vector<64x8xf32>
    %93 = math.exp %92 : vector<64x8xf32>
    %cst_54 = arith.constant dense<0.000000e+00> : vector<64xf32>
    %94 = vector.multi_reduction <add>, %93, %cst_54 [1] : vector<64x8xf32> to vector<64xf32>
    %95 = vector.shape_cast %94 : vector<64xf32> to vector<64x1xf32>
    %96 = math.log %95 : vector<64x1xf32>
    %97 = arith.addf %96, %90 : vector<64x1xf32>
    %98 = vector.broadcast %97 : vector<64x1xf32> to vector<64x8xf32>
    %99 = arith.subf %88, %98 : vector<64x8xf32>
    %c0_55 = arith.constant 0 : index
    %c0_56 = arith.constant 0 : index
    %100 = vector.load %arg8[%c0_55, %c0_56] : memref<64x8xf32, #tpu.memory_space<vmem>>, vector<64x8xf32>
    tpu.vector_store %arg8[%c0_55, %c0_56], %99 {strides = array<i32>} : memref<64x8xf32, #tpu.memory_space<vmem>>, vector<64x8xf32>,
    return
  }
}

</mosaic_0001>

<llo_original>
// kernel: tpu_custom_call.1
$region0: #{tpu_custom_call.1}
  #allocation0 [shape = 'u32[]', space=smem, size = 0x4, offset = 0x4, fixed_abs, tag = 'smem constant byte address 0x4 - core index']
  #allocation1 [shape = 'u32[144,128]{1,0:T(1,128)}', space=vmem, size = 0x12000, scoped, tag = 'internal scratch']
  %s0 = inlined_call_operand.vmem [shape: f32[64,64], index: 0, kind: input, shape index: {}]
  %s1 = inlined_call_operand.vmem [shape: f32[64,32], index: 1, kind: input, shape index: {}]
  %s2 = inlined_call_operand.vmem [shape: f32[32,32], index: 2, kind: input, shape index: {}]
  %s3 = inlined_call_operand.vmem [shape: f32[1,32], index: 3, kind: input, shape index: {}]
  %s4 = inlined_call_operand.vmem [shape: f32[32,16], index: 4, kind: input, shape index: {}]
  %s5 = inlined_call_operand.vmem [shape: f32[1,16], index: 5, kind: input, shape index: {}]
  %s6 = inlined_call_operand.vmem [shape: f32[16,8], index: 6, kind: input, shape index: {}]
  %s7 = inlined_call_operand.vmem [shape: f32[1,8], index: 7, kind: input, shape index: {}]
  %s8 = inlined_call_operand.vmem [shape: f32[64,8], index: 8, kind: output, shape index: {}]
  %s9 = sld [smem:[#allocation0]]
  $region42: #{tpu_custom_call.1} parent=0
    _
  %s11 = ssub.s32 1, %s9
  %s12 = scalar_select 0, %s11, %s9
  // Predicated region
  $region2: #{tpu_custom_call.1} parent=0 // pred_check
    _
  $region3: #{tpu_custom_call.1} parent=0 // pred_check_branch
    %14 = sbr.rel (0) target = $region5
  $region4: #{tpu_custom_call.1} parent=0 // pred_region
    _
  $region5: #{tpu_custom_call.1} parent=0 // pred_fallthru
    _
  // Predicated region
  $region6: #{tpu_custom_call.1} parent=0 // pred_check
    _
  $region7: #{tpu_custom_call.1} parent=0 // pred_check_branch
    %16 = sbr.rel (0) target = $region9
  $region8: #{tpu_custom_call.1} parent=0 // pred_region
    _
  $region9: #{tpu_custom_call.1} parent=0 // pred_fallthru
    _
  // Predicated region
  $region10: #{tpu_custom_call.1} parent=0 // pred_check
    _
  $region11: #{tpu_custom_call.1} parent=0 // pred_check_branch
    %18 = sbr.rel (0) target = $region13
  $region12: #{tpu_custom_call.1} parent=0 // pred_region
    _
  $region13: #{tpu_custom_call.1} parent=0 // pred_fallthru
    _
  // Predicated region
  $region14: #{tpu_custom_call.1} parent=0 // pred_check
    _
  $region15: #{tpu_custom_call.1} parent=0 // pred_check_branch
    %20 = sbr.rel (0) target = $region17
  $region16: #{tpu_custom_call.1} parent=0 // pred_region
    _
  $region17: #{tpu_custom_call.1} parent=0 // pred_fallthru
    _
  // Predicated region
  $region18: #{tpu_custom_call.1} parent=0 // pred_check
    _
  $region19: #{tpu_custom_call.1} parent=0 // pred_check_branch
    %22 = sbr.rel (0) target = $region21
  $region20: #{tpu_custom_call.1} parent=0 // pred_region
    _
  $region21: #{tpu_custom_call.1} parent=0 // pred_fallthru
    _
  // Predicated region
  $region22: #{tpu_custom_call.1} parent=0 // pred_check
    _
  $region23: #{tpu_custom_call.1} parent=0 // pred_check_branch
    %24 = sbr.rel (0) target = $region25
  $region24: #{tpu_custom_call.1} parent=0 // pred_region
    _
  $region25: #{tpu_custom_call.1} parent=0 // pred_fallthru
    _
  // Predicated region
  $region26: #{tpu_custom_call.1} parent=0 // pred_check
    _
  $region27: #{tpu_custom_call.1} parent=0 // pred_check_branch
    %26 = sbr.rel (0) target = $region29
  $region28: #{tpu_custom_call.1} parent=0 // pred_region
    _
  $region29: #{tpu_custom_call.1} parent=0 // pred_fallthru
    _
  // Predicated region
  $region30: #{tpu_custom_call.1} parent=0 // pred_check
    _
  $region31: #{tpu_custom_call.1} parent=0 // pred_check_branch
    %28 = sbr.rel (0) target = $region33
  $region32: #{tpu_custom_call.1} parent=0 // pred_region
    _
  $region33: #{tpu_custom_call.1} parent=0 // pred_fallthru
    _
  %v29 = vld [vmem:[%s0] sm:$0xff]
  %v30 = vld [vmem:[%s0 + $0x8] sm:$0xff]
  %v31 = vld [vmem:[%s0 + $0x10] sm:$0xff]
  %v32 = vld [vmem:[%s0 + $0x18] sm:$0xff]
  %v33 = vld [vmem:[%s0 + $0x20] sm:$0xff]
  %v34 = vld [vmem:[%s0 + $0x28] sm:$0xff]
  %v35 = vld [vmem:[%s0 + $0x30] sm:$0xff]
  %v36 = vld [vmem:[%s0 + $0x38] sm:$0xff]
  %v37 = vmul.f32 %v29, 0.9
  %v38 = vmul.f32 %v30, 0.9
  %v39 = vmul.f32 %v31, 0.9
  %v40 = vmul.f32 %v32, 0.9
  %v41 = vmul.f32 %v33, 0.9
  %v42 = vmul.f32 %v34, 0.9
  %v43 = vmul.f32 %v35, 0.9
  %v44 = vmul.f32 %v36, 0.9
  %v45 = vld [vmem:[%s1] sm:$0xff]
  %v46 = vld [vmem:[%s1 + $0x8] sm:$0xff]
  %v47 = vld [vmem:[%s1 + $0x10] sm:$0xff]
  %v48 = vld [vmem:[%s1 + $0x18] sm:$0xff]
  %v49 = vld [vmem:[%s1 + $0x20] sm:$0xff]
  %v50 = vld [vmem:[%s1 + $0x28] sm:$0xff]
  %v51 = vld [vmem:[%s1 + $0x30] sm:$0xff]
  %v52 = vld [vmem:[%s1 + $0x38] sm:$0xff]
  %v53 = vld [vmem:[%s2] sm:$0xff]
  %v54 = vld [vmem:[%s2 + $0x8] sm:$0xff]
  %v55 = vld [vmem:[%s2 + $0x10] sm:$0xff]
  %v56 = vld [vmem:[%s2 + $0x18] sm:$0xff]
  %v57 = vld [vmem:[%s3] sm:$0x1]
  %v59 = vlaneseq
  %v60 = vshrl.u32 %v59, 7
  %v61 = vsub.s32 0, %v60
  %v62 = vrot.slane %v57, %v61
  %vm64 = vcmask 261120
  %v66 = vsel %vm64, %v45, 0
  %v69 = vsel %vm64, %v46, 0
  %v72 = vsel %vm64, %v47, 0
  %v75 = vsel %vm64, %v48, 0
  %v78 = vsel %vm64, %v49, 0
  %v81 = vsel %vm64, %v50, 0
  %v84 = vsel %vm64, %v51, 0
  %v87 = vsel %vm64, %v52, 0
  %89 = vmatprep.subr.mxu0 0.0
  %90 = vmatpush1.msra.mxu0 0.0
  %91 = vmatprep.subr.mxu0 0.0
  %92 = vmatpush1.msra.mxu0 0.0
  %93 = vmatprep.subr.mxu0 0.0
  %94 = vmatpush1.msra.mxu0 0.0
  %95 = vmatprep.subr.mxu0 0.0
  %96 = vmatpush1.msra.mxu0 0.0
  %97 = vmatprep.subr.mxu0 0.0
  %98 = vmatpush1.msra.mxu0 0.0
  %99 = vmatprep.subr.mxu0 0.0
  %100 = vmatpush1.msra.mxu0 0.0
  %101 = vmatprep.subr.mxu0 0.0
  %102 = vmatpush1.msra.mxu0 0.0
  %103 = vmatprep.subr.mxu0 0.0
  %104 = vmatpush1.msra.mxu0 0.0
  %105 = vmatprep.subr.mxu0 0.0
  %106 = vmatpush1.msra.mxu0 0.0
  %107 = vmatprep.subr.mxu0 0.0
  %108 = vmatpush1.msra.mxu0 0.0
  %109 = vmatprep.subr.mxu0 0.0
  %110 = vmatpush1.msra.mxu0 0.0
  %111 = vmatprep.subr.mxu0 0.0
  %112 = vmatpush1.msra.mxu0 0.0
  %113 = vmatprep.subr.mxu0 0.0
  %114 = vmatpush1.msra.mxu0 %v56
  %115 = vmatprep.subr.mxu0 0.0
  %116 = vmatpush1.msra.mxu0 %v55
  %117 = vmatprep.subr.mxu0 0.0
  %118 = vmatpush1.msra.mxu0 %v54
  %119 = vmatprep.subr.mxu0 0.0
  %120 = vmatpush1.msra.mxu0 %v53
  %121 = vmatprep.subr.mxu0 0.0
  %122 = vmatpush2.msra.mxu0 0.0
  %123 = vmatprep.subr.mxu0 0.0
  %124 = vmatpush2.msra.mxu0 0.0
  %125 = vmatprep.subr.mxu0 0.0
  %126 = vmatpush2.msra.mxu0 0.0
  %127 = vmatprep.subr.mxu0 0.0
  %128 = vmatpush2.msra.mxu0 0.0
  %129 = vmatprep.subr.mxu0 0.0
  %130 = vmatpush2.msra.mxu0 0.0
  %131 = vmatprep.subr.mxu0 0.0
  %132 = vmatpush2.msra.mxu0 0.0
  %133 = vmatprep.subr.mxu0 0.0
  %134 = vmatpush2.msra.mxu0 0.0
  %135 = vmatprep.subr.mxu0 0.0
  %136 = vmatpush2.msra.mxu0 0.0
  %137 = vmatprep.subr.mxu0 0.0
  %138 = vmatpush2.msra.mxu0 0.0
  %139 = vmatprep.subr.mxu0 0.0
  %140 = vmatpush2.msra.mxu0 0.0
  %141 = vmatprep.subr.mxu0 0.0
  %142 = vmatpush2.msra.mxu0 0.0
  %143 = vmatprep.subr.mxu0 0.0
  %144 = vmatpush2.msra.mxu0 0.0
  %145 = vmatprep.subr.mxu0 0.0
  %146 = vmatpush2.msra.mxu0 0.0
  %147 = vmatprep.subr.mxu0 0.0
  %148 = vmatpush2.msra.mxu0 0.0
  %149 = vmatprep.subr.mxu0 0.0
  %150 = vmatpush2.msra.mxu0 0.0
  %151 = vmatprep.subr.mxu0 0.0
  %152 = vmatpush2.msra.mxu0 0.0
  %153 = vmatprep.mubr.f32.mxu0 0.0
  %154 = vmatmul.mubr.f32.gmra.mxu0 %v66
  %v155 = vpop.f32.mrf.mxu0
  %v156 = vadd.f32 %v62, %v155
  %v157 = vpop.f32.mrf.mxu0
  %158 = vmatprep.mubr.f32.mxu0 0.0
  %159 = vmatmul.mubr.f32.gmra.mxu0 %v69
  %v160 = vpop.f32.mrf.mxu0
  %v161 = vadd.f32 %v62, %v160
  %v162 = vpop.f32.mrf.mxu0
  %163 = vmatprep.mubr.f32.mxu0 0.0
  %164 = vmatmul.mubr.f32.gmra.mxu0 %v72
  %v165 = vpop.f32.mrf.mxu0
  %v166 = vadd.f32 %v62, %v165
  %v167 = vpop.f32.mrf.mxu0
  %168 = vmatprep.mubr.f32.mxu0 0.0
  %169 = vmatmul.mubr.f32.gmra.mxu0 %v75
  %v170 = vpop.f32.mrf.mxu0
  %v171 = vadd.f32 %v62, %v170
  %v172 = vpop.f32.mrf.mxu0
  %173 = vmatprep.mubr.f32.mxu0 0.0
  %174 = vmatmul.mubr.f32.gmra.mxu0 %v78
  %v175 = vpop.f32.mrf.mxu0
  %v176 = vadd.f32 %v62, %v175
  %v177 = vpop.f32.mrf.mxu0
  %178 = vmatprep.mubr.f32.mxu0 0.0
  %179 = vmatmul.mubr.f32.gmra.mxu0 %v81
  %v180 = vpop.f32.mrf.mxu0
  %v181 = vadd.f32 %v62, %v180
  %v182 = vpop.f32.mrf.mxu0
  %183 = vmatprep.mubr.f32.mxu0 0.0
  %184 = vmatmul.mubr.f32.gmra.mxu0 %v84
  %v185 = vpop.f32.mrf.mxu0
  %v186 = vadd.f32 %v62, %v185
  %v187 = vpop.f32.mrf.mxu0
  %188 = vmatprep.mubr.f32.mxu0 0.0
  %189 = vmatmul.mubr.f32.gmra.mxu0 %v87
  %v190 = vpop.f32.mrf.mxu0
  %v191 = vadd.f32 %v62, %v190
  %v192 = vpop.f32.mrf.mxu0
  %193 = vdwg.mxu0
  %v194 = vmax.f32 %v156, 0.0
  %v195 = vmax.f32 %v161, 0.0
  %v196 = vmax.f32 %v166, 0.0
  %v197 = vmax.f32 %v171, 0.0
  %v198 = vmax.f32 %v176, 0.0
  %v199 = vmax.f32 %v181, 0.0
  %v200 = vmax.f32 %v186, 0.0
  %v201 = vmax.f32 %v191, 0.0
  %v202 = vmul.f32 %v194, 0.1
  %v203 = vmul.f32 %v195, 0.1
  %v204 = vmul.f32 %v196, 0.1
  %v205 = vmul.f32 %v197, 0.1
  %v206 = vmul.f32 %v198, 0.1
  %v207 = vmul.f32 %v199, 0.1
  %v208 = vmul.f32 %v200, 0.1
  %v209 = vmul.f32 %v201, 0.1
  %vm210 = vcmask 523264
  %v212 = vsel %vm210, %v37, 0
  %v215 = vsel %vm210, %v38, 0
  %v218 = vsel %vm210, %v39, 0
  %v221 = vsel %vm210, %v40, 0
  %v224 = vsel %vm210, %v41, 0
  %v227 = vsel %vm210, %v42, 0
  %v230 = vsel %vm210, %v43, 0
  %v233 = vsel %vm210, %v44, 0
  %235 = vmatprep.subr.mxu0 0.0
  %236 = vmatpush1.msra.mxu0 0.0
  %237 = vmatprep.subr.mxu0 0.0
  %238 = vmatpush1.msra.mxu0 0.0
  %239 = vmatprep.subr.mxu0 0.0
  %240 = vmatpush1.msra.mxu0 0.0
  %241 = vmatprep.subr.mxu0 0.0
  %242 = vmatpush1.msra.mxu0 0.0
  %243 = vmatprep.subr.mxu0 0.0
  %244 = vmatpush1.msra.mxu0 0.0
  %245 = vmatprep.subr.mxu0 0.0
  %246 = vmatpush1.msra.mxu0 0.0
  %247 = vmatprep.subr.mxu0 0.0
  %248 = vmatpush1.msra.mxu0 0.0
  %249 = vmatprep.subr.mxu0 0.0
  %250 = vmatpush1.msra.mxu0 0.0
  %251 = vmatprep.subr.mxu0 0.0
  %252 = vmatpush1.msra.mxu0 %v201
  %253 = vmatprep.subr.mxu0 0.0
  %254 = vmatpush1.msra.mxu0 %v200
  %255 = vmatprep.subr.mxu0 0.0
  %256 = vmatpush1.msra.mxu0 %v199
  %257 = vmatprep.subr.mxu0 0.0
  %258 = vmatpush1.msra.mxu0 %v198
  %259 = vmatprep.subr.mxu0 0.0
  %260 = vmatpush1.msra.mxu0 %v197
  %261 = vmatprep.subr.mxu0 0.0
  %262 = vmatpush1.msra.mxu0 %v196
  %263 = vmatprep.subr.mxu0 0.0
  %264 = vmatpush1.msra.mxu0 %v195
  %265 = vmatprep.subr.mxu0 0.0
  %266 = vmatpush1.msra.mxu0 %v194
  %267 = vmatprep.subr.mxu0 0.0
  %268 = vmatpush2.msra.mxu0 0.0
  %269 = vmatprep.subr.mxu0 0.0
  %270 = vmatpush2.msra.mxu0 0.0
  %271 = vmatprep.subr.mxu0 0.0
  %272 = vmatpush2.msra.mxu0 0.0
  %273 = vmatprep.subr.mxu0 0.0
  %274 = vmatpush2.msra.mxu0 0.0
  %275 = vmatprep.subr.mxu0 0.0
  %276 = vmatpush2.msra.mxu0 0.0
  %277 = vmatprep.subr.mxu0 0.0
  %278 = vmatpush2.msra.mxu0 0.0
  %279 = vmatprep.subr.mxu0 0.0
  %280 = vmatpush2.msra.mxu0 0.0
  %281 = vmatprep.subr.mxu0 0.0
  %282 = vmatpush2.msra.mxu0 0.0
  %283 = vmatprep.subr.mxu0 0.0
  %284 = vmatpush2.msra.mxu0 0.0
  %285 = vmatprep.subr.mxu0 0.0
  %286 = vmatpush2.msra.mxu0 0.0
  %287 = vmatprep.subr.mxu0 0.0
  %288 = vmatpush2.msra.mxu0 0.0
  %289 = vmatprep.subr.mxu0 0.0
  %290 = vmatpush2.msra.mxu0 0.0
  %291 = vmatprep.subr.mxu0 0.0
  %292 = vmatpush2.msra.mxu0 0.0
  %293 = vmatprep.subr.mxu0 0.0
  %294 = vmatpush2.msra.mxu0 0.0
  %295 = vmatprep.subr.mxu0 0.0
  %296 = vmatpush2.msra.mxu0 0.0
  %297 = vmatprep.subr.mxu0 0.0
  %298 = vmatpush2.msra.mxu0 0.0
  %299 = vmatprep.mubr.f32.mxu0 0.0
  %300 = vmatmul.mubr.f32.gmra.mxu0 %v212
  %v301 = vpop.f32.mrf.mxu0
  %v302 = vadd.f32 %v202, %v301
  %v303 = vpop.f32.mrf.mxu0
  %304 = vmatprep.mubr.f32.mxu0 0.0
  %305 = vmatmul.mubr.f32.gmra.mxu0 %v215
  %v306 = vpop.f32.mrf.mxu0
  %v307 = vadd.f32 %v203, %v306
  %v308 = vpop.f32.mrf.mxu0
  %309 = vmatprep.mubr.f32.mxu0 0.0
  %310 = vmatmul.mubr.f32.gmra.mxu0 %v218
  %v311 = vpop.f32.mrf.mxu0
  %v312 = vadd.f32 %v204, %v311
  %v313 = vpop.f32.mrf.mxu0
  %314 = vmatprep.mubr.f32.mxu0 0.0
  %315 = vmatmul.mubr.f32.gmra.mxu0 %v221
  %v316 = vpop.f32.mrf.mxu0
  %v317 = vadd.f32 %v205, %v316
  %v318 = vpop.f32.mrf.mxu0
  %319 = vmatprep.mubr.f32.mxu0 0.0
  %320 = vmatmul.mubr.f32.gmra.mxu0 %v224
  %v321 = vpop.f32.mrf.mxu0
  %v322 = vadd.f32 %v206, %v321
  %v323 = vpop.f32.mrf.mxu0
  %324 = vmatprep.mubr.f32.mxu0 0.0
  %325 = vmatmul.mubr.f32.gmra.mxu0 %v227
  %v326 = vpop.f32.mrf.mxu0
  %v327 = vadd.f32 %v207, %v326
  %v328 = vpop.f32.mrf.mxu0
  %329 = vmatprep.mubr.f32.mxu0 0.0
  %330 = vmatmul.mubr.f32.gmra.mxu0 %v230
  %v331 = vpop.f32.mrf.mxu0
  %v332 = vadd.f32 %v208, %v331
  %v333 = vpop.f32.mrf.mxu0
  %334 = vmatprep.mubr.f32.mxu0 0.0
  %335 = vmatmul.mubr.f32.gmra.mxu0 %v233
  %v336 = vpop.f32.mrf.mxu0
  %v337 = vadd.f32 %v209, %v336
  %v338 = vpop.f32.mrf.mxu0
  %339 = vdwg.mxu0
  %340 = vmatprep.subr.mxu0 0.0
  %341 = vmatpush1.msra.mxu0 0.0
  %342 = vmatprep.subr.mxu0 0.0
  %343 = vmatpush1.msra.mxu0 0.0
  %344 = vmatprep.subr.mxu0 0.0
  %345 = vmatpush1.msra.mxu0 0.0
  %346 = vmatprep.subr.mxu0 0.0
  %347 = vmatpush1.msra.mxu0 0.0
  %348 = vmatprep.subr.mxu0 0.0
  %349 = vmatpush1.msra.mxu0 0.0
  %350 = vmatprep.subr.mxu0 0.0
  %351 = vmatpush1.msra.mxu0 0.0
  %352 = vmatprep.subr.mxu0 0.0
  %353 = vmatpush1.msra.mxu0 0.0
  %354 = vmatprep.subr.mxu0 0.0
  %355 = vmatpush1.msra.mxu0 0.0
  %356 = vmatprep.subr.mxu0 0.0
  %357 = vmatpush1.msra.mxu0 %v337
  %358 = vmatprep.subr.mxu0 0.0
  %359 = vmatpush1.msra.mxu0 %v332
  %360 = vmatprep.subr.mxu0 0.0
  %361 = vmatpush1.msra.mxu0 %v327
  %362 = vmatprep.subr.mxu0 0.0
  %363 = vmatpush1.msra.mxu0 %v322
  %364 = vmatprep.subr.mxu0 0.0
  %365 = vmatpush1.msra.mxu0 %v317
  %366 = vmatprep.subr.mxu0 0.0
  %367 = vmatpush1.msra.mxu0 %v312
  %368 = vmatprep.subr.mxu0 0.0
  %369 = vmatpush1.msra.mxu0 %v307
  %370 = vmatprep.subr.mxu0 0.0
  %371 = vmatpush1.msra.mxu0 %v302
  %372 = vmatprep.subr.mxu0 0.0
  %373 = vmatpush2.msra.mxu0 0.0
  %374 = vmatprep.subr.mxu0 0.0
  %375 = vmatpush2.msra.mxu0 0.0
  %376 = vmatprep.subr.mxu0 0.0
  %377 = vmatpush2.msra.mxu0 0.0
  %378 = vmatprep.subr.mxu0 0.0
  %379 = vmatpush2.msra.mxu0 0.0
  %380 = vmatprep.subr.mxu0 0.0
  %381 = vmatpush2.msra.mxu0 0.0
  %382 = vmatprep.subr.mxu0 0.0
  %383 = vmatpush2.msra.mxu0 0.0
  %384 = vmatprep.subr.mxu0 0.0
  %385 = vmatpush2.msra.mxu0 0.0
  %386 = vmatprep.subr.mxu0 0.0
  %387 = vmatpush2.msra.mxu0 0.0
  %388 = vmatprep.subr.mxu0 0.0
  %389 = vmatpush2.msra.mxu0 0.0
  %390 = vmatprep.subr.mxu0 0.0
  %391 = vmatpush2.msra.mxu0 0.0
  %392 = vmatprep.subr.mxu0 0.0
  %393 = vmatpush2.msra.mxu0 0.0
  %394 = vmatprep.subr.mxu0 0.0
  %395 = vmatpush2.msra.mxu0 0.0
  %396 = vmatprep.subr.mxu0 0.0
  %397 = vmatpush2.msra.mxu0 0.0
  %398 = vmatprep.subr.mxu0 0.0
  %399 = vmatpush2.msra.mxu0 0.0
  %400 = vmatprep.subr.mxu0 0.0
  %401 = vmatpush2.msra.mxu0 0.0
  %402 = vmatprep.subr.mxu0 0.0
  %403 = vmatpush2.msra.mxu0 0.0
  %404 = vmatprep.mubr.f32.mxu0 0.0
  %405 = vmatmul.mubr.f32.gmra.mxu0 %v212
  %v406 = vpop.f32.mrf.mxu0
  %v407 = vadd.f32 %v202, %v406
  %v408 = vpop.f32.mrf.mxu0
  %409 = vmatprep.mubr.f32.mxu0 0.0
  %410 = vmatmul.mubr.f32.gmra.mxu0 %v215
  %v411 = vpop.f32.mrf.mxu0
  %v412 = vadd.f32 %v203, %v411
  %v413 = vpop.f32.mrf.mxu0
  %414 = vmatprep.mubr.f32.mxu0 0.0
  %415 = vmatmul.mubr.f32.gmra.mxu0 %v218
  %v416 = vpop.f32.mrf.mxu0
  %v417 = vadd.f32 %v204, %v416
  %v418 = vpop.f32.mrf.mxu0
  %419 = vmatprep.mubr.f32.mxu0 0.0
  %420 = vmatmul.mubr.f32.gmra.mxu0 %v221
  %v421 = vpop.f32.mrf.mxu0
  %v422 = vadd.f32 %v205, %v421
  %v423 = vpop.f32.mrf.mxu0
  %424 = vmatprep.mubr.f32.mxu0 0.0
  %425 = vmatmul.mubr.f32.gmra.mxu0 %v224
  %v426 = vpop.f32.mrf.mxu0
  %v427 = vadd.f32 %v206, %v426
  %v428 = vpop.f32.mrf.mxu0
  %429 = vmatprep.mubr.f32.mxu0 0.0
  %430 = vmatmul.mubr.f32.gmra.mxu0 %v227
  %v431 = vpop.f32.mrf.mxu0
  %v432 = vadd.f32 %v207, %v431
  %v433 = vpop.f32.mrf.mxu0
  %434 = vmatprep.mubr.f32.mxu0 0.0
  %435 = vmatmul.mubr.f32.gmra.mxu0 %v230
  %v436 = vpop.f32.mrf.mxu0
  %v437 = vadd.f32 %v208, %v436
  %v438 = vpop.f32.mrf.mxu0
  %439 = vmatprep.mubr.f32.mxu0 0.0
  %440 = vmatmul.mubr.f32.gmra.mxu0 %v233
  %v441 = vpop.f32.mrf.mxu0
  %v442 = vadd.f32 %v209, %v441
  %v443 = vpop.f32.mrf.mxu0
  %444 = vdwg.mxu0
  %445 = vmatprep.subr.mxu0 0.0
  %446 = vmatpush1.msra.mxu0 0.0
  %447 = vmatprep.subr.mxu0 0.0
  %448 = vmatpush1.msra.mxu0 0.0
  %449 = vmatprep.subr.mxu0 0.0
  %450 = vmatpush1.msra.mxu0 0.0
  %451 = vmatprep.subr.mxu0 0.0
  %452 = vmatpush1.msra.mxu0 0.0
  %453 = vmatprep.subr.mxu0 0.0
  %454 = vmatpush1.msra.mxu0 0.0
  %455 = vmatprep.subr.mxu0 0.0
  %456 = vmatpush1.msra.mxu0 0.0
  %457 = vmatprep.subr.mxu0 0.0
  %458 = vmatpush1.msra.mxu0 0.0
  %459 = vmatprep.subr.mxu0 0.0
  %460 = vmatpush1.msra.mxu0 0.0
  %461 = vmatprep.subr.mxu0 0.0
  %462 = vmatpush1.msra.mxu0 %v442
  %463 = vmatprep.subr.mxu0 0.0
  %464 = vmatpush1.msra.mxu0 %v437
  %465 = vmatprep.subr.mxu0 0.0
  %466 = vmatpush1.msra.mxu0 %v432
  %467 = vmatprep.subr.mxu0 0.0
  %468 = vmatpush1.msra.mxu0 %v427
  %469 = vmatprep.subr.mxu0 0.0
  %470 = vmatpush1.msra.mxu0 %v422
  %471 = vmatprep.subr.mxu0 0.0
  %472 = vmatpush1.msra.mxu0 %v417
  %473 = vmatprep.subr.mxu0 0.0
  %474 = vmatpush1.msra.mxu0 %v412
  %475 = vmatprep.subr.mxu0 0.0
  %476 = vmatpush1.msra.mxu0 %v407
  %477 = vmatprep.subr.mxu0 0.0
  %478 = vmatpush2.msra.mxu0 0.0
  %479 = vmatprep.subr.mxu0 0.0
  %480 = vmatpush2.msra.mxu0 0.0
  %481 = vmatprep.subr.mxu0 0.0
  %482 = vmatpush2.msra.mxu0 0.0
  %483 = vmatprep.subr.mxu0 0.0
  %484 = vmatpush2.msra.mxu0 0.0
  %485 = vmatprep.subr.mxu0 0.0
  %486 = vmatpush2.msra.mxu0 0.0
  %487 = vmatprep.subr.mxu0 0.0
  %488 = vmatpush2.msra.mxu0 0.0
  %489 = vmatprep.subr.mxu0 0.0
  %490 = vmatpush2.msra.mxu0 0.0
  %491 = vmatprep.subr.mxu0 0.0
  %492 = vmatpush2.msra.mxu0 0.0
  %493 = vmatprep.subr.mxu0 0.0
  %494 = vmatpush2.msra.mxu0 0.0
  %495 = vmatprep.subr.mxu0 0.0
  %496 = vmatpush2.msra.mxu0 0.0
  %497 = vmatprep.subr.mxu0 0.0
  %498 = vmatpush2.msra.mxu0 0.0
  %499 = vmatprep.subr.mxu0 0.0
  %500 = vmatpush2.msra.mxu0 0.0
  %501 = vmatprep.subr.mxu0 0.0
  %502 = vmatpush2.msra.mxu0 0.0
  %503 = vmatprep.subr.mxu0 0.0
  %504 = vmatpush2.msra.mxu0 0.0
  %505 = vmatprep.subr.mxu0 0.0
  %506 = vmatpush2.msra.mxu0 0.0
  %507 = vmatprep.subr.mxu0 0.0
  %508 = vmatpush2.msra.mxu0 0.0
  %509 = vmatprep.mubr.f32.mxu0 0.0
  %510 = vmatmul.mubr.f32.gmra.mxu0 %v212
  %v511 = vpop.f32.mrf.mxu0
  %v512 = vadd.f32 %v202, %v511
  %v513 = vpop.f32.mrf.mxu0
  %514 = vmatprep.mubr.f32.mxu0 0.0
  %515 = vmatmul.mubr.f32.gmra.mxu0 %v215
  %v516 = vpop.f32.mrf.mxu0
  %v517 = vadd.f32 %v203, %v516
  %v518 = vpop.f32.mrf.mxu0
  %519 = vmatprep.mubr.f32.mxu0 0.0
  %520 = vmatmul.mubr.f32.gmra.mxu0 %v218
  %v521 = vpop.f32.mrf.mxu0
  %v522 = vadd.f32 %v204, %v521
  %v523 = vpop.f32.mrf.mxu0
  %524 = vmatprep.mubr.f32.mxu0 0.0
  %525 = vmatmul.mubr.f32.gmra.mxu0 %v221
  %v526 = vpop.f32.mrf.mxu0
  %v527 = vadd.f32 %v205, %v526
  %v528 = vpop.f32.mrf.mxu0
  %529 = vmatprep.mubr.f32.mxu0 0.0
  %530 = vmatmul.mubr.f32.gmra.mxu0 %v224
  %v531 = vpop.f32.mrf.mxu0
  %v532 = vadd.f32 %v206, %v531
  %v533 = vpop.f32.mrf.mxu0
  %534 = vmatprep.mubr.f32.mxu0 0.0
  %535 = vmatmul.mubr.f32.gmra.mxu0 %v227
  %v536 = vpop.f32.mrf.mxu0
  %v537 = vadd.f32 %v207, %v536
  %v538 = vpop.f32.mrf.mxu0
  %539 = vmatprep.mubr.f32.mxu0 0.0
  %540 = vmatmul.mubr.f32.gmra.mxu0 %v230
  %v541 = vpop.f32.mrf.mxu0
  %v542 = vadd.f32 %v208, %v541
  %v543 = vpop.f32.mrf.mxu0
  %544 = vmatprep.mubr.f32.mxu0 0.0
  %545 = vmatmul.mubr.f32.gmra.mxu0 %v233
  %v546 = vpop.f32.mrf.mxu0
  %v547 = vadd.f32 %v209, %v546
  %v548 = vpop.f32.mrf.mxu0
  %549 = vdwg.mxu0
  %550 = vmatprep.subr.mxu0 0.0
  %551 = vmatpush1.msra.mxu0 0.0
  %552 = vmatprep.subr.mxu0 0.0
  %553 = vmatpush1.msra.mxu0 0.0
  %554 = vmatprep.subr.mxu0 0.0
  %555 = vmatpush1.msra.mxu0 0.0
  %556 = vmatprep.subr.mxu0 0.0
  %557 = vmatpush1.msra.mxu0 0.0
  %558 = vmatprep.subr.mxu0 0.0
  %559 = vmatpush1.msra.mxu0 0.0
  %560 = vmatprep.subr.mxu0 0.0
  %561 = vmatpush1.msra.mxu0 0.0
  %562 = vmatprep.subr.mxu0 0.0
  %563 = vmatpush1.msra.mxu0 0.0
  %564 = vmatprep.subr.mxu0 0.0
  %565 = vmatpush1.msra.mxu0 0.0
  %566 = vmatprep.subr.mxu0 0.0
  %567 = vmatpush1.msra.mxu0 %v547
  %568 = vmatprep.subr.mxu0 0.0
  %569 = vmatpush1.msra.mxu0 %v542
  %570 = vmatprep.subr.mxu0 0.0
  %571 = vmatpush1.msra.mxu0 %v537
  %572 = vmatprep.subr.mxu0 0.0
  %573 = vmatpush1.msra.mxu0 %v532
  %574 = vmatprep.subr.mxu0 0.0
  %575 = vmatpush1.msra.mxu0 %v527
  %576 = vmatprep.subr.mxu0 0.0
  %577 = vmatpush1.msra.mxu0 %v522
  %578 = vmatprep.subr.mxu0 0.0
  %579 = vmatpush1.msra.mxu0 %v517
  %580 = vmatprep.subr.mxu0 0.0
  %581 = vmatpush1.msra.mxu0 %v512
  %582 = vmatprep.subr.mxu0 0.0
  %583 = vmatpush2.msra.mxu0 0.0
  %584 = vmatprep.subr.mxu0 0.0
  %585 = vmatpush2.msra.mxu0 0.0
  %586 = vmatprep.subr.mxu0 0.0
  %587 = vmatpush2.msra.mxu0 0.0
  %588 = vmatprep.subr.mxu0 0.0
  %589 = vmatpush2.msra.mxu0 0.0
  %590 = vmatprep.subr.mxu0 0.0
  %591 = vmatpush2.msra.mxu0 0.0
  %592 = vmatprep.subr.mxu0 0.0
  %593 = vmatpush2.msra.mxu0 0.0
  %594 = vmatprep.subr.mxu0 0.0
  %595 = vmatpush2.msra.mxu0 0.0
  %596 = vmatprep.subr.mxu0 0.0
  %597 = vmatpush2.msra.mxu0 0.0
  %598 = vmatprep.subr.mxu0 0.0
  %599 = vmatpush2.msra.mxu0 0.0
  %600 = vmatprep.subr.mxu0 0.0
  %601 = vmatpush2.msra.mxu0 0.0
  %602 = vmatprep.subr.mxu0 0.0
  %603 = vmatpush2.msra.mxu0 0.0
  %604 = vmatprep.subr.mxu0 0.0
  %605 = vmatpush2.msra.mxu0 0.0
  %606 = vmatprep.subr.mxu0 0.0
  %607 = vmatpush2.msra.mxu0 0.0
  %608 = vmatprep.subr.mxu0 0.0
  %609 = vmatpush2.msra.mxu0 0.0
  %610 = vmatprep.subr.mxu0 0.0
  %611 = vmatpush2.msra.mxu0 0.0
  %612 = vmatprep.subr.mxu0 0.0
  %613 = vmatpush2.msra.mxu0 0.0
  %614 = vmatprep.mubr.f32.mxu0 0.0
  %615 = vmatmul.mubr.f32.gmra.mxu0 %v212
  %v616 = vpop.f32.mrf.mxu0
  %v617 = vadd.f32 %v202, %v616
  %v618 = vpop.f32.mrf.mxu0
  %619 = vmatprep.mubr.f32.mxu0 0.0
  %620 = vmatmul.mubr.f32.gmra.mxu0 %v215
  %v621 = vpop.f32.mrf.mxu0
  %v622 = vadd.f32 %v203, %v621
  %v623 = vpop.f32.mrf.mxu0
  %624 = vmatprep.mubr.f32.mxu0 0.0
  %625 = vmatmul.mubr.f32.gmra.mxu0 %v218
  %v626 = vpop.f32.mrf.mxu0
  %v627 = vadd.f32 %v204, %v626
  %v628 = vpop.f32.mrf.mxu0
  %629 = vmatprep.mubr.f32.mxu0 0.0
  %630 = vmatmul.mubr.f32.gmra.mxu0 %v221
  %v631 = vpop.f32.mrf.mxu0
  %v632 = vadd.f32 %v205, %v631
  %v633 = vpop.f32.mrf.mxu0
  %634 = vmatprep.mubr.f32.mxu0 0.0
  %635 = vmatmul.mubr.f32.gmra.mxu0 %v224
  %v636 = vpop.f32.mrf.mxu0
  %v637 = vadd.f32 %v206, %v636
  %v638 = vpop.f32.mrf.mxu0
  %639 = vmatprep.mubr.f32.mxu0 0.0
  %640 = vmatmul.mubr.f32.gmra.mxu0 %v227
  %v641 = vpop.f32.mrf.mxu0
  %v642 = vadd.f32 %v207, %v641
  %v643 = vpop.f32.mrf.mxu0
  %644 = vmatprep.mubr.f32.mxu0 0.0
  %645 = vmatmul.mubr.f32.gmra.mxu0 %v230
  %v646 = vpop.f32.mrf.mxu0
  %v647 = vadd.f32 %v208, %v646
  %v648 = vpop.f32.mrf.mxu0
  %649 = vmatprep.mubr.f32.mxu0 0.0
  %650 = vmatmul.mubr.f32.gmra.mxu0 %v233
  %v651 = vpop.f32.mrf.mxu0
  %v652 = vadd.f32 %v209, %v651
  %v653 = vpop.f32.mrf.mxu0
  %654 = vdwg.mxu0
  %655 = vmatprep.subr.mxu0 0.0
  %656 = vmatpush1.msra.mxu0 0.0
  %657 = vmatprep.subr.mxu0 0.0
  %658 = vmatpush1.msra.mxu0 0.0
  %659 = vmatprep.subr.mxu0 0.0
  %660 = vmatpush1.msra.mxu0 0.0
  %661 = vmatprep.subr.mxu0 0.0
  %662 = vmatpush1.msra.mxu0 0.0
  %663 = vmatprep.subr.mxu0 0.0
  %664 = vmatpush1.msra.mxu0 0.0
  %665 = vmatprep.subr.mxu0 0.0
  %666 = vmatpush1.msra.mxu0 0.0
  %667 = vmatprep.subr.mxu0 0.0
  %668 = vmatpush1.msra.mxu0 0.0
  %669 = vmatprep.subr.mxu0 0.0
  %670 = vmatpush1.msra.mxu0 0.0
  %671 = vmatprep.subr.mxu0 0.0
  %672 = vmatpush1.msra.mxu0 %v652
  %673 = vmatprep.subr.mxu0 0.0
  %674 = vmatpush1.msra.mxu0 %v647
  %675 = vmatprep.subr.mxu0 0.0
  %676 = vmatpush1.msra.mxu0 %v642
  %677 = vmatprep.subr.mxu0 0.0
  %678 = vmatpush1.msra.mxu0 %v637
  %679 = vmatprep.subr.mxu0 0.0
  %680 = vmatpush1.msra.mxu0 %v632
  %681 = vmatprep.subr.mxu0 0.0
  %682 = vmatpush1.msra.mxu0 %v627
  %683 = vmatprep.subr.mxu0 0.0
  %684 = vmatpush1.msra.mxu0 %v622
  %685 = vmatprep.subr.mxu0 0.0
  %686 = vmatpush1.msra.mxu0 %v617
  %687 = vmatprep.subr.mxu0 0.0
  %688 = vmatpush2.msra.mxu0 0.0
  %689 = vmatprep.subr.mxu0 0.0
  %690 = vmatpush2.msra.mxu0 0.0
  %691 = vmatprep.subr.mxu0 0.0
  %692 = vmatpush2.msra.mxu0 0.0
  %693 = vmatprep.subr.mxu0 0.0
  %694 = vmatpush2.msra.mxu0 0.0
  %695 = vmatprep.subr.mxu0 0.0
  %696 = vmatpush2.msra.mxu0 0.0
  %697 = vmatprep.subr.mxu0 0.0
  %698 = vmatpush2.msra.mxu0 0.0
  %699 = vmatprep.subr.mxu0 0.0
  %700 = vmatpush2.msra.mxu0 0.0
  %701 = vmatprep.subr.mxu0 0.0
  %702 = vmatpush2.msra.mxu0 0.0
  %703 = vmatprep.subr.mxu0 0.0
  %704 = vmatpush2.msra.mxu0 0.0
  %705 = vmatprep.subr.mxu0 0.0
  %706 = vmatpush2.msra.mxu0 0.0
  %707 = vmatprep.subr.mxu0 0.0
  %708 = vmatpush2.msra.mxu0 0.0
  %709 = vmatprep.subr.mxu0 0.0
  %710 = vmatpush2.msra.mxu0 0.0
  %711 = vmatprep.subr.mxu0 0.0
  %712 = vmatpush2.msra.mxu0 0.0
  %713 = vmatprep.subr.mxu0 0.0
  %714 = vmatpush2.msra.mxu0 0.0
  %715 = vmatprep.subr.mxu0 0.0
  %716 = vmatpush2.msra.mxu0 0.0
  %717 = vmatprep.subr.mxu0 0.0
  %718 = vmatpush2.msra.mxu0 0.0
  %719 = vmatprep.mubr.f32.mxu0 0.0
  %720 = vmatmul.mubr.f32.gmra.mxu0 %v212
  %v721 = vpop.f32.mrf.mxu0
  %v722 = vadd.f32 %v202, %v721
  %v723 = vpop.f32.mrf.mxu0
  %724 = vmatprep.mubr.f32.mxu0 0.0
  %725 = vmatmul.mubr.f32.gmra.mxu0 %v215
  %v726 = vpop.f32.mrf.mxu0
  %v727 = vadd.f32 %v203, %v726
  %v728 = vpop.f32.mrf.mxu0
  %729 = vmatprep.mubr.f32.mxu0 0.0
  %730 = vmatmul.mubr.f32.gmra.mxu0 %v218
  %v731 = vpop.f32.mrf.mxu0
  %v732 = vadd.f32 %v204, %v731
  %v733 = vpop.f32.mrf.mxu0
  %734 = vmatprep.mubr.f32.mxu0 0.0
  %735 = vmatmul.mubr.f32.gmra.mxu0 %v221
  %v736 = vpop.f32.mrf.mxu0
  %v737 = vadd.f32 %v205, %v736
  %v738 = vpop.f32.mrf.mxu0
  %739 = vmatprep.mubr.f32.mxu0 0.0
  %740 = vmatmul.mubr.f32.gmra.mxu0 %v224
  %v741 = vpop.f32.mrf.mxu0
  %v742 = vadd.f32 %v206, %v741
  %v743 = vpop.f32.mrf.mxu0
  %744 = vmatprep.mubr.f32.mxu0 0.0
  %745 = vmatmul.mubr.f32.gmra.mxu0 %v227
  %v746 = vpop.f32.mrf.mxu0
  %v747 = vadd.f32 %v207, %v746
  %v748 = vpop.f32.mrf.mxu0
  %749 = vmatprep.mubr.f32.mxu0 0.0
  %750 = vmatmul.mubr.f32.gmra.mxu0 %v230
  %v751 = vpop.f32.mrf.mxu0
  %v752 = vadd.f32 %v208, %v751
  %v753 = vpop.f32.mrf.mxu0
  %754 = vmatprep.mubr.f32.mxu0 0.0
  %755 = vmatmul.mubr.f32.gmra.mxu0 %v233
  %v756 = vpop.f32.mrf.mxu0
  %v757 = vadd.f32 %v209, %v756
  %v758 = vpop.f32.mrf.mxu0
  %759 = vdwg.mxu0
  %760 = vmatprep.subr.mxu0 0.0
  %761 = vmatpush1.msra.mxu0 0.0
  %762 = vmatprep.subr.mxu0 0.0
  %763 = vmatpush1.msra.mxu0 0.0
  %764 = vmatprep.subr.mxu0 0.0
  %765 = vmatpush1.msra.mxu0 0.0
  %766 = vmatprep.subr.mxu0 0.0
  %767 = vmatpush1.msra.mxu0 0.0
  %768 = vmatprep.subr.mxu0 0.0
  %769 = vmatpush1.msra.mxu0 0.0
  %770 = vmatprep.subr.mxu0 0.0
  %771 = vmatpush1.msra.mxu0 0.0
  %772 = vmatprep.subr.mxu0 0.0
  %773 = vmatpush1.msra.mxu0 0.0
  %774 = vmatprep.subr.mxu0 0.0
  %775 = vmatpush1.msra.mxu0 0.0
  %776 = vmatprep.subr.mxu0 0.0
  %777 = vmatpush1.msra.mxu0 %v757
  %778 = vmatprep.subr.mxu0 0.0
  %779 = vmatpush1.msra.mxu0 %v752
  %780 = vmatprep.subr.mxu0 0.0
  %781 = vmatpush1.msra.mxu0 %v747
  %782 = vmatprep.subr.mxu0 0.0
  %783 = vmatpush1.msra.mxu0 %v742
  %784 = vmatprep.subr.mxu0 0.0
  %785 = vmatpush1.msra.mxu0 %v737
  %786 = vmatprep.subr.mxu0 0.0
  %787 = vmatpush1.msra.mxu0 %v732
  %788 = vmatprep.subr.mxu0 0.0
  %789 = vmatpush1.msra.mxu0 %v727
  %790 = vmatprep.subr.mxu0 0.0
  %791 = vmatpush1.msra.mxu0 %v722
  %792 = vmatprep.subr.mxu0 0.0
  %793 = vmatpush2.msra.mxu0 0.0
  %794 = vmatprep.subr.mxu0 0.0
  %795 = vmatpush2.msra.mxu0 0.0
  %796 = vmatprep.subr.mxu0 0.0
  %797 = vmatpush2.msra.mxu0 0.0
  %798 = vmatprep.subr.mxu0 0.0
  %799 = vmatpush2.msra.mxu0 0.0
  %800 = vmatprep.subr.mxu0 0.0
  %801 = vmatpush2.msra.mxu0 0.0
  %802 = vmatprep.subr.mxu0 0.0
  %803 = vmatpush2.msra.mxu0 0.0
  %804 = vmatprep.subr.mxu0 0.0
  %805 = vmatpush2.msra.mxu0 0.0
  %806 = vmatprep.subr.mxu0 0.0
  %807 = vmatpush2.msra.mxu0 0.0
  %808 = vmatprep.subr.mxu0 0.0
  %809 = vmatpush2.msra.mxu0 0.0
  %810 = vmatprep.subr.mxu0 0.0
  %811 = vmatpush2.msra.mxu0 0.0
  %812 = vmatprep.subr.mxu0 0.0
  %813 = vmatpush2.msra.mxu0 0.0
  %814 = vmatprep.subr.mxu0 0.0
  %815 = vmatpush2.msra.mxu0 0.0
  %816 = vmatprep.subr.mxu0 0.0
  %817 = vmatpush2.msra.mxu0 0.0
  %818 = vmatprep.subr.mxu0 0.0
  %819 = vmatpush2.msra.mxu0 0.0
  %820 = vmatprep.subr.mxu0 0.0
  %821 = vmatpush2.msra.mxu0 0.0
  %822 = vmatprep.subr.mxu0 0.0
  %823 = vmatpush2.msra.mxu0 0.0
  %824 = vmatprep.mubr.f32.mxu0 0.0
  %825 = vmatmul.mubr.f32.gmra.mxu0 %v212
  %v826 = vpop.f32.mrf.mxu0
  %v827 = vadd.f32 %v202, %v826
  %v828 = vpop.f32.mrf.mxu0
  %829 = vmatprep.mubr.f32.mxu0 0.0
  %830 = vmatmul.mubr.f32.gmra.mxu0 %v215
  %v831 = vpop.f32.mrf.mxu0
  %v832 = vadd.f32 %v203, %v831
  %v833 = vpop.f32.mrf.mxu0
  %834 = vmatprep.mubr.f32.mxu0 0.0
  %835 = vmatmul.mubr.f32.gmra.mxu0 %v218
  %v836 = vpop.f32.mrf.mxu0
  %v837 = vadd.f32 %v204, %v836
  %v838 = vpop.f32.mrf.mxu0
  %839 = vmatprep.mubr.f32.mxu0 0.0
  %840 = vmatmul.mubr.f32.gmra.mxu0 %v221
  %v841 = vpop.f32.mrf.mxu0
  %v842 = vadd.f32 %v205, %v841
  %v843 = vpop.f32.mrf.mxu0
  %844 = vmatprep.mubr.f32.mxu0 0.0
  %845 = vmatmul.mubr.f32.gmra.mxu0 %v224
  %v846 = vpop.f32.mrf.mxu0
  %v847 = vadd.f32 %v206, %v846
  %v848 = vpop.f32.mrf.mxu0
  %849 = vmatprep.mubr.f32.mxu0 0.0
  %850 = vmatmul.mubr.f32.gmra.mxu0 %v227
  %v851 = vpop.f32.mrf.mxu0
  %v852 = vadd.f32 %v207, %v851
  %v853 = vpop.f32.mrf.mxu0
  %854 = vmatprep.mubr.f32.mxu0 0.0
  %855 = vmatmul.mubr.f32.gmra.mxu0 %v230
  %v856 = vpop.f32.mrf.mxu0
  %v857 = vadd.f32 %v208, %v856
  %v858 = vpop.f32.mrf.mxu0
  %859 = vmatprep.mubr.f32.mxu0 0.0
  %860 = vmatmul.mubr.f32.gmra.mxu0 %v233
  %v861 = vpop.f32.mrf.mxu0
  %v862 = vadd.f32 %v209, %v861
  %v863 = vpop.f32.mrf.mxu0
  %864 = vdwg.mxu0
  %865 = vmatprep.subr.mxu0 0.0
  %866 = vmatpush1.msra.mxu0 0.0
  %867 = vmatprep.subr.mxu0 0.0
  %868 = vmatpush1.msra.mxu0 0.0
  %869 = vmatprep.subr.mxu0 0.0
  %870 = vmatpush1.msra.mxu0 0.0
  %871 = vmatprep.subr.mxu0 0.0
  %872 = vmatpush1.msra.mxu0 0.0
  %873 = vmatprep.subr.mxu0 0.0
  %874 = vmatpush1.msra.mxu0 0.0
  %875 = vmatprep.subr.mxu0 0.0
  %876 = vmatpush1.msra.mxu0 0.0
  %877 = vmatprep.subr.mxu0 0.0
  %878 = vmatpush1.msra.mxu0 0.0
  %879 = vmatprep.subr.mxu0 0.0
  %880 = vmatpush1.msra.mxu0 0.0
  %881 = vmatprep.subr.mxu0 0.0
  %882 = vmatpush1.msra.mxu0 %v862
  %883 = vmatprep.subr.mxu0 0.0
  %884 = vmatpush1.msra.mxu0 %v857
  %885 = vmatprep.subr.mxu0 0.0
  %886 = vmatpush1.msra.mxu0 %v852
  %887 = vmatprep.subr.mxu0 0.0
  %888 = vmatpush1.msra.mxu0 %v847
  %889 = vmatprep.subr.mxu0 0.0
  %890 = vmatpush1.msra.mxu0 %v842
  %891 = vmatprep.subr.mxu0 0.0
  %892 = vmatpush1.msra.mxu0 %v837
  %893 = vmatprep.subr.mxu0 0.0
  %894 = vmatpush1.msra.mxu0 %v832
  %895 = vmatprep.subr.mxu0 0.0
  %896 = vmatpush1.msra.mxu0 %v827
  %897 = vmatprep.subr.mxu0 0.0
  %898 = vmatpush2.msra.mxu0 0.0
  %899 = vmatprep.subr.mxu0 0.0
  %900 = vmatpush2.msra.mxu0 0.0
  %901 = vmatprep.subr.mxu0 0.0
  %902 = vmatpush2.msra.mxu0 0.0
  %903 = vmatprep.subr.mxu0 0.0
  %904 = vmatpush2.msra.mxu0 0.0
  %905 = vmatprep.subr.mxu0 0.0
  %906 = vmatpush2.msra.mxu0 0.0
  %907 = vmatprep.subr.mxu0 0.0
  %908 = vmatpush2.msra.mxu0 0.0
  %909 = vmatprep.subr.mxu0 0.0
  %910 = vmatpush2.msra.mxu0 0.0
  %911 = vmatprep.subr.mxu0 0.0
  %912 = vmatpush2.msra.mxu0 0.0
  %913 = vmatprep.subr.mxu0 0.0
  %914 = vmatpush2.msra.mxu0 0.0
  %915 = vmatprep.subr.mxu0 0.0
  %916 = vmatpush2.msra.mxu0 0.0
  %917 = vmatprep.subr.mxu0 0.0
  %918 = vmatpush2.msra.mxu0 0.0
  %919 = vmatprep.subr.mxu0 0.0
  %920 = vmatpush2.msra.mxu0 0.0
  %921 = vmatprep.subr.mxu0 0.0
  %922 = vmatpush2.msra.mxu0 0.0
  %923 = vmatprep.subr.mxu0 0.0
  %924 = vmatpush2.msra.mxu0 0.0
  %925 = vmatprep.subr.mxu0 0.0
  %926 = vmatpush2.msra.mxu0 0.0
  %927 = vmatprep.subr.mxu0 0.0
  %928 = vmatpush2.msra.mxu0 0.0
  %929 = vmatprep.mubr.f32.mxu0 0.0
  %930 = vmatmul.mubr.f32.gmra.mxu0 %v212
  %v931 = vpop.f32.mrf.mxu0
  %v932 = vadd.f32 %v202, %v931
  %v933 = vpop.f32.mrf.mxu0
  %934 = vmatprep.mubr.f32.mxu0 0.0
  %935 = vmatmul.mubr.f32.gmra.mxu0 %v215
  %v936 = vpop.f32.mrf.mxu0
  %v937 = vadd.f32 %v203, %v936
  %v938 = vpop.f32.mrf.mxu0
  %939 = vmatprep.mubr.f32.mxu0 0.0
  %940 = vmatmul.mubr.f32.gmra.mxu0 %v218
  %v941 = vpop.f32.mrf.mxu0
  %v942 = vadd.f32 %v204, %v941
  %v943 = vpop.f32.mrf.mxu0
  %944 = vmatprep.mubr.f32.mxu0 0.0
  %945 = vmatmul.mubr.f32.gmra.mxu0 %v221
  %v946 = vpop.f32.mrf.mxu0
  %v947 = vadd.f32 %v205, %v946
  %v948 = vpop.f32.mrf.mxu0
  %949 = vmatprep.mubr.f32.mxu0 0.0
  %950 = vmatmul.mubr.f32.gmra.mxu0 %v224
  %v951 = vpop.f32.mrf.mxu0
  %v952 = vadd.f32 %v206, %v951
  %v953 = vpop.f32.mrf.mxu0
  %954 = vmatprep.mubr.f32.mxu0 0.0
  %955 = vmatmul.mubr.f32.gmra.mxu0 %v227
  %v956 = vpop.f32.mrf.mxu0
  %v957 = vadd.f32 %v207, %v956
  %v958 = vpop.f32.mrf.mxu0
  %959 = vmatprep.mubr.f32.mxu0 0.0
  %960 = vmatmul.mubr.f32.gmra.mxu0 %v230
  %v961 = vpop.f32.mrf.mxu0
  %v962 = vadd.f32 %v208, %v961
  %v963 = vpop.f32.mrf.mxu0
  %964 = vmatprep.mubr.f32.mxu0 0.0
  %965 = vmatmul.mubr.f32.gmra.mxu0 %v233
  %v966 = vpop.f32.mrf.mxu0
  %v967 = vadd.f32 %v209, %v966
  %v968 = vpop.f32.mrf.mxu0
  %969 = vdwg.mxu0
  %970 = vmatprep.subr.mxu0 0.0
  %971 = vmatpush1.msra.mxu0 0.0
  %972 = vmatprep.subr.mxu0 0.0
  %973 = vmatpush1.msra.mxu0 0.0
  %974 = vmatprep.subr.mxu0 0.0
  %975 = vmatpush1.msra.mxu0 0.0
  %976 = vmatprep.subr.mxu0 0.0
  %977 = vmatpush1.msra.mxu0 0.0
  %978 = vmatprep.subr.mxu0 0.0
  %979 = vmatpush1.msra.mxu0 0.0
  %980 = vmatprep.subr.mxu0 0.0
  %981 = vmatpush1.msra.mxu0 0.0
  %982 = vmatprep.subr.mxu0 0.0
  %983 = vmatpush1.msra.mxu0 0.0
  %984 = vmatprep.subr.mxu0 0.0
  %985 = vmatpush1.msra.mxu0 0.0
  %986 = vmatprep.subr.mxu0 0.0
  %987 = vmatpush1.msra.mxu0 %v967
  %988 = vmatprep.subr.mxu0 0.0
  %989 = vmatpush1.msra.mxu0 %v962
  %990 = vmatprep.subr.mxu0 0.0
  %991 = vmatpush1.msra.mxu0 %v957
  %992 = vmatprep.subr.mxu0 0.0
  %993 = vmatpush1.msra.mxu0 %v952
  %994 = vmatprep.subr.mxu0 0.0
  %995 = vmatpush1.msra.mxu0 %v947
  %996 = vmatprep.subr.mxu0 0.0
  %997 = vmatpush1.msra.mxu0 %v942
  %998 = vmatprep.subr.mxu0 0.0
  %999 = vmatpush1.msra.mxu0 %v937
  %1000 = vmatprep.subr.mxu0 0.0
  %1001 = vmatpush1.msra.mxu0 %v932
  %1002 = vmatprep.subr.mxu0 0.0
  %1003 = vmatpush2.msra.mxu0 0.0
  %1004 = vmatprep.subr.mxu0 0.0
  %1005 = vmatpush2.msra.mxu0 0.0
  %1006 = vmatprep.subr.mxu0 0.0
  %1007 = vmatpush2.msra.mxu0 0.0
  %1008 = vmatprep.subr.mxu0 0.0
  %1009 = vmatpush2.msra.mxu0 0.0
  %1010 = vmatprep.subr.mxu0 0.0
  %1011 = vmatpush2.msra.mxu0 0.0
  %1012 = vmatprep.subr.mxu0 0.0
  %1013 = vmatpush2.msra.mxu0 0.0
  %1014 = vmatprep.subr.mxu0 0.0
  %1015 = vmatpush2.msra.mxu0 0.0
  %1016 = vmatprep.subr.mxu0 0.0
  %1017 = vmatpush2.msra.mxu0 0.0
  %1018 = vmatprep.subr.mxu0 0.0
  %1019 = vmatpush2.msra.mxu0 0.0
  %1020 = vmatprep.subr.mxu0 0.0
  %1021 = vmatpush2.msra.mxu0 0.0
  %1022 = vmatprep.subr.mxu0 0.0
  %1023 = vmatpush2.msra.mxu0 0.0
  %1024 = vmatprep.subr.mxu0 0.0
  %1025 = vmatpush2.msra.mxu0 0.0
  %1026 = vmatprep.subr.mxu0 0.0
  %1027 = vmatpush2.msra.mxu0 0.0
  %1028 = vmatprep.subr.mxu0 0.0
  %1029 = vmatpush2.msra.mxu0 0.0
  %1030 = vmatprep.subr.mxu0 0.0
  %1031 = vmatpush2.msra.mxu0 0.0
  %1032 = vmatprep.subr.mxu0 0.0
  %1033 = vmatpush2.msra.mxu0 0.0
  %1034 = vmatprep.mubr.f32.mxu0 0.0
  %1035 = vmatmul.mubr.f32.gmra.mxu0 %v212
  %v1036 = vpop.f32.mrf.mxu0
  %v1037 = vadd.f32 %v202, %v1036
  %v1038 = vpop.f32.mrf.mxu0
  %1039 = vmatprep.mubr.f32.mxu0 0.0
  %1040 = vmatmul.mubr.f32.gmra.mxu0 %v215
  %v1041 = vpop.f32.mrf.mxu0
  %v1042 = vadd.f32 %v203, %v1041
  %v1043 = vpop.f32.mrf.mxu0
  %1044 = vmatprep.mubr.f32.mxu0 0.0
  %1045 = vmatmul.mubr.f32.gmra.mxu0 %v218
  %v1046 = vpop.f32.mrf.mxu0
  %v1047 = vadd.f32 %v204, %v1046
  %v1048 = vpop.f32.mrf.mxu0
  %1049 = vmatprep.mubr.f32.mxu0 0.0
  %1050 = vmatmul.mubr.f32.gmra.mxu0 %v221
  %v1051 = vpop.f32.mrf.mxu0
  %v1052 = vadd.f32 %v205, %v1051
  %v1053 = vpop.f32.mrf.mxu0
  %1054 = vmatprep.mubr.f32.mxu0 0.0
  %1055 = vmatmul.mubr.f32.gmra.mxu0 %v224
  %v1056 = vpop.f32.mrf.mxu0
  %v1057 = vadd.f32 %v206, %v1056
  %v1058 = vpop.f32.mrf.mxu0
  %1059 = vmatprep.mubr.f32.mxu0 0.0
  %1060 = vmatmul.mubr.f32.gmra.mxu0 %v227
  %v1061 = vpop.f32.mrf.mxu0
  %v1062 = vadd.f32 %v207, %v1061
  %v1063 = vpop.f32.mrf.mxu0
  %1064 = vmatprep.mubr.f32.mxu0 0.0
  %1065 = vmatmul.mubr.f32.gmra.mxu0 %v230
  %v1066 = vpop.f32.mrf.mxu0
  %v1067 = vadd.f32 %v208, %v1066
  %v1068 = vpop.f32.mrf.mxu0
  %1069 = vmatprep.mubr.f32.mxu0 0.0
  %1070 = vmatmul.mubr.f32.gmra.mxu0 %v233
  %v1071 = vpop.f32.mrf.mxu0
  %v1072 = vadd.f32 %v209, %v1071
  %v1073 = vpop.f32.mrf.mxu0
  %1074 = vdwg.mxu0
  %1075 = vmatprep.subr.mxu0 0.0
  %1076 = vmatpush1.msra.mxu0 0.0
  %1077 = vmatprep.subr.mxu0 0.0
  %1078 = vmatpush1.msra.mxu0 0.0
  %1079 = vmatprep.subr.mxu0 0.0
  %1080 = vmatpush1.msra.mxu0 0.0
  %1081 = vmatprep.subr.mxu0 0.0
  %1082 = vmatpush1.msra.mxu0 0.0
  %1083 = vmatprep.subr.mxu0 0.0
  %1084 = vmatpush1.msra.mxu0 0.0
  %1085 = vmatprep.subr.mxu0 0.0
  %1086 = vmatpush1.msra.mxu0 0.0
  %1087 = vmatprep.subr.mxu0 0.0
  %1088 = vmatpush1.msra.mxu0 0.0
  %1089 = vmatprep.subr.mxu0 0.0
  %1090 = vmatpush1.msra.mxu0 0.0
  %1091 = vmatprep.subr.mxu0 0.0
  %1092 = vmatpush1.msra.mxu0 %v1072
  %1093 = vmatprep.subr.mxu0 0.0
  %1094 = vmatpush1.msra.mxu0 %v1067
  %1095 = vmatprep.subr.mxu0 0.0
  %1096 = vmatpush1.msra.mxu0 %v1062
  %1097 = vmatprep.subr.mxu0 0.0
  %1098 = vmatpush1.msra.mxu0 %v1057
  %1099 = vmatprep.subr.mxu0 0.0
  %1100 = vmatpush1.msra.mxu0 %v1052
  %1101 = vmatprep.subr.mxu0 0.0
  %1102 = vmatpush1.msra.mxu0 %v1047
  %1103 = vmatprep.subr.mxu0 0.0
  %1104 = vmatpush1.msra.mxu0 %v1042
  %1105 = vmatprep.subr.mxu0 0.0
  %1106 = vmatpush1.msra.mxu0 %v1037
  %1107 = vmatprep.subr.mxu0 0.0
  %1108 = vmatpush2.msra.mxu0 0.0
  %1109 = vmatprep.subr.mxu0 0.0
  %1110 = vmatpush2.msra.mxu0 0.0
  %1111 = vmatprep.subr.mxu0 0.0
  %1112 = vmatpush2.msra.mxu0 0.0
  %1113 = vmatprep.subr.mxu0 0.0
  %1114 = vmatpush2.msra.mxu0 0.0
  %1115 = vmatprep.subr.mxu0 0.0
  %1116 = vmatpush2.msra.mxu0 0.0
  %1117 = vmatprep.subr.mxu0 0.0
  %1118 = vmatpush2.msra.mxu0 0.0
  %1119 = vmatprep.subr.mxu0 0.0
  %1120 = vmatpush2.msra.mxu0 0.0
  %1121 = vmatprep.subr.mxu0 0.0
  %1122 = vmatpush2.msra.mxu0 0.0
  %1123 = vmatprep.subr.mxu0 0.0
  %1124 = vmatpush2.msra.mxu0 0.0
  %1125 = vmatprep.subr.mxu0 0.0
  %1126 = vmatpush2.msra.mxu0 0.0
  %1127 = vmatprep.subr.mxu0 0.0
  %1128 = vmatpush2.msra.mxu0 0.0
  %1129 = vmatprep.subr.mxu0 0.0
  %1130 = vmatpush2.msra.mxu0 0.0
  %1131 = vmatprep.subr.mxu0 0.0
  %1132 = vmatpush2.msra.mxu0 0.0
  %1133 = vmatprep.subr.mxu0 0.0
  %1134 = vmatpush2.msra.mxu0 0.0
  %1135 = vmatprep.subr.mxu0 0.0
  %1136 = vmatpush2.msra.mxu0 0.0
  %1137 = vmatprep.subr.mxu0 0.0
  %1138 = vmatpush2.msra.mxu0 0.0
  %1139 = vmatprep.mubr.f32.mxu0 0.0
  %1140 = vmatmul.mubr.f32.gmra.mxu0 %v212
  %v1141 = vpop.f32.mrf.mxu0
  %v1142 = vadd.f32 %v202, %v1141
  %v1143 = vpop.f32.mrf.mxu0
  %1144 = vmatprep.mubr.f32.mxu0 0.0
  %1145 = vmatmul.mubr.f32.gmra.mxu0 %v215
  %v1146 = vpop.f32.mrf.mxu0
  %v1147 = vadd.f32 %v203, %v1146
  %v1148 = vpop.f32.mrf.mxu0
  %1149 = vmatprep.mubr.f32.mxu0 0.0
  %1150 = vmatmul.mubr.f32.gmra.mxu0 %v218
  %v1151 = vpop.f32.mrf.mxu0
  %v1152 = vadd.f32 %v204, %v1151
  %v1153 = vpop.f32.mrf.mxu0
  %1154 = vmatprep.mubr.f32.mxu0 0.0
  %1155 = vmatmul.mubr.f32.gmra.mxu0 %v221
  %v1156 = vpop.f32.mrf.mxu0
  %v1157 = vadd.f32 %v205, %v1156
  %v1158 = vpop.f32.mrf.mxu0
  %1159 = vmatprep.mubr.f32.mxu0 0.0
  %1160 = vmatmul.mubr.f32.gmra.mxu0 %v224
  %v1161 = vpop.f32.mrf.mxu0
  %v1162 = vadd.f32 %v206, %v1161
  %v1163 = vpop.f32.mrf.mxu0
  %1164 = vmatprep.mubr.f32.mxu0 0.0
  %1165 = vmatmul.mubr.f32.gmra.mxu0 %v227
  %v1166 = vpop.f32.mrf.mxu0
  %v1167 = vadd.f32 %v207, %v1166
  %v1168 = vpop.f32.mrf.mxu0
  %1169 = vmatprep.mubr.f32.mxu0 0.0
  %1170 = vmatmul.mubr.f32.gmra.mxu0 %v230
  %v1171 = vpop.f32.mrf.mxu0
  %v1172 = vadd.f32 %v208, %v1171
  %v1173 = vpop.f32.mrf.mxu0
  %1174 = vmatprep.mubr.f32.mxu0 0.0
  %1175 = vmatmul.mubr.f32.gmra.mxu0 %v233
  %v1176 = vpop.f32.mrf.mxu0
  %v1177 = vadd.f32 %v209, %v1176
  %v1178 = vpop.f32.mrf.mxu0
  %1179 = vdwg.mxu0
  %1180 = vmatprep.subr.mxu0 0.0
  %1181 = vmatpush1.msra.mxu0 0.0
  %1182 = vmatprep.subr.mxu0 0.0
  %1183 = vmatpush1.msra.mxu0 0.0
  %1184 = vmatprep.subr.mxu0 0.0
  %1185 = vmatpush1.msra.mxu0 0.0
  %1186 = vmatprep.subr.mxu0 0.0
  %1187 = vmatpush1.msra.mxu0 0.0
  %1188 = vmatprep.subr.mxu0 0.0
  %1189 = vmatpush1.msra.mxu0 0.0
  %1190 = vmatprep.subr.mxu0 0.0
  %1191 = vmatpush1.msra.mxu0 0.0
  %1192 = vmatprep.subr.mxu0 0.0
  %1193 = vmatpush1.msra.mxu0 0.0
  %1194 = vmatprep.subr.mxu0 0.0
  %1195 = vmatpush1.msra.mxu0 0.0
  %1196 = vmatprep.subr.mxu0 0.0
  %1197 = vmatpush1.msra.mxu0 %v1177
  %1198 = vmatprep.subr.mxu0 0.0
  %1199 = vmatpush1.msra.mxu0 %v1172
  %1200 = vmatprep.subr.mxu0 0.0
  %1201 = vmatpush1.msra.mxu0 %v1167
  %1202 = vmatprep.subr.mxu0 0.0
  %1203 = vmatpush1.msra.mxu0 %v1162
  %1204 = vmatprep.subr.mxu0 0.0
  %1205 = vmatpush1.msra.mxu0 %v1157
  %1206 = vmatprep.subr.mxu0 0.0
  %1207 = vmatpush1.msra.mxu0 %v1152
  %1208 = vmatprep.subr.mxu0 0.0
  %1209 = vmatpush1.msra.mxu0 %v1147
  %1210 = vmatprep.subr.mxu0 0.0
  %1211 = vmatpush1.msra.mxu0 %v1142
  %1212 = vmatprep.subr.mxu0 0.0
  %1213 = vmatpush2.msra.mxu0 0.0
  %1214 = vmatprep.subr.mxu0 0.0
  %1215 = vmatpush2.msra.mxu0 0.0
  %1216 = vmatprep.subr.mxu0 0.0
  %1217 = vmatpush2.msra.mxu0 0.0
  %1218 = vmatprep.subr.mxu0 0.0
  %1219 = vmatpush2.msra.mxu0 0.0
  %1220 = vmatprep.subr.mxu0 0.0
  %1221 = vmatpush2.msra.mxu0 0.0
  %1222 = vmatprep.subr.mxu0 0.0
  %1223 = vmatpush2.msra.mxu0 0.0
  %1224 = vmatprep.subr.mxu0 0.0
  %1225 = vmatpush2.msra.mxu0 0.0
  %1226 = vmatprep.subr.mxu0 0.0
  %1227 = vmatpush2.msra.mxu0 0.0
  %1228 = vmatprep.subr.mxu0 0.0
  %1229 = vmatpush2.msra.mxu0 0.0
  %1230 = vmatprep.subr.mxu0 0.0
  %1231 = vmatpush2.msra.mxu0 0.0
  %1232 = vmatprep.subr.mxu0 0.0
  %1233 = vmatpush2.msra.mxu0 0.0
  %1234 = vmatprep.subr.mxu0 0.0
  %1235 = vmatpush2.msra.mxu0 0.0
  %1236 = vmatprep.subr.mxu0 0.0
  %1237 = vmatpush2.msra.mxu0 0.0
  %1238 = vmatprep.subr.mxu0 0.0
  %1239 = vmatpush2.msra.mxu0 0.0
  %1240 = vmatprep.subr.mxu0 0.0
  %1241 = vmatpush2.msra.mxu0 0.0
  %1242 = vmatprep.subr.mxu0 0.0
  %1243 = vmatpush2.msra.mxu0 0.0
  %1244 = vmatprep.mubr.f32.mxu0 0.0
  %1245 = vmatmul.mubr.f32.gmra.mxu0 %v212
  %v1246 = vpop.f32.mrf.mxu0
  %v1247 = vadd.f32 %v202, %v1246
  %v1248 = vpop.f32.mrf.mxu0
  %1249 = vmatprep.mubr.f32.mxu0 0.0
  %1250 = vmatmul.mubr.f32.gmra.mxu0 %v215
  %v1251 = vpop.f32.mrf.mxu0
  %v1252 = vadd.f32 %v203, %v1251
  %v1253 = vpop.f32.mrf.mxu0
  %1254 = vmatprep.mubr.f32.mxu0 0.0
  %1255 = vmatmul.mubr.f32.gmra.mxu0 %v218
  %v1256 = vpop.f32.mrf.mxu0
  %v1257 = vadd.f32 %v204, %v1256
  %v1258 = vpop.f32.mrf.mxu0
  %1259 = vmatprep.mubr.f32.mxu0 0.0
  %1260 = vmatmul.mubr.f32.gmra.mxu0 %v221
  %v1261 = vpop.f32.mrf.mxu0
  %v1262 = vadd.f32 %v205, %v1261
  %v1263 = vpop.f32.mrf.mxu0
  %1264 = vmatprep.mubr.f32.mxu0 0.0
  %1265 = vmatmul.mubr.f32.gmra.mxu0 %v224
  %v1266 = vpop.f32.mrf.mxu0
  %v1267 = vadd.f32 %v206, %v1266
  %v1268 = vpop.f32.mrf.mxu0
  %1269 = vmatprep.mubr.f32.mxu0 0.0
  %1270 = vmatmul.mubr.f32.gmra.mxu0 %v227
  %v1271 = vpop.f32.mrf.mxu0
  %v1272 = vadd.f32 %v207, %v1271
  %v1273 = vpop.f32.mrf.mxu0
  %1274 = vmatprep.mubr.f32.mxu0 0.0
  %1275 = vmatmul.mubr.f32.gmra.mxu0 %v230
  %v1276 = vpop.f32.mrf.mxu0
  %v1277 = vadd.f32 %v208, %v1276
  %v1278 = vpop.f32.mrf.mxu0
  %1279 = vmatprep.mubr.f32.mxu0 0.0
  %1280 = vmatmul.mubr.f32.gmra.mxu0 %v233
  %v1281 = vpop.f32.mrf.mxu0
  %v1282 = vadd.f32 %v209, %v1281
  %v1283 = vpop.f32.mrf.mxu0
  %1284 = vdwg.mxu0
  %v1285 = vld [vmem:[%s4] sm:$0xff]
  %v1286 = vld [vmem:[%s4 + $0x8] sm:$0xff]
  %v1287 = vld [vmem:[%s4 + $0x10] sm:$0xff]
  %v1288 = vld [vmem:[%s4 + $0x18] sm:$0xff]
  %v1289 = vld [vmem:[%s5] sm:$0x1]
  %v1291 = vlaneseq
  %v1292 = vshrl.u32 %v1291, 7
  %v1293 = vsub.s32 0, %v1292
  %v1294 = vrot.slane %v1289, %v1293
  %v1297 = vsel %vm64, %v1247, 0
  %v1300 = vsel %vm64, %v1252, 0
  %v1303 = vsel %vm64, %v1257, 0
  %v1306 = vsel %vm64, %v1262, 0
  %v1309 = vsel %vm64, %v1267, 0
  %v1312 = vsel %vm64, %v1272, 0
  %v1315 = vsel %vm64, %v1277, 0
  %v1318 = vsel %vm64, %v1282, 0
  %1320 = vmatprep.subr.mxu0 0.0
  %1321 = vmatpush1.msra.mxu0 0.0
  %1322 = vmatprep.subr.mxu0 0.0
  %1323 = vmatpush1.msra.mxu0 0.0
  %1324 = vmatprep.subr.mxu0 0.0
  %1325 = vmatpush1.msra.mxu0 0.0
  %1326 = vmatprep.subr.mxu0 0.0
  %1327 = vmatpush1.msra.mxu0 0.0
  %1328 = vmatprep.subr.mxu0 0.0
  %1329 = vmatpush1.msra.mxu0 0.0
  %1330 = vmatprep.subr.mxu0 0.0
  %1331 = vmatpush1.msra.mxu0 0.0
  %1332 = vmatprep.subr.mxu0 0.0
  %1333 = vmatpush1.msra.mxu0 0.0
  %1334 = vmatprep.subr.mxu0 0.0
  %1335 = vmatpush1.msra.mxu0 0.0
  %1336 = vmatprep.subr.mxu0 0.0
  %1337 = vmatpush1.msra.mxu0 0.0
  %1338 = vmatprep.subr.mxu0 0.0
  %1339 = vmatpush1.msra.mxu0 0.0
  %1340 = vmatprep.subr.mxu0 0.0
  %1341 = vmatpush1.msra.mxu0 0.0
  %1342 = vmatprep.subr.mxu0 0.0
  %1343 = vmatpush1.msra.mxu0 0.0
  %1344 = vmatprep.subr.mxu0 0.0
  %1345 = vmatpush1.msra.mxu0 %v1288
  %1346 = vmatprep.subr.mxu0 0.0
  %1347 = vmatpush1.msra.mxu0 %v1287
  %1348 = vmatprep.subr.mxu0 0.0
  %1349 = vmatpush1.msra.mxu0 %v1286
  %1350 = vmatprep.subr.mxu0 0.0
  %1351 = vmatpush1.msra.mxu0 %v1285
  %1352 = vmatprep.subr.mxu0 0.0
  %1353 = vmatpush2.msra.mxu0 0.0
  %1354 = vmatprep.subr.mxu0 0.0
  %1355 = vmatpush2.msra.mxu0 0.0
  %1356 = vmatprep.subr.mxu0 0.0
  %1357 = vmatpush2.msra.mxu0 0.0
  %1358 = vmatprep.subr.mxu0 0.0
  %1359 = vmatpush2.msra.mxu0 0.0
  %1360 = vmatprep.subr.mxu0 0.0
  %1361 = vmatpush2.msra.mxu0 0.0
  %1362 = vmatprep.subr.mxu0 0.0
  %1363 = vmatpush2.msra.mxu0 0.0
  %1364 = vmatprep.subr.mxu0 0.0
  %1365 = vmatpush2.msra.mxu0 0.0
  %1366 = vmatprep.subr.mxu0 0.0
  %1367 = vmatpush2.msra.mxu0 0.0
  %1368 = vmatprep.subr.mxu0 0.0
  %1369 = vmatpush2.msra.mxu0 0.0
  %1370 = vmatprep.subr.mxu0 0.0
  %1371 = vmatpush2.msra.mxu0 0.0
  %1372 = vmatprep.subr.mxu0 0.0
  %1373 = vmatpush2.msra.mxu0 0.0
  %1374 = vmatprep.subr.mxu0 0.0
  %1375 = vmatpush2.msra.mxu0 0.0
  %1376 = vmatprep.subr.mxu0 0.0
  %1377 = vmatpush2.msra.mxu0 0.0
  %1378 = vmatprep.subr.mxu0 0.0
  %1379 = vmatpush2.msra.mxu0 0.0
  %1380 = vmatprep.subr.mxu0 0.0
  %1381 = vmatpush2.msra.mxu0 0.0
  %1382 = vmatprep.subr.mxu0 0.0
  %1383 = vmatpush2.msra.mxu0 0.0
  %1384 = vmatprep.mubr.f32.mxu0 0.0
  %1385 = vmatmul.mubr.f32.gmra.mxu0 %v1297
  %v1386 = vpop.f32.mrf.mxu0
  %v1387 = vadd.f32 %v1294, %v1386
  %v1388 = vpop.f32.mrf.mxu0
  %1389 = vmatprep.mubr.f32.mxu0 0.0
  %1390 = vmatmul.mubr.f32.gmra.mxu0 %v1300
  %v1391 = vpop.f32.mrf.mxu0
  %v1392 = vadd.f32 %v1294, %v1391
  %v1393 = vpop.f32.mrf.mxu0
  %1394 = vmatprep.mubr.f32.mxu0 0.0
  %1395 = vmatmul.mubr.f32.gmra.mxu0 %v1303
  %v1396 = vpop.f32.mrf.mxu0
  %v1397 = vadd.f32 %v1294, %v1396
  %v1398 = vpop.f32.mrf.mxu0
  %1399 = vmatprep.mubr.f32.mxu0 0.0
  %1400 = vmatmul.mubr.f32.gmra.mxu0 %v1306
  %v1401 = vpop.f32.mrf.mxu0
  %v1402 = vadd.f32 %v1294, %v1401
  %v1403 = vpop.f32.mrf.mxu0
  %1404 = vmatprep.mubr.f32.mxu0 0.0
  %1405 = vmatmul.mubr.f32.gmra.mxu0 %v1309
  %v1406 = vpop.f32.mrf.mxu0
  %v1407 = vadd.f32 %v1294, %v1406
  %v1408 = vpop.f32.mrf.mxu0
  %1409 = vmatprep.mubr.f32.mxu0 0.0
  %1410 = vmatmul.mubr.f32.gmra.mxu0 %v1312
  %v1411 = vpop.f32.mrf.mxu0
  %v1412 = vadd.f32 %v1294, %v1411
  %v1413 = vpop.f32.mrf.mxu0
  %1414 = vmatprep.mubr.f32.mxu0 0.0
  %1415 = vmatmul.mubr.f32.gmra.mxu0 %v1315
  %v1416 = vpop.f32.mrf.mxu0
  %v1417 = vadd.f32 %v1294, %v1416
  %v1418 = vpop.f32.mrf.mxu0
  %1419 = vmatprep.mubr.f32.mxu0 0.0
  %1420 = vmatmul.mubr.f32.gmra.mxu0 %v1318
  %v1421 = vpop.f32.mrf.mxu0
  %v1422 = vadd.f32 %v1294, %v1421
  %v1423 = vpop.f32.mrf.mxu0
  %1424 = vdwg.mxu0
  %v1425 = vmax.f32 %v1387, 0.0
  %v1426 = vmax.f32 %v1392, 0.0
  %v1427 = vmax.f32 %v1397, 0.0
  %v1428 = vmax.f32 %v1402, 0.0
  %v1429 = vmax.f32 %v1407, 0.0
  %v1430 = vmax.f32 %v1412, 0.0
  %v1431 = vmax.f32 %v1417, 0.0
  %v1432 = vmax.f32 %v1422, 0.0
  %v1433 = vmul.f32 %v1425, 0.1
  %v1434 = vmul.f32 %v1426, 0.1
  %v1435 = vmul.f32 %v1427, 0.1
  %v1436 = vmul.f32 %v1428, 0.1
  %v1437 = vmul.f32 %v1429, 0.1
  %v1438 = vmul.f32 %v1430, 0.1
  %v1439 = vmul.f32 %v1431, 0.1
  %v1440 = vmul.f32 %v1432, 0.1
  %1441 = vmatprep.subr.mxu0 0.0
  %1442 = vmatpush1.msra.mxu0 0.0
  %1443 = vmatprep.subr.mxu0 0.0
  %1444 = vmatpush1.msra.mxu0 0.0
  %1445 = vmatprep.subr.mxu0 0.0
  %1446 = vmatpush1.msra.mxu0 0.0
  %1447 = vmatprep.subr.mxu0 0.0
  %1448 = vmatpush1.msra.mxu0 0.0
  %1449 = vmatprep.subr.mxu0 0.0
  %1450 = vmatpush1.msra.mxu0 0.0
  %1451 = vmatprep.subr.mxu0 0.0
  %1452 = vmatpush1.msra.mxu0 0.0
  %1453 = vmatprep.subr.mxu0 0.0
  %1454 = vmatpush1.msra.mxu0 0.0
  %1455 = vmatprep.subr.mxu0 0.0
  %1456 = vmatpush1.msra.mxu0 0.0
  %1457 = vmatprep.subr.mxu0 0.0
  %1458 = vmatpush1.msra.mxu0 %v1432
  %1459 = vmatprep.subr.mxu0 0.0
  %1460 = vmatpush1.msra.mxu0 %v1431
  %1461 = vmatprep.subr.mxu0 0.0
  %1462 = vmatpush1.msra.mxu0 %v1430
  %1463 = vmatprep.subr.mxu0 0.0
  %1464 = vmatpush1.msra.mxu0 %v1429
  %1465 = vmatprep.subr.mxu0 0.0
  %1466 = vmatpush1.msra.mxu0 %v1428
  %1467 = vmatprep.subr.mxu0 0.0
  %1468 = vmatpush1.msra.mxu0 %v1427
  %1469 = vmatprep.subr.mxu0 0.0
  %1470 = vmatpush1.msra.mxu0 %v1426
  %1471 = vmatprep.subr.mxu0 0.0
  %1472 = vmatpush1.msra.mxu0 %v1425
  %1473 = vmatprep.subr.mxu0 0.0
  %1474 = vmatpush2.msra.mxu0 0.0
  %1475 = vmatprep.subr.mxu0 0.0
  %1476 = vmatpush2.msra.mxu0 0.0
  %1477 = vmatprep.subr.mxu0 0.0
  %1478 = vmatpush2.msra.mxu0 0.0
  %1479 = vmatprep.subr.mxu0 0.0
  %1480 = vmatpush2.msra.mxu0 0.0
  %1481 = vmatprep.subr.mxu0 0.0
  %1482 = vmatpush2.msra.mxu0 0.0
  %1483 = vmatprep.subr.mxu0 0.0
  %1484 = vmatpush2.msra.mxu0 0.0
  %1485 = vmatprep.subr.mxu0 0.0
  %1486 = vmatpush2.msra.mxu0 0.0
  %1487 = vmatprep.subr.mxu0 0.0
  %1488 = vmatpush2.msra.mxu0 0.0
  %1489 = vmatprep.subr.mxu0 0.0
  %1490 = vmatpush2.msra.mxu0 0.0
  %1491 = vmatprep.subr.mxu0 0.0
  %1492 = vmatpush2.msra.mxu0 0.0
  %1493 = vmatprep.subr.mxu0 0.0
  %1494 = vmatpush2.msra.mxu0 0.0
  %1495 = vmatprep.subr.mxu0 0.0
  %1496 = vmatpush2.msra.mxu0 0.0
  %1497 = vmatprep.subr.mxu0 0.0
  %1498 = vmatpush2.msra.mxu0 0.0
  %1499 = vmatprep.subr.mxu0 0.0
  %1500 = vmatpush2.msra.mxu0 0.0
  %1501 = vmatprep.subr.mxu0 0.0
  %1502 = vmatpush2.msra.mxu0 0.0
  %1503 = vmatprep.subr.mxu0 0.0
  %1504 = vmatpush2.msra.mxu0 0.0
  %1505 = vmatprep.mubr.f32.mxu0 0.0
  %1506 = vmatmul.mubr.f32.gmra.mxu0 %v212
  %v1507 = vpop.f32.mrf.mxu0
  %v1508 = vadd.f32 %v1433, %v1507
  %v1509 = vpop.f32.mrf.mxu0
  %1510 = vmatprep.mubr.f32.mxu0 0.0
  %1511 = vmatmul.mubr.f32.gmra.mxu0 %v215
  %v1512 = vpop.f32.mrf.mxu0
  %v1513 = vadd.f32 %v1434, %v1512
  %v1514 = vpop.f32.mrf.mxu0
  %1515 = vmatprep.mubr.f32.mxu0 0.0
  %1516 = vmatmul.mubr.f32.gmra.mxu0 %v218
  %v1517 = vpop.f32.mrf.mxu0
  %v1518 = vadd.f32 %v1435, %v1517
  %v1519 = vpop.f32.mrf.mxu0
  %1520 = vmatprep.mubr.f32.mxu0 0.0
  %1521 = vmatmul.mubr.f32.gmra.mxu0 %v221
  %v1522 = vpop.f32.mrf.mxu0
  %v1523 = vadd.f32 %v1436, %v1522
  %v1524 = vpop.f32.mrf.mxu0
  %1525 = vmatprep.mubr.f32.mxu0 0.0
  %1526 = vmatmul.mubr.f32.gmra.mxu0 %v224
  %v1527 = vpop.f32.mrf.mxu0
  %v1528 = vadd.f32 %v1437, %v1527
  %v1529 = vpop.f32.mrf.mxu0
  %1530 = vmatprep.mubr.f32.mxu0 0.0
  %1531 = vmatmul.mubr.f32.gmra.mxu0 %v227
  %v1532 = vpop.f32.mrf.mxu0
  %v1533 = vadd.f32 %v1438, %v1532
  %v1534 = vpop.f32.mrf.mxu0
  %1535 = vmatprep.mubr.f32.mxu0 0.0
  %1536 = vmatmul.mubr.f32.gmra.mxu0 %v230
  %v1537 = vpop.f32.mrf.mxu0
  %v1538 = vadd.f32 %v1439, %v1537
  %v1539 = vpop.f32.mrf.mxu0
  %1540 = vmatprep.mubr.f32.mxu0 0.0
  %1541 = vmatmul.mubr.f32.gmra.mxu0 %v233
  %v1542 = vpop.f32.mrf.mxu0
  %v1543 = vadd.f32 %v1440, %v1542
  %v1544 = vpop.f32.mrf.mxu0
  %1545 = vdwg.mxu0
  %1546 = vmatprep.subr.mxu0 0.0
  %1547 = vmatpush1.msra.mxu0 0.0
  %1548 = vmatprep.subr.mxu0 0.0
  %1549 = vmatpush1.msra.mxu0 0.0
  %1550 = vmatprep.subr.mxu0 0.0
  %1551 = vmatpush1.msra.mxu0 0.0
  %1552 = vmatprep.subr.mxu0 0.0
  %1553 = vmatpush1.msra.mxu0 0.0
  %1554 = vmatprep.subr.mxu0 0.0
  %1555 = vmatpush1.msra.mxu0 0.0
  %1556 = vmatprep.subr.mxu0 0.0
  %1557 = vmatpush1.msra.mxu0 0.0
  %1558 = vmatprep.subr.mxu0 0.0
  %1559 = vmatpush1.msra.mxu0 0.0
  %1560 = vmatprep.subr.mxu0 0.0
  %1561 = vmatpush1.msra.mxu0 0.0
  %1562 = vmatprep.subr.mxu0 0.0
  %1563 = vmatpush1.msra.mxu0 %v1543
  %1564 = vmatprep.subr.mxu0 0.0
  %1565 = vmatpush1.msra.mxu0 %v1538
  %1566 = vmatprep.subr.mxu0 0.0
  %1567 = vmatpush1.msra.mxu0 %v1533
  %1568 = vmatprep.subr.mxu0 0.0
  %1569 = vmatpush1.msra.mxu0 %v1528
  %1570 = vmatprep.subr.mxu0 0.0
  %1571 = vmatpush1.msra.mxu0 %v1523
  %1572 = vmatprep.subr.mxu0 0.0
  %1573 = vmatpush1.msra.mxu0 %v1518
  %1574 = vmatprep.subr.mxu0 0.0
  %1575 = vmatpush1.msra.mxu0 %v1513
  %1576 = vmatprep.subr.mxu0 0.0
  %1577 = vmatpush1.msra.mxu0 %v1508
  %1578 = vmatprep.subr.mxu0 0.0
  %1579 = vmatpush2.msra.mxu0 0.0
  %1580 = vmatprep.subr.mxu0 0.0
  %1581 = vmatpush2.msra.mxu0 0.0
  %1582 = vmatprep.subr.mxu0 0.0
  %1583 = vmatpush2.msra.mxu0 0.0
  %1584 = vmatprep.subr.mxu0 0.0
  %1585 = vmatpush2.msra.mxu0 0.0
  %1586 = vmatprep.subr.mxu0 0.0
  %1587 = vmatpush2.msra.mxu0 0.0
  %1588 = vmatprep.subr.mxu0 0.0
  %1589 = vmatpush2.msra.mxu0 0.0
  %1590 = vmatprep.subr.mxu0 0.0
  %1591 = vmatpush2.msra.mxu0 0.0
  %1592 = vmatprep.subr.mxu0 0.0
  %1593 = vmatpush2.msra.mxu0 0.0
  %1594 = vmatprep.subr.mxu0 0.0
  %1595 = vmatpush2.msra.mxu0 0.0
  %1596 = vmatprep.subr.mxu0 0.0
  %1597 = vmatpush2.msra.mxu0 0.0
  %1598 = vmatprep.subr.mxu0 0.0
  %1599 = vmatpush2.msra.mxu0 0.0
  %1600 = vmatprep.subr.mxu0 0.0
  %1601 = vmatpush2.msra.mxu0 0.0
  %1602 = vmatprep.subr.mxu0 0.0
  %1603 = vmatpush2.msra.mxu0 0.0
  %1604 = vmatprep.subr.mxu0 0.0
  %1605 = vmatpush2.msra.mxu0 0.0
  %1606 = vmatprep.subr.mxu0 0.0
  %1607 = vmatpush2.msra.mxu0 0.0
  %1608 = vmatprep.subr.mxu0 0.0
  %1609 = vmatpush2.msra.mxu0 0.0
  %1610 = vmatprep.mubr.f32.mxu0 0.0
  %1611 = vmatmul.mubr.f32.gmra.mxu0 %v212
  %v1612 = vpop.f32.mrf.mxu0
  %v1613 = vadd.f32 %v1433, %v1612
  %v1614 = vpop.f32.mrf.mxu0
  %1615 = vmatprep.mubr.f32.mxu0 0.0
  %1616 = vmatmul.mubr.f32.gmra.mxu0 %v215
  %v1617 = vpop.f32.mrf.mxu0
  %v1618 = vadd.f32 %v1434, %v1617
  %v1619 = vpop.f32.mrf.mxu0
  %1620 = vmatprep.mubr.f32.mxu0 0.0
  %1621 = vmatmul.mubr.f32.gmra.mxu0 %v218
  %v1622 = vpop.f32.mrf.mxu0
  %v1623 = vadd.f32 %v1435, %v1622
  %v1624 = vpop.f32.mrf.mxu0
  %1625 = vmatprep.mubr.f32.mxu0 0.0
  %1626 = vmatmul.mubr.f32.gmra.mxu0 %v221
  %v1627 = vpop.f32.mrf.mxu0
  %v1628 = vadd.f32 %v1436, %v1627
  %v1629 = vpop.f32.mrf.mxu0
  %1630 = vmatprep.mubr.f32.mxu0 0.0
  %1631 = vmatmul.mubr.f32.gmra.mxu0 %v224
  %v1632 = vpop.f32.mrf.mxu0
  %v1633 = vadd.f32 %v1437, %v1632
  %v1634 = vpop.f32.mrf.mxu0
  %1635 = vmatprep.mubr.f32.mxu0 0.0
  %1636 = vmatmul.mubr.f32.gmra.mxu0 %v227
  %v1637 = vpop.f32.mrf.mxu0
  %v1638 = vadd.f32 %v1438, %v1637
  %v1639 = vpop.f32.mrf.mxu0
  %1640 = vmatprep.mubr.f32.mxu0 0.0
  %1641 = vmatmul.mubr.f32.gmra.mxu0 %v230
  %v1642 = vpop.f32.mrf.mxu0
  %v1643 = vadd.f32 %v1439, %v1642
  %v1644 = vpop.f32.mrf.mxu0
  %1645 = vmatprep.mubr.f32.mxu0 0.0
  %1646 = vmatmul.mubr.f32.gmra.mxu0 %v233
  %v1647 = vpop.f32.mrf.mxu0
  %v1648 = vadd.f32 %v1440, %v1647
  %v1649 = vpop.f32.mrf.mxu0
  %1650 = vdwg.mxu0
  %1651 = vmatprep.subr.mxu0 0.0
  %1652 = vmatpush1.msra.mxu0 0.0
  %1653 = vmatprep.subr.mxu0 0.0
  %1654 = vmatpush1.msra.mxu0 0.0
  %1655 = vmatprep.subr.mxu0 0.0
  %1656 = vmatpush1.msra.mxu0 0.0
  %1657 = vmatprep.subr.mxu0 0.0
  %1658 = vmatpush1.msra.mxu0 0.0
  %1659 = vmatprep.subr.mxu0 0.0
  %1660 = vmatpush1.msra.mxu0 0.0
  %1661 = vmatprep.subr.mxu0 0.0
  %1662 = vmatpush1.msra.mxu0 0.0
  %1663 = vmatprep.subr.mxu0 0.0
  %1664 = vmatpush1.msra.mxu0 0.0
  %1665 = vmatprep.subr.mxu0 0.0
  %1666 = vmatpush1.msra.mxu0 0.0
  %1667 = vmatprep.subr.mxu0 0.0
  %1668 = vmatpush1.msra.mxu0 %v1648
  %1669 = vmatprep.subr.mxu0 0.0
  %1670 = vmatpush1.msra.mxu0 %v1643
  %1671 = vmatprep.subr.mxu0 0.0
  %1672 = vmatpush1.msra.mxu0 %v1638
  %1673 = vmatprep.subr.mxu0 0.0
  %1674 = vmatpush1.msra.mxu0 %v1633
  %1675 = vmatprep.subr.mxu0 0.0
  %1676 = vmatpush1.msra.mxu0 %v1628
  %1677 = vmatprep.subr.mxu0 0.0
  %1678 = vmatpush1.msra.mxu0 %v1623
  %1679 = vmatprep.subr.mxu0 0.0
  %1680 = vmatpush1.msra.mxu0 %v1618
  %1681 = vmatprep.subr.mxu0 0.0
  %1682 = vmatpush1.msra.mxu0 %v1613
  %1683 = vmatprep.subr.mxu0 0.0
  %1684 = vmatpush2.msra.mxu0 0.0
  %1685 = vmatprep.subr.mxu0 0.0
  %1686 = vmatpush2.msra.mxu0 0.0
  %1687 = vmatprep.subr.mxu0 0.0
  %1688 = vmatpush2.msra.mxu0 0.0
  %1689 = vmatprep.subr.mxu0 0.0
  %1690 = vmatpush2.msra.mxu0 0.0
  %1691 = vmatprep.subr.mxu0 0.0
  %1692 = vmatpush2.msra.mxu0 0.0
  %1693 = vmatprep.subr.mxu0 0.0
  %1694 = vmatpush2.msra.mxu0 0.0
  %1695 = vmatprep.subr.mxu0 0.0
  %1696 = vmatpush2.msra.mxu0 0.0
  %1697 = vmatprep.subr.mxu0 0.0
  %1698 = vmatpush2.msra.mxu0 0.0
  %1699 = vmatprep.subr.mxu0 0.0
  %1700 = vmatpush2.msra.mxu0 0.0
  %1701 = vmatprep.subr.mxu0 0.0
  %1702 = vmatpush2.msra.mxu0 0.0
  %1703 = vmatprep.subr.mxu0 0.0
  %1704 = vmatpush2.msra.mxu0 0.0
  %1705 = vmatprep.subr.mxu0 0.0
  %1706 = vmatpush2.msra.mxu0 0.0
  %1707 = vmatprep.subr.mxu0 0.0
  %1708 = vmatpush2.msra.mxu0 0.0
  %1709 = vmatprep.subr.mxu0 0.0
  %1710 = vmatpush2.msra.mxu0 0.0
  %1711 = vmatprep.subr.mxu0 0.0
  %1712 = vmatpush2.msra.mxu0 0.0
  %1713 = vmatprep.subr.mxu0 0.0
  %1714 = vmatpush2.msra.mxu0 0.0
  %1715 = vmatprep.mubr.f32.mxu0 0.0
  %1716 = vmatmul.mubr.f32.gmra.mxu0 %v212
  %v1717 = vpop.f32.mrf.mxu0
  %v1718 = vadd.f32 %v1433, %v1717
  %v1719 = vpop.f32.mrf.mxu0
  %1720 = vmatprep.mubr.f32.mxu0 0.0
  %1721 = vmatmul.mubr.f32.gmra.mxu0 %v215
  %v1722 = vpop.f32.mrf.mxu0
  %v1723 = vadd.f32 %v1434, %v1722
  %v1724 = vpop.f32.mrf.mxu0
  %1725 = vmatprep.mubr.f32.mxu0 0.0
  %1726 = vmatmul.mubr.f32.gmra.mxu0 %v218
  %v1727 = vpop.f32.mrf.mxu0
  %v1728 = vadd.f32 %v1435, %v1727
  %v1729 = vpop.f32.mrf.mxu0
  %1730 = vmatprep.mubr.f32.mxu0 0.0
  %1731 = vmatmul.mubr.f32.gmra.mxu0 %v221
  %v1732 = vpop.f32.mrf.mxu0
  %v1733 = vadd.f32 %v1436, %v1732
  %v1734 = vpop.f32.mrf.mxu0
  %1735 = vmatprep.mubr.f32.mxu0 0.0
  %1736 = vmatmul.mubr.f32.gmra.mxu0 %v224
  %v1737 = vpop.f32.mrf.mxu0
  %v1738 = vadd.f32 %v1437, %v1737
  %v1739 = vpop.f32.mrf.mxu0
  %1740 = vmatprep.mubr.f32.mxu0 0.0
  %1741 = vmatmul.mubr.f32.gmra.mxu0 %v227
  %v1742 = vpop.f32.mrf.mxu0
  %v1743 = vadd.f32 %v1438, %v1742
  %v1744 = vpop.f32.mrf.mxu0
  %1745 = vmatprep.mubr.f32.mxu0 0.0
  %1746 = vmatmul.mubr.f32.gmra.mxu0 %v230
  %v1747 = vpop.f32.mrf.mxu0
  %v1748 = vadd.f32 %v1439, %v1747
  %v1749 = vpop.f32.mrf.mxu0
  %1750 = vmatprep.mubr.f32.mxu0 0.0
  %1751 = vmatmul.mubr.f32.gmra.mxu0 %v233
  %v1752 = vpop.f32.mrf.mxu0
  %v1753 = vadd.f32 %v1440, %v1752
  %v1754 = vpop.f32.mrf.mxu0
  %1755 = vdwg.mxu0
  %1756 = vmatprep.subr.mxu0 0.0
  %1757 = vmatpush1.msra.mxu0 0.0
  %1758 = vmatprep.subr.mxu0 0.0
  %1759 = vmatpush1.msra.mxu0 0.0
  %1760 = vmatprep.subr.mxu0 0.0
  %1761 = vmatpush1.msra.mxu0 0.0
  %1762 = vmatprep.subr.mxu0 0.0
  %1763 = vmatpush1.msra.mxu0 0.0
  %1764 = vmatprep.subr.mxu0 0.0
  %1765 = vmatpush1.msra.mxu0 0.0
  %1766 = vmatprep.subr.mxu0 0.0
  %1767 = vmatpush1.msra.mxu0 0.0
  %1768 = vmatprep.subr.mxu0 0.0
  %1769 = vmatpush1.msra.mxu0 0.0
  %1770 = vmatprep.subr.mxu0 0.0
  %1771 = vmatpush1.msra.mxu0 0.0
  %1772 = vmatprep.subr.mxu0 0.0
  %1773 = vmatpush1.msra.mxu0 %v1753
  %1774 = vmatprep.subr.mxu0 0.0
  %1775 = vmatpush1.msra.mxu0 %v1748
  %1776 = vmatprep.subr.mxu0 0.0
  %1777 = vmatpush1.msra.mxu0 %v1743
  %1778 = vmatprep.subr.mxu0 0.0
  %1779 = vmatpush1.msra.mxu0 %v1738
  %1780 = vmatprep.subr.mxu0 0.0
  %1781 = vmatpush1.msra.mxu0 %v1733
  %1782 = vmatprep.subr.mxu0 0.0
  %1783 = vmatpush1.msra.mxu0 %v1728
  %1784 = vmatprep.subr.mxu0 0.0
  %1785 = vmatpush1.msra.mxu0 %v1723
  %1786 = vmatprep.subr.mxu0 0.0
  %1787 = vmatpush1.msra.mxu0 %v1718
  %1788 = vmatprep.subr.mxu0 0.0
  %1789 = vmatpush2.msra.mxu0 0.0
  %1790 = vmatprep.subr.mxu0 0.0
  %1791 = vmatpush2.msra.mxu0 0.0
  %1792 = vmatprep.subr.mxu0 0.0
  %1793 = vmatpush2.msra.mxu0 0.0
  %1794 = vmatprep.subr.mxu0 0.0
  %1795 = vmatpush2.msra.mxu0 0.0
  %1796 = vmatprep.subr.mxu0 0.0
  %1797 = vmatpush2.msra.mxu0 0.0
  %1798 = vmatprep.subr.mxu0 0.0
  %1799 = vmatpush2.msra.mxu0 0.0
  %1800 = vmatprep.subr.mxu0 0.0
  %1801 = vmatpush2.msra.mxu0 0.0
  %1802 = vmatprep.subr.mxu0 0.0
  %1803 = vmatpush2.msra.mxu0 0.0
  %1804 = vmatprep.subr.mxu0 0.0
  %1805 = vmatpush2.msra.mxu0 0.0
  %1806 = vmatprep.subr.mxu0 0.0
  %1807 = vmatpush2.msra.mxu0 0.0
  %1808 = vmatprep.subr.mxu0 0.0
  %1809 = vmatpush2.msra.mxu0 0.0
  %1810 = vmatprep.subr.mxu0 0.0
  %1811 = vmatpush2.msra.mxu0 0.0
  %1812 = vmatprep.subr.mxu0 0.0
  %1813 = vmatpush2.msra.mxu0 0.0
  %1814 = vmatprep.subr.mxu0 0.0
  %1815 = vmatpush2.msra.mxu0 0.0
  %1816 = vmatprep.subr.mxu0 0.0
  %1817 = vmatpush2.msra.mxu0 0.0
  %1818 = vmatprep.subr.mxu0 0.0
  %1819 = vmatpush2.msra.mxu0 0.0
  %1820 = vmatprep.mubr.f32.mxu0 0.0
  %1821 = vmatmul.mubr.f32.gmra.mxu0 %v212
  %v1822 = vpop.f32.mrf.mxu0
  %v1823 = vadd.f32 %v1433, %v1822
  %v1824 = vpop.f32.mrf.mxu0
  %1825 = vmatprep.mubr.f32.mxu0 0.0
  %1826 = vmatmul.mubr.f32.gmra.mxu0 %v215
  %v1827 = vpop.f32.mrf.mxu0
  %v1828 = vadd.f32 %v1434, %v1827
  %v1829 = vpop.f32.mrf.mxu0
  %1830 = vmatprep.mubr.f32.mxu0 0.0
  %1831 = vmatmul.mubr.f32.gmra.mxu0 %v218
  %v1832 = vpop.f32.mrf.mxu0
  %v1833 = vadd.f32 %v1435, %v1832
  %v1834 = vpop.f32.mrf.mxu0
  %1835 = vmatprep.mubr.f32.mxu0 0.0
  %1836 = vmatmul.mubr.f32.gmra.mxu0 %v221
  %v1837 = vpop.f32.mrf.mxu0
  %v1838 = vadd.f32 %v1436, %v1837
  %v1839 = vpop.f32.mrf.mxu0
  %1840 = vmatprep.mubr.f32.mxu0 0.0
  %1841 = vmatmul.mubr.f32.gmra.mxu0 %v224
  %v1842 = vpop.f32.mrf.mxu0
  %v1843 = vadd.f32 %v1437, %v1842
  %v1844 = vpop.f32.mrf.mxu0
  %1845 = vmatprep.mubr.f32.mxu0 0.0
  %1846 = vmatmul.mubr.f32.gmra.mxu0 %v227
  %v1847 = vpop.f32.mrf.mxu0
  %v1848 = vadd.f32 %v1438, %v1847
  %v1849 = vpop.f32.mrf.mxu0
  %1850 = vmatprep.mubr.f32.mxu0 0.0
  %1851 = vmatmul.mubr.f32.gmra.mxu0 %v230
  %v1852 = vpop.f32.mrf.mxu0
  %v1853 = vadd.f32 %v1439, %v1852
  %v1854 = vpop.f32.mrf.mxu0
  %1855 = vmatprep.mubr.f32.mxu0 0.0
  %1856 = vmatmul.mubr.f32.gmra.mxu0 %v233
  %v1857 = vpop.f32.mrf.mxu0
  %v1858 = vadd.f32 %v1440, %v1857
  %v1859 = vpop.f32.mrf.mxu0
  %1860 = vdwg.mxu0
  %1861 = vmatprep.subr.mxu0 0.0
  %1862 = vmatpush1.msra.mxu0 0.0
  %1863 = vmatprep.subr.mxu0 0.0
  %1864 = vmatpush1.msra.mxu0 0.0
  %1865 = vmatprep.subr.mxu0 0.0
  %1866 = vmatpush1.msra.mxu0 0.0
  %1867 = vmatprep.subr.mxu0 0.0
  %1868 = vmatpush1.msra.mxu0 0.0
  %1869 = vmatprep.subr.mxu0 0.0
  %1870 = vmatpush1.msra.mxu0 0.0
  %1871 = vmatprep.subr.mxu0 0.0
  %1872 = vmatpush1.msra.mxu0 0.0
  %1873 = vmatprep.subr.mxu0 0.0
  %1874 = vmatpush1.msra.mxu0 0.0
  %1875 = vmatprep.subr.mxu0 0.0
  %1876 = vmatpush1.msra.mxu0 0.0
  %1877 = vmatprep.subr.mxu0 0.0
  %1878 = vmatpush1.msra.mxu0 %v1858
  %1879 = vmatprep.subr.mxu0 0.0
  %1880 = vmatpush1.msra.mxu0 %v1853
  %1881 = vmatprep.subr.mxu0 0.0
  %1882 = vmatpush1.msra.mxu0 %v1848
  %1883 = vmatprep.subr.mxu0 0.0
  %1884 = vmatpush1.msra.mxu0 %v1843
  %1885 = vmatprep.subr.mxu0 0.0
  %1886 = vmatpush1.msra.mxu0 %v1838
  %1887 = vmatprep.subr.mxu0 0.0
  %1888 = vmatpush1.msra.mxu0 %v1833
  %1889 = vmatprep.subr.mxu0 0.0
  %1890 = vmatpush1.msra.mxu0 %v1828
  %1891 = vmatprep.subr.mxu0 0.0
  %1892 = vmatpush1.msra.mxu0 %v1823
  %1893 = vmatprep.subr.mxu0 0.0
  %1894 = vmatpush2.msra.mxu0 0.0
  %1895 = vmatprep.subr.mxu0 0.0
  %1896 = vmatpush2.msra.mxu0 0.0
  %1897 = vmatprep.subr.mxu0 0.0
  %1898 = vmatpush2.msra.mxu0 0.0
  %1899 = vmatprep.subr.mxu0 0.0
  %1900 = vmatpush2.msra.mxu0 0.0
  %1901 = vmatprep.subr.mxu0 0.0
  %1902 = vmatpush2.msra.mxu0 0.0
  %1903 = vmatprep.subr.mxu0 0.0
  %1904 = vmatpush2.msra.mxu0 0.0
  %1905 = vmatprep.subr.mxu0 0.0
  %1906 = vmatpush2.msra.mxu0 0.0
  %1907 = vmatprep.subr.mxu0 0.0
  %1908 = vmatpush2.msra.mxu0 0.0
  %1909 = vmatprep.subr.mxu0 0.0
  %1910 = vmatpush2.msra.mxu0 0.0
  %1911 = vmatprep.subr.mxu0 0.0
  %1912 = vmatpush2.msra.mxu0 0.0
  %1913 = vmatprep.subr.mxu0 0.0
  %1914 = vmatpush2.msra.mxu0 0.0
  %1915 = vmatprep.subr.mxu0 0.0
  %1916 = vmatpush2.msra.mxu0 0.0
  %1917 = vmatprep.subr.mxu0 0.0
  %1918 = vmatpush2.msra.mxu0 0.0
  %1919 = vmatprep.subr.mxu0 0.0
  %1920 = vmatpush2.msra.mxu0 0.0
  %1921 = vmatprep.subr.mxu0 0.0
  %1922 = vmatpush2.msra.mxu0 0.0
  %1923 = vmatprep.subr.mxu0 0.0
  %1924 = vmatpush2.msra.mxu0 0.0
  %1925 = vmatprep.mubr.f32.mxu0 0.0
  %1926 = vmatmul.mubr.f32.gmra.mxu0 %v212
  %v1927 = vpop.f32.mrf.mxu0
  %v1928 = vadd.f32 %v1433, %v1927
  %v1929 = vpop.f32.mrf.mxu0
  %1930 = vmatprep.mubr.f32.mxu0 0.0
  %1931 = vmatmul.mubr.f32.gmra.mxu0 %v215
  %v1932 = vpop.f32.mrf.mxu0
  %v1933 = vadd.f32 %v1434, %v1932
  %v1934 = vpop.f32.mrf.mxu0
  %1935 = vmatprep.mubr.f32.mxu0 0.0
  %1936 = vmatmul.mubr.f32.gmra.mxu0 %v218
  %v1937 = vpop.f32.mrf.mxu0
  %v1938 = vadd.f32 %v1435, %v1937
  %v1939 = vpop.f32.mrf.mxu0
  %1940 = vmatprep.mubr.f32.mxu0 0.0
  %1941 = vmatmul.mubr.f32.gmra.mxu0 %v221
  %v1942 = vpop.f32.mrf.mxu0
  %v1943 = vadd.f32 %v1436, %v1942
  %v1944 = vpop.f32.mrf.mxu0
  %1945 = vmatprep.mubr.f32.mxu0 0.0
  %1946 = vmatmul.mubr.f32.gmra.mxu0 %v224
  %v1947 = vpop.f32.mrf.mxu0
  %v1948 = vadd.f32 %v1437, %v1947
  %v1949 = vpop.f32.mrf.mxu0
  %1950 = vmatprep.mubr.f32.mxu0 0.0
  %1951 = vmatmul.mubr.f32.gmra.mxu0 %v227
  %v1952 = vpop.f32.mrf.mxu0
  %v1953 = vadd.f32 %v1438, %v1952
  %v1954 = vpop.f32.mrf.mxu0
  %1955 = vmatprep.mubr.f32.mxu0 0.0
  %1956 = vmatmul.mubr.f32.gmra.mxu0 %v230
  %v1957 = vpop.f32.mrf.mxu0
  %v1958 = vadd.f32 %v1439, %v1957
  %v1959 = vpop.f32.mrf.mxu0
  %1960 = vmatprep.mubr.f32.mxu0 0.0
  %1961 = vmatmul.mubr.f32.gmra.mxu0 %v233
  %v1962 = vpop.f32.mrf.mxu0
  %v1963 = vadd.f32 %v1440, %v1962
  %v1964 = vpop.f32.mrf.mxu0
  %1965 = vdwg.mxu0
  %1966 = vmatprep.subr.mxu0 0.0
  %1967 = vmatpush1.msra.mxu0 0.0
  %1968 = vmatprep.subr.mxu0 0.0
  %1969 = vmatpush1.msra.mxu0 0.0
  %1970 = vmatprep.subr.mxu0 0.0
  %1971 = vmatpush1.msra.mxu0 0.0
  %1972 = vmatprep.subr.mxu0 0.0
  %1973 = vmatpush1.msra.mxu0 0.0
  %1974 = vmatprep.subr.mxu0 0.0
  %1975 = vmatpush1.msra.mxu0 0.0
  %1976 = vmatprep.subr.mxu0 0.0
  %1977 = vmatpush1.msra.mxu0 0.0
  %1978 = vmatprep.subr.mxu0 0.0
  %1979 = vmatpush1.msra.mxu0 0.0
  %1980 = vmatprep.subr.mxu0 0.0
  %1981 = vmatpush1.msra.mxu0 0.0
  %1982 = vmatprep.subr.mxu0 0.0
  %1983 = vmatpush1.msra.mxu0 %v1963
  %1984 = vmatprep.subr.mxu0 0.0
  %1985 = vmatpush1.msra.mxu0 %v1958
  %1986 = vmatprep.subr.mxu0 0.0
  %1987 = vmatpush1.msra.mxu0 %v1953
  %1988 = vmatprep.subr.mxu0 0.0
  %1989 = vmatpush1.msra.mxu0 %v1948
  %1990 = vmatprep.subr.mxu0 0.0
  %1991 = vmatpush1.msra.mxu0 %v1943
  %1992 = vmatprep.subr.mxu0 0.0
  %1993 = vmatpush1.msra.mxu0 %v1938
  %1994 = vmatprep.subr.mxu0 0.0
  %1995 = vmatpush1.msra.mxu0 %v1933
  %1996 = vmatprep.subr.mxu0 0.0
  %1997 = vmatpush1.msra.mxu0 %v1928
  %1998 = vmatprep.subr.mxu0 0.0
  %1999 = vmatpush2.msra.mxu0 0.0
  %2000 = vmatprep.subr.mxu0 0.0
  %2001 = vmatpush2.msra.mxu0 0.0
  %2002 = vmatprep.subr.mxu0 0.0
  %2003 = vmatpush2.msra.mxu0 0.0
  %2004 = vmatprep.subr.mxu0 0.0
  %2005 = vmatpush2.msra.mxu0 0.0
  %2006 = vmatprep.subr.mxu0 0.0
  %2007 = vmatpush2.msra.mxu0 0.0
  %2008 = vmatprep.subr.mxu0 0.0
  %2009 = vmatpush2.msra.mxu0 0.0
  %2010 = vmatprep.subr.mxu0 0.0
  %2011 = vmatpush2.msra.mxu0 0.0
  %2012 = vmatprep.subr.mxu0 0.0
  %2013 = vmatpush2.msra.mxu0 0.0
  %2014 = vmatprep.subr.mxu0 0.0
  %2015 = vmatpush2.msra.mxu0 0.0
  %2016 = vmatprep.subr.mxu0 0.0
  %2017 = vmatpush2.msra.mxu0 0.0
  %2018 = vmatprep.subr.mxu0 0.0
  %2019 = vmatpush2.msra.mxu0 0.0
  %2020 = vmatprep.subr.mxu0 0.0
  %2021 = vmatpush2.msra.mxu0 0.0
  %2022 = vmatprep.subr.mxu0 0.0
  %2023 = vmatpush2.msra.mxu0 0.0
  %2024 = vmatprep.subr.mxu0 0.0
  %2025 = vmatpush2.msra.mxu0 0.0
  %2026 = vmatprep.subr.mxu0 0.0
  %2027 = vmatpush2.msra.mxu0 0.0
  %2028 = vmatprep.subr.mxu0 0.0
  %2029 = vmatpush2.msra.mxu0 0.0
  %2030 = vmatprep.mubr.f32.mxu0 0.0
  %2031 = vmatmul.mubr.f32.gmra.mxu0 %v212
  %v2032 = vpop.f32.mrf.mxu0
  %v2033 = vadd.f32 %v1433, %v2032
  %v2034 = vpop.f32.mrf.mxu0
  %2035 = vmatprep.mubr.f32.mxu0 0.0
  %2036 = vmatmul.mubr.f32.gmra.mxu0 %v215
  %v2037 = vpop.f32.mrf.mxu0
  %v2038 = vadd.f32 %v1434, %v2037
  %v2039 = vpop.f32.mrf.mxu0
  %2040 = vmatprep.mubr.f32.mxu0 0.0
  %2041 = vmatmul.mubr.f32.gmra.mxu0 %v218
  %v2042 = vpop.f32.mrf.mxu0
  %v2043 = vadd.f32 %v1435, %v2042
  %v2044 = vpop.f32.mrf.mxu0
  %2045 = vmatprep.mubr.f32.mxu0 0.0
  %2046 = vmatmul.mubr.f32.gmra.mxu0 %v221
  %v2047 = vpop.f32.mrf.mxu0
  %v2048 = vadd.f32 %v1436, %v2047
  %v2049 = vpop.f32.mrf.mxu0
  %2050 = vmatprep.mubr.f32.mxu0 0.0
  %2051 = vmatmul.mubr.f32.gmra.mxu0 %v224
  %v2052 = vpop.f32.mrf.mxu0
  %v2053 = vadd.f32 %v1437, %v2052
  %v2054 = vpop.f32.mrf.mxu0
  %2055 = vmatprep.mubr.f32.mxu0 0.0
  %2056 = vmatmul.mubr.f32.gmra.mxu0 %v227
  %v2057 = vpop.f32.mrf.mxu0
  %v2058 = vadd.f32 %v1438, %v2057
  %v2059 = vpop.f32.mrf.mxu0
  %2060 = vmatprep.mubr.f32.mxu0 0.0
  %2061 = vmatmul.mubr.f32.gmra.mxu0 %v230
  %v2062 = vpop.f32.mrf.mxu0
  %v2063 = vadd.f32 %v1439, %v2062
  %v2064 = vpop.f32.mrf.mxu0
  %2065 = vmatprep.mubr.f32.mxu0 0.0
  %2066 = vmatmul.mubr.f32.gmra.mxu0 %v233
  %v2067 = vpop.f32.mrf.mxu0
  %v2068 = vadd.f32 %v1440, %v2067
  %v2069 = vpop.f32.mrf.mxu0
  %2070 = vdwg.mxu0
  %2071 = vmatprep.subr.mxu0 0.0
  %2072 = vmatpush1.msra.mxu0 0.0
  %2073 = vmatprep.subr.mxu0 0.0
  %2074 = vmatpush1.msra.mxu0 0.0
  %2075 = vmatprep.subr.mxu0 0.0
  %2076 = vmatpush1.msra.mxu0 0.0
  %2077 = vmatprep.subr.mxu0 0.0
  %2078 = vmatpush1.msra.mxu0 0.0
  %2079 = vmatprep.subr.mxu0 0.0
  %2080 = vmatpush1.msra.mxu0 0.0
  %2081 = vmatprep.subr.mxu0 0.0
  %2082 = vmatpush1.msra.mxu0 0.0
  %2083 = vmatprep.subr.mxu0 0.0
  %2084 = vmatpush1.msra.mxu0 0.0
  %2085 = vmatprep.subr.mxu0 0.0
  %2086 = vmatpush1.msra.mxu0 0.0
  %2087 = vmatprep.subr.mxu0 0.0
  %2088 = vmatpush1.msra.mxu0 %v2068
  %2089 = vmatprep.subr.mxu0 0.0
  %2090 = vmatpush1.msra.mxu0 %v2063
  %2091 = vmatprep.subr.mxu0 0.0
  %2092 = vmatpush1.msra.mxu0 %v2058
  %2093 = vmatprep.subr.mxu0 0.0
  %2094 = vmatpush1.msra.mxu0 %v2053
  %2095 = vmatprep.subr.mxu0 0.0
  %2096 = vmatpush1.msra.mxu0 %v2048
  %2097 = vmatprep.subr.mxu0 0.0
  %2098 = vmatpush1.msra.mxu0 %v2043
  %2099 = vmatprep.subr.mxu0 0.0
  %2100 = vmatpush1.msra.mxu0 %v2038
  %2101 = vmatprep.subr.mxu0 0.0
  %2102 = vmatpush1.msra.mxu0 %v2033
  %2103 = vmatprep.subr.mxu0 0.0
  %2104 = vmatpush2.msra.mxu0 0.0
  %2105 = vmatprep.subr.mxu0 0.0
  %2106 = vmatpush2.msra.mxu0 0.0
  %2107 = vmatprep.subr.mxu0 0.0
  %2108 = vmatpush2.msra.mxu0 0.0
  %2109 = vmatprep.subr.mxu0 0.0
  %2110 = vmatpush2.msra.mxu0 0.0
  %2111 = vmatprep.subr.mxu0 0.0
  %2112 = vmatpush2.msra.mxu0 0.0
  %2113 = vmatprep.subr.mxu0 0.0
  %2114 = vmatpush2.msra.mxu0 0.0
  %2115 = vmatprep.subr.mxu0 0.0
  %2116 = vmatpush2.msra.mxu0 0.0
  %2117 = vmatprep.subr.mxu0 0.0
  %2118 = vmatpush2.msra.mxu0 0.0
  %2119 = vmatprep.subr.mxu0 0.0
  %2120 = vmatpush2.msra.mxu0 0.0
  %2121 = vmatprep.subr.mxu0 0.0
  %2122 = vmatpush2.msra.mxu0 0.0
  %2123 = vmatprep.subr.mxu0 0.0
  %2124 = vmatpush2.msra.mxu0 0.0
  %2125 = vmatprep.subr.mxu0 0.0
  %2126 = vmatpush2.msra.mxu0 0.0
  %2127 = vmatprep.subr.mxu0 0.0
  %2128 = vmatpush2.msra.mxu0 0.0
  %2129 = vmatprep.subr.mxu0 0.0
  %2130 = vmatpush2.msra.mxu0 0.0
  %2131 = vmatprep.subr.mxu0 0.0
  %2132 = vmatpush2.msra.mxu0 0.0
  %2133 = vmatprep.subr.mxu0 0.0
  %2134 = vmatpush2.msra.mxu0 0.0
  %2135 = vmatprep.mubr.f32.mxu0 0.0
  %2136 = vmatmul.mubr.f32.gmra.mxu0 %v212
  %v2137 = vpop.f32.mrf.mxu0
  %v2138 = vadd.f32 %v1433, %v2137
  %v2139 = vpop.f32.mrf.mxu0
  %2140 = vmatprep.mubr.f32.mxu0 0.0
  %2141 = vmatmul.mubr.f32.gmra.mxu0 %v215
  %v2142 = vpop.f32.mrf.mxu0
  %v2143 = vadd.f32 %v1434, %v2142
  %v2144 = vpop.f32.mrf.mxu0
  %2145 = vmatprep.mubr.f32.mxu0 0.0
  %2146 = vmatmul.mubr.f32.gmra.mxu0 %v218
  %v2147 = vpop.f32.mrf.mxu0
  %v2148 = vadd.f32 %v1435, %v2147
  %v2149 = vpop.f32.mrf.mxu0
  %2150 = vmatprep.mubr.f32.mxu0 0.0
  %2151 = vmatmul.mubr.f32.gmra.mxu0 %v221
  %v2152 = vpop.f32.mrf.mxu0
  %v2153 = vadd.f32 %v1436, %v2152
  %v2154 = vpop.f32.mrf.mxu0
  %2155 = vmatprep.mubr.f32.mxu0 0.0
  %2156 = vmatmul.mubr.f32.gmra.mxu0 %v224
  %v2157 = vpop.f32.mrf.mxu0
  %v2158 = vadd.f32 %v1437, %v2157
  %v2159 = vpop.f32.mrf.mxu0
  %2160 = vmatprep.mubr.f32.mxu0 0.0
  %2161 = vmatmul.mubr.f32.gmra.mxu0 %v227
  %v2162 = vpop.f32.mrf.mxu0
  %v2163 = vadd.f32 %v1438, %v2162
  %v2164 = vpop.f32.mrf.mxu0
  %2165 = vmatprep.mubr.f32.mxu0 0.0
  %2166 = vmatmul.mubr.f32.gmra.mxu0 %v230
  %v2167 = vpop.f32.mrf.mxu0
  %v2168 = vadd.f32 %v1439, %v2167
  %v2169 = vpop.f32.mrf.mxu0
  %2170 = vmatprep.mubr.f32.mxu0 0.0
  %2171 = vmatmul.mubr.f32.gmra.mxu0 %v233
  %v2172 = vpop.f32.mrf.mxu0
  %v2173 = vadd.f32 %v1440, %v2172
  %v2174 = vpop.f32.mrf.mxu0
  %2175 = vdwg.mxu0
  %2176 = vmatprep.subr.mxu0 0.0
  %2177 = vmatpush1.msra.mxu0 0.0
  %2178 = vmatprep.subr.mxu0 0.0
  %2179 = vmatpush1.msra.mxu0 0.0
  %2180 = vmatprep.subr.mxu0 0.0
  %2181 = vmatpush1.msra.mxu0 0.0
  %2182 = vmatprep.subr.mxu0 0.0
  %2183 = vmatpush1.msra.mxu0 0.0
  %2184 = vmatprep.subr.mxu0 0.0
  %2185 = vmatpush1.msra.mxu0 0.0
  %2186 = vmatprep.subr.mxu0 0.0
  %2187 = vmatpush1.msra.mxu0 0.0
  %2188 = vmatprep.subr.mxu0 0.0
  %2189 = vmatpush1.msra.mxu0 0.0
  %2190 = vmatprep.subr.mxu0 0.0
  %2191 = vmatpush1.msra.mxu0 0.0
  %2192 = vmatprep.subr.mxu0 0.0
  %2193 = vmatpush1.msra.mxu0 %v2173
  %2194 = vmatprep.subr.mxu0 0.0
  %2195 = vmatpush1.msra.mxu0 %v2168
  %2196 = vmatprep.subr.mxu0 0.0
  %2197 = vmatpush1.msra.mxu0 %v2163
  %2198 = vmatprep.subr.mxu0 0.0
  %2199 = vmatpush1.msra.mxu0 %v2158
  %2200 = vmatprep.subr.mxu0 0.0
  %2201 = vmatpush1.msra.mxu0 %v2153
  %2202 = vmatprep.subr.mxu0 0.0
  %2203 = vmatpush1.msra.mxu0 %v2148
  %2204 = vmatprep.subr.mxu0 0.0
  %2205 = vmatpush1.msra.mxu0 %v2143
  %2206 = vmatprep.subr.mxu0 0.0
  %2207 = vmatpush1.msra.mxu0 %v2138
  %2208 = vmatprep.subr.mxu0 0.0
  %2209 = vmatpush2.msra.mxu0 0.0
  %2210 = vmatprep.subr.mxu0 0.0
  %2211 = vmatpush2.msra.mxu0 0.0
  %2212 = vmatprep.subr.mxu0 0.0
  %2213 = vmatpush2.msra.mxu0 0.0
  %2214 = vmatprep.subr.mxu0 0.0
  %2215 = vmatpush2.msra.mxu0 0.0
  %2216 = vmatprep.subr.mxu0 0.0
  %2217 = vmatpush2.msra.mxu0 0.0
  %2218 = vmatprep.subr.mxu0 0.0
  %2219 = vmatpush2.msra.mxu0 0.0
  %2220 = vmatprep.subr.mxu0 0.0
  %2221 = vmatpush2.msra.mxu0 0.0
  %2222 = vmatprep.subr.mxu0 0.0
  %2223 = vmatpush2.msra.mxu0 0.0
  %2224 = vmatprep.subr.mxu0 0.0
  %2225 = vmatpush2.msra.mxu0 0.0
  %2226 = vmatprep.subr.mxu0 0.0
  %2227 = vmatpush2.msra.mxu0 0.0
  %2228 = vmatprep.subr.mxu0 0.0
  %2229 = vmatpush2.msra.mxu0 0.0
  %2230 = vmatprep.subr.mxu0 0.0
  %2231 = vmatpush2.msra.mxu0 0.0
  %2232 = vmatprep.subr.mxu0 0.0
  %2233 = vmatpush2.msra.mxu0 0.0
  %2234 = vmatprep.subr.mxu0 0.0
  %2235 = vmatpush2.msra.mxu0 0.0
  %2236 = vmatprep.subr.mxu0 0.0
  %2237 = vmatpush2.msra.mxu0 0.0
  %2238 = vmatprep.subr.mxu0 0.0
  %2239 = vmatpush2.msra.mxu0 0.0
  %2240 = vmatprep.mubr.f32.mxu0 0.0
  %2241 = vmatmul.mubr.f32.gmra.mxu0 %v212
  %v2242 = vpop.f32.mrf.mxu0
  %v2243 = vadd.f32 %v1433, %v2242
  %v2244 = vpop.f32.mrf.mxu0
  %2245 = vmatprep.mubr.f32.mxu0 0.0
  %2246 = vmatmul.mubr.f32.gmra.mxu0 %v215
  %v2247 = vpop.f32.mrf.mxu0
  %v2248 = vadd.f32 %v1434, %v2247
  %v2249 = vpop.f32.mrf.mxu0
  %2250 = vmatprep.mubr.f32.mxu0 0.0
  %2251 = vmatmul.mubr.f32.gmra.mxu0 %v218
  %v2252 = vpop.f32.mrf.mxu0
  %v2253 = vadd.f32 %v1435, %v2252
  %v2254 = vpop.f32.mrf.mxu0
  %2255 = vmatprep.mubr.f32.mxu0 0.0
  %2256 = vmatmul.mubr.f32.gmra.mxu0 %v221
  %v2257 = vpop.f32.mrf.mxu0
  %v2258 = vadd.f32 %v1436, %v2257
  %v2259 = vpop.f32.mrf.mxu0
  %2260 = vmatprep.mubr.f32.mxu0 0.0
  %2261 = vmatmul.mubr.f32.gmra.mxu0 %v224
  %v2262 = vpop.f32.mrf.mxu0
  %v2263 = vadd.f32 %v1437, %v2262
  %v2264 = vpop.f32.mrf.mxu0
  %2265 = vmatprep.mubr.f32.mxu0 0.0
  %2266 = vmatmul.mubr.f32.gmra.mxu0 %v227
  %v2267 = vpop.f32.mrf.mxu0
  %v2268 = vadd.f32 %v1438, %v2267
  %v2269 = vpop.f32.mrf.mxu0
  %2270 = vmatprep.mubr.f32.mxu0 0.0
  %2271 = vmatmul.mubr.f32.gmra.mxu0 %v230
  %v2272 = vpop.f32.mrf.mxu0
  %v2273 = vadd.f32 %v1439, %v2272
  %v2274 = vpop.f32.mrf.mxu0
  %2275 = vmatprep.mubr.f32.mxu0 0.0
  %2276 = vmatmul.mubr.f32.gmra.mxu0 %v233
  %v2277 = vpop.f32.mrf.mxu0
  %v2278 = vadd.f32 %v1440, %v2277
  %v2279 = vpop.f32.mrf.mxu0
  %2280 = vdwg.mxu0
  %2281 = vmatprep.subr.mxu0 0.0
  %2282 = vmatpush1.msra.mxu0 0.0
  %2283 = vmatprep.subr.mxu0 0.0
  %2284 = vmatpush1.msra.mxu0 0.0
  %2285 = vmatprep.subr.mxu0 0.0
  %2286 = vmatpush1.msra.mxu0 0.0
  %2287 = vmatprep.subr.mxu0 0.0
  %2288 = vmatpush1.msra.mxu0 0.0
  %2289 = vmatprep.subr.mxu0 0.0
  %2290 = vmatpush1.msra.mxu0 0.0
  %2291 = vmatprep.subr.mxu0 0.0
  %2292 = vmatpush1.msra.mxu0 0.0
  %2293 = vmatprep.subr.mxu0 0.0
  %2294 = vmatpush1.msra.mxu0 0.0
  %2295 = vmatprep.subr.mxu0 0.0
  %2296 = vmatpush1.msra.mxu0 0.0
  %2297 = vmatprep.subr.mxu0 0.0
  %2298 = vmatpush1.msra.mxu0 %v2278
  %2299 = vmatprep.subr.mxu0 0.0
  %2300 = vmatpush1.msra.mxu0 %v2273
  %2301 = vmatprep.subr.mxu0 0.0
  %2302 = vmatpush1.msra.mxu0 %v2268
  %2303 = vmatprep.subr.mxu0 0.0
  %2304 = vmatpush1.msra.mxu0 %v2263
  %2305 = vmatprep.subr.mxu0 0.0
  %2306 = vmatpush1.msra.mxu0 %v2258
  %2307 = vmatprep.subr.mxu0 0.0
  %2308 = vmatpush1.msra.mxu0 %v2253
  %2309 = vmatprep.subr.mxu0 0.0
  %2310 = vmatpush1.msra.mxu0 %v2248
  %2311 = vmatprep.subr.mxu0 0.0
  %2312 = vmatpush1.msra.mxu0 %v2243
  %2313 = vmatprep.subr.mxu0 0.0
  %2314 = vmatpush2.msra.mxu0 0.0
  %2315 = vmatprep.subr.mxu0 0.0
  %2316 = vmatpush2.msra.mxu0 0.0
  %2317 = vmatprep.subr.mxu0 0.0
  %2318 = vmatpush2.msra.mxu0 0.0
  %2319 = vmatprep.subr.mxu0 0.0
  %2320 = vmatpush2.msra.mxu0 0.0
  %2321 = vmatprep.subr.mxu0 0.0
  %2322 = vmatpush2.msra.mxu0 0.0
  %2323 = vmatprep.subr.mxu0 0.0
  %2324 = vmatpush2.msra.mxu0 0.0
  %2325 = vmatprep.subr.mxu0 0.0
  %2326 = vmatpush2.msra.mxu0 0.0
  %2327 = vmatprep.subr.mxu0 0.0
  %2328 = vmatpush2.msra.mxu0 0.0
  %2329 = vmatprep.subr.mxu0 0.0
  %2330 = vmatpush2.msra.mxu0 0.0
  %2331 = vmatprep.subr.mxu0 0.0
  %2332 = vmatpush2.msra.mxu0 0.0
  %2333 = vmatprep.subr.mxu0 0.0
  %2334 = vmatpush2.msra.mxu0 0.0
  %2335 = vmatprep.subr.mxu0 0.0
  %2336 = vmatpush2.msra.mxu0 0.0
  %2337 = vmatprep.subr.mxu0 0.0
  %2338 = vmatpush2.msra.mxu0 0.0
  %2339 = vmatprep.subr.mxu0 0.0
  %2340 = vmatpush2.msra.mxu0 0.0
  %2341 = vmatprep.subr.mxu0 0.0
  %2342 = vmatpush2.msra.mxu0 0.0
  %2343 = vmatprep.subr.mxu0 0.0
  %2344 = vmatpush2.msra.mxu0 0.0
  %2345 = vmatprep.mubr.f32.mxu0 0.0
  %2346 = vmatmul.mubr.f32.gmra.mxu0 %v212
  %v2347 = vpop.f32.mrf.mxu0
  %v2348 = vadd.f32 %v1433, %v2347
  %v2349 = vpop.f32.mrf.mxu0
  %2350 = vmatprep.mubr.f32.mxu0 0.0
  %2351 = vmatmul.mubr.f32.gmra.mxu0 %v215
  %v2352 = vpop.f32.mrf.mxu0
  %v2353 = vadd.f32 %v1434, %v2352
  %v2354 = vpop.f32.mrf.mxu0
  %2355 = vmatprep.mubr.f32.mxu0 0.0
  %2356 = vmatmul.mubr.f32.gmra.mxu0 %v218
  %v2357 = vpop.f32.mrf.mxu0
  %v2358 = vadd.f32 %v1435, %v2357
  %v2359 = vpop.f32.mrf.mxu0
  %2360 = vmatprep.mubr.f32.mxu0 0.0
  %2361 = vmatmul.mubr.f32.gmra.mxu0 %v221
  %v2362 = vpop.f32.mrf.mxu0
  %v2363 = vadd.f32 %v1436, %v2362
  %v2364 = vpop.f32.mrf.mxu0
  %2365 = vmatprep.mubr.f32.mxu0 0.0
  %2366 = vmatmul.mubr.f32.gmra.mxu0 %v224
  %v2367 = vpop.f32.mrf.mxu0
  %v2368 = vadd.f32 %v1437, %v2367
  %v2369 = vpop.f32.mrf.mxu0
  %2370 = vmatprep.mubr.f32.mxu0 0.0
  %2371 = vmatmul.mubr.f32.gmra.mxu0 %v227
  %v2372 = vpop.f32.mrf.mxu0
  %v2373 = vadd.f32 %v1438, %v2372
  %v2374 = vpop.f32.mrf.mxu0
  %2375 = vmatprep.mubr.f32.mxu0 0.0
  %2376 = vmatmul.mubr.f32.gmra.mxu0 %v230
  %v2377 = vpop.f32.mrf.mxu0
  %v2378 = vadd.f32 %v1439, %v2377
  %v2379 = vpop.f32.mrf.mxu0
  %2380 = vmatprep.mubr.f32.mxu0 0.0
  %2381 = vmatmul.mubr.f32.gmra.mxu0 %v233
  %v2382 = vpop.f32.mrf.mxu0
  %v2383 = vadd.f32 %v1440, %v2382
  %v2384 = vpop.f32.mrf.mxu0
  %2385 = vdwg.mxu0
  %2386 = vmatprep.subr.mxu0 0.0
  %2387 = vmatpush1.msra.mxu0 0.0
  %2388 = vmatprep.subr.mxu0 0.0
  %2389 = vmatpush1.msra.mxu0 0.0
  %2390 = vmatprep.subr.mxu0 0.0
  %2391 = vmatpush1.msra.mxu0 0.0
  %2392 = vmatprep.subr.mxu0 0.0
  %2393 = vmatpush1.msra.mxu0 0.0
  %2394 = vmatprep.subr.mxu0 0.0
  %2395 = vmatpush1.msra.mxu0 0.0
  %2396 = vmatprep.subr.mxu0 0.0
  %2397 = vmatpush1.msra.mxu0 0.0
  %2398 = vmatprep.subr.mxu0 0.0
  %2399 = vmatpush1.msra.mxu0 0.0
  %2400 = vmatprep.subr.mxu0 0.0
  %2401 = vmatpush1.msra.mxu0 0.0
  %2402 = vmatprep.subr.mxu0 0.0
  %2403 = vmatpush1.msra.mxu0 %v2383
  %2404 = vmatprep.subr.mxu0 0.0
  %2405 = vmatpush1.msra.mxu0 %v2378
  %2406 = vmatprep.subr.mxu0 0.0
  %2407 = vmatpush1.msra.mxu0 %v2373
  %2408 = vmatprep.subr.mxu0 0.0
  %2409 = vmatpush1.msra.mxu0 %v2368
  %2410 = vmatprep.subr.mxu0 0.0
  %2411 = vmatpush1.msra.mxu0 %v2363
  %2412 = vmatprep.subr.mxu0 0.0
  %2413 = vmatpush1.msra.mxu0 %v2358
  %2414 = vmatprep.subr.mxu0 0.0
  %2415 = vmatpush1.msra.mxu0 %v2353
  %2416 = vmatprep.subr.mxu0 0.0
  %2417 = vmatpush1.msra.mxu0 %v2348
  %2418 = vmatprep.subr.mxu0 0.0
  %2419 = vmatpush2.msra.mxu0 0.0
  %2420 = vmatprep.subr.mxu0 0.0
  %2421 = vmatpush2.msra.mxu0 0.0
  %2422 = vmatprep.subr.mxu0 0.0
  %2423 = vmatpush2.msra.mxu0 0.0
  %2424 = vmatprep.subr.mxu0 0.0
  %2425 = vmatpush2.msra.mxu0 0.0
  %2426 = vmatprep.subr.mxu0 0.0
  %2427 = vmatpush2.msra.mxu0 0.0
  %2428 = vmatprep.subr.mxu0 0.0
  %2429 = vmatpush2.msra.mxu0 0.0
  %2430 = vmatprep.subr.mxu0 0.0
  %2431 = vmatpush2.msra.mxu0 0.0
  %2432 = vmatprep.subr.mxu0 0.0
  %2433 = vmatpush2.msra.mxu0 0.0
  %2434 = vmatprep.subr.mxu0 0.0
  %2435 = vmatpush2.msra.mxu0 0.0
  %2436 = vmatprep.subr.mxu0 0.0
  %2437 = vmatpush2.msra.mxu0 0.0
  %2438 = vmatprep.subr.mxu0 0.0
  %2439 = vmatpush2.msra.mxu0 0.0
  %2440 = vmatprep.subr.mxu0 0.0
  %2441 = vmatpush2.msra.mxu0 0.0
  %2442 = vmatprep.subr.mxu0 0.0
  %2443 = vmatpush2.msra.mxu0 0.0
  %2444 = vmatprep.subr.mxu0 0.0
  %2445 = vmatpush2.msra.mxu0 0.0
  %2446 = vmatprep.subr.mxu0 0.0
  %2447 = vmatpush2.msra.mxu0 0.0
  %2448 = vmatprep.subr.mxu0 0.0
  %2449 = vmatpush2.msra.mxu0 0.0
  %2450 = vmatprep.mubr.f32.mxu0 0.0
  %2451 = vmatmul.mubr.f32.gmra.mxu0 %v212
  %v2452 = vpop.f32.mrf.mxu0
  %v2453 = vadd.f32 %v1433, %v2452
  %v2454 = vpop.f32.mrf.mxu0
  %2455 = vmatprep.mubr.f32.mxu0 0.0
  %2456 = vmatmul.mubr.f32.gmra.mxu0 %v215
  %v2457 = vpop.f32.mrf.mxu0
  %v2458 = vadd.f32 %v1434, %v2457
  %v2459 = vpop.f32.mrf.mxu0
  %2460 = vmatprep.mubr.f32.mxu0 0.0
  %2461 = vmatmul.mubr.f32.gmra.mxu0 %v218
  %v2462 = vpop.f32.mrf.mxu0
  %v2463 = vadd.f32 %v1435, %v2462
  %v2464 = vpop.f32.mrf.mxu0
  %2465 = vmatprep.mubr.f32.mxu0 0.0
  %2466 = vmatmul.mubr.f32.gmra.mxu0 %v221
  %v2467 = vpop.f32.mrf.mxu0
  %v2468 = vadd.f32 %v1436, %v2467
  %v2469 = vpop.f32.mrf.mxu0
  %2470 = vmatprep.mubr.f32.mxu0 0.0
  %2471 = vmatmul.mubr.f32.gmra.mxu0 %v224
  %v2472 = vpop.f32.mrf.mxu0
  %v2473 = vadd.f32 %v1437, %v2472
  %v2474 = vpop.f32.mrf.mxu0
  %2475 = vmatprep.mubr.f32.mxu0 0.0
  %2476 = vmatmul.mubr.f32.gmra.mxu0 %v227
  %v2477 = vpop.f32.mrf.mxu0
  %v2478 = vadd.f32 %v1438, %v2477
  %v2479 = vpop.f32.mrf.mxu0
  %2480 = vmatprep.mubr.f32.mxu0 0.0
  %2481 = vmatmul.mubr.f32.gmra.mxu0 %v230
  %v2482 = vpop.f32.mrf.mxu0
  %v2483 = vadd.f32 %v1439, %v2482
  %v2484 = vpop.f32.mrf.mxu0
  %2485 = vmatprep.mubr.f32.mxu0 0.0
  %2486 = vmatmul.mubr.f32.gmra.mxu0 %v233
  %v2487 = vpop.f32.mrf.mxu0
  %v2488 = vadd.f32 %v1440, %v2487
  %v2489 = vpop.f32.mrf.mxu0
  %2490 = vdwg.mxu0
  %v2491 = vld [vmem:[%s6] sm:$0xff]
  %v2492 = vld [vmem:[%s6 + $0x8] sm:$0xff]
  %v2493 = vld [vmem:[%s7] sm:$0x1]
  %v2495 = vlaneseq
  %v2496 = vshrl.u32 %v2495, 7
  %v2497 = vsub.s32 0, %v2496
  %v2498 = vrot.slane %v2493, %v2497
  %vm2500 = vcmask 130048
  %v2502 = vsel %vm2500, %v2453, 0
  %v2505 = vsel %vm2500, %v2458, 0
  %v2508 = vsel %vm2500, %v2463, 0
  %v2511 = vsel %vm2500, %v2468, 0
  %v2514 = vsel %vm2500, %v2473, 0
  %v2517 = vsel %vm2500, %v2478, 0
  %v2520 = vsel %vm2500, %v2483, 0
  %v2523 = vsel %vm2500, %v2488, 0
  %2525 = vmatprep.subr.mxu0 0.0
  %2526 = vmatpush1.msra.mxu0 0.0
  %2527 = vmatprep.subr.mxu0 0.0
  %2528 = vmatpush1.msra.mxu0 0.0
  %2529 = vmatprep.subr.mxu0 0.0
  %2530 = vmatpush1.msra.mxu0 0.0
  %2531 = vmatprep.subr.mxu0 0.0
  %2532 = vmatpush1.msra.mxu0 0.0
  %2533 = vmatprep.subr.mxu0 0.0
  %2534 = vmatpush1.msra.mxu0 0.0
  %2535 = vmatprep.subr.mxu0 0.0
  %2536 = vmatpush1.msra.mxu0 0.0
  %2537 = vmatprep.subr.mxu0 0.0
  %2538 = vmatpush1.msra.mxu0 0.0
  %2539 = vmatprep.subr.mxu0 0.0
  %2540 = vmatpush1.msra.mxu0 0.0
  %2541 = vmatprep.subr.mxu0 0.0
  %2542 = vmatpush1.msra.mxu0 0.0
  %2543 = vmatprep.subr.mxu0 0.0
  %2544 = vmatpush1.msra.mxu0 0.0
  %2545 = vmatprep.subr.mxu0 0.0
  %2546 = vmatpush1.msra.mxu0 0.0
  %2547 = vmatprep.subr.mxu0 0.0
  %2548 = vmatpush1.msra.mxu0 0.0
  %2549 = vmatprep.subr.mxu0 0.0
  %2550 = vmatpush1.msra.mxu0 0.0
  %2551 = vmatprep.subr.mxu0 0.0
  %2552 = vmatpush1.msra.mxu0 0.0
  %2553 = vmatprep.subr.mxu0 0.0
  %2554 = vmatpush1.msra.mxu0 %v2492
  %2555 = vmatprep.subr.mxu0 0.0
  %2556 = vmatpush1.msra.mxu0 %v2491
  %2557 = vmatprep.subr.mxu0 0.0
  %2558 = vmatpush2.msra.mxu0 0.0
  %2559 = vmatprep.subr.mxu0 0.0
  %2560 = vmatpush2.msra.mxu0 0.0
  %2561 = vmatprep.subr.mxu0 0.0
  %2562 = vmatpush2.msra.mxu0 0.0
  %2563 = vmatprep.subr.mxu0 0.0
  %2564 = vmatpush2.msra.mxu0 0.0
  %2565 = vmatprep.subr.mxu0 0.0
  %2566 = vmatpush2.msra.mxu0 0.0
  %2567 = vmatprep.subr.mxu0 0.0
  %2568 = vmatpush2.msra.mxu0 0.0
  %2569 = vmatprep.subr.mxu0 0.0
  %2570 = vmatpush2.msra.mxu0 0.0
  %2571 = vmatprep.subr.mxu0 0.0
  %2572 = vmatpush2.msra.mxu0 0.0
  %2573 = vmatprep.subr.mxu0 0.0
  %2574 = vmatpush2.msra.mxu0 0.0
  %2575 = vmatprep.subr.mxu0 0.0
  %2576 = vmatpush2.msra.mxu0 0.0
  %2577 = vmatprep.subr.mxu0 0.0
  %2578 = vmatpush2.msra.mxu0 0.0
  %2579 = vmatprep.subr.mxu0 0.0
  %2580 = vmatpush2.msra.mxu0 0.0
  %2581 = vmatprep.subr.mxu0 0.0
  %2582 = vmatpush2.msra.mxu0 0.0
  %2583 = vmatprep.subr.mxu0 0.0
  %2584 = vmatpush2.msra.mxu0 0.0
  %2585 = vmatprep.subr.mxu0 0.0
  %2586 = vmatpush2.msra.mxu0 0.0
  %2587 = vmatprep.subr.mxu0 0.0
  %2588 = vmatpush2.msra.mxu0 0.0
  %2589 = vmatprep.mubr.f32.mxu0 0.0
  %2590 = vmatmul.mubr.f32.gmra.mxu0 %v2502
  %v2591 = vpop.f32.mrf.mxu0
  %v2592 = vadd.f32 %v2498, %v2591
  %v2593 = vpop.f32.mrf.mxu0
  %2594 = vmatprep.mubr.f32.mxu0 0.0
  %2595 = vmatmul.mubr.f32.gmra.mxu0 %v2505
  %v2596 = vpop.f32.mrf.mxu0
  %v2597 = vadd.f32 %v2498, %v2596
  %v2598 = vpop.f32.mrf.mxu0
  %2599 = vmatprep.mubr.f32.mxu0 0.0
  %2600 = vmatmul.mubr.f32.gmra.mxu0 %v2508
  %v2601 = vpop.f32.mrf.mxu0
  %v2602 = vadd.f32 %v2498, %v2601
  %v2603 = vpop.f32.mrf.mxu0
  %2604 = vmatprep.mubr.f32.mxu0 0.0
  %2605 = vmatmul.mubr.f32.gmra.mxu0 %v2511
  %v2606 = vpop.f32.mrf.mxu0
  %v2607 = vadd.f32 %v2498, %v2606
  %v2608 = vpop.f32.mrf.mxu0
  %2609 = vmatprep.mubr.f32.mxu0 0.0
  %2610 = vmatmul.mubr.f32.gmra.mxu0 %v2514
  %v2611 = vpop.f32.mrf.mxu0
  %v2612 = vadd.f32 %v2498, %v2611
  %v2613 = vpop.f32.mrf.mxu0
  %2614 = vmatprep.mubr.f32.mxu0 0.0
  %2615 = vmatmul.mubr.f32.gmra.mxu0 %v2517
  %v2616 = vpop.f32.mrf.mxu0
  %v2617 = vadd.f32 %v2498, %v2616
  %v2618 = vpop.f32.mrf.mxu0
  %2619 = vmatprep.mubr.f32.mxu0 0.0
  %2620 = vmatmul.mubr.f32.gmra.mxu0 %v2520
  %v2621 = vpop.f32.mrf.mxu0
  %v2622 = vadd.f32 %v2498, %v2621
  %v2623 = vpop.f32.mrf.mxu0
  %2624 = vmatprep.mubr.f32.mxu0 0.0
  %2625 = vmatmul.mubr.f32.gmra.mxu0 %v2523
  %v2626 = vpop.f32.mrf.mxu0
  %v2627 = vadd.f32 %v2498, %v2626
  %v2628 = vpop.f32.mrf.mxu0
  %2629 = vdwg.mxu0
  %v2630 = vmul.f32 %v2592, 0.1
  %v2631 = vmul.f32 %v2597, 0.1
  %v2632 = vmul.f32 %v2602, 0.1
  %v2633 = vmul.f32 %v2607, 0.1
  %v2634 = vmul.f32 %v2612, 0.1
  %v2635 = vmul.f32 %v2617, 0.1
  %v2636 = vmul.f32 %v2622, 0.1
  %v2637 = vmul.f32 %v2627, 0.1
  %2638 = vmatprep.subr.mxu0 0.0
  %2639 = vmatpush1.msra.mxu0 0.0
  %2640 = vmatprep.subr.mxu0 0.0
  %2641 = vmatpush1.msra.mxu0 0.0
  %2642 = vmatprep.subr.mxu0 0.0
  %2643 = vmatpush1.msra.mxu0 0.0
  %2644 = vmatprep.subr.mxu0 0.0
  %2645 = vmatpush1.msra.mxu0 0.0
  %2646 = vmatprep.subr.mxu0 0.0
  %2647 = vmatpush1.msra.mxu0 0.0
  %2648 = vmatprep.subr.mxu0 0.0
  %2649 = vmatpush1.msra.mxu0 0.0
  %2650 = vmatprep.subr.mxu0 0.0
  %2651 = vmatpush1.msra.mxu0 0.0
  %2652 = vmatprep.subr.mxu0 0.0
  %2653 = vmatpush1.msra.mxu0 0.0
  %2654 = vmatprep.subr.mxu0 0.0
  %2655 = vmatpush1.msra.mxu0 %v2627
  %2656 = vmatprep.subr.mxu0 0.0
  %2657 = vmatpush1.msra.mxu0 %v2622
  %2658 = vmatprep.subr.mxu0 0.0
  %2659 = vmatpush1.msra.mxu0 %v2617
  %2660 = vmatprep.subr.mxu0 0.0
  %2661 = vmatpush1.msra.mxu0 %v2612
  %2662 = vmatprep.subr.mxu0 0.0
  %2663 = vmatpush1.msra.mxu0 %v2607
  %2664 = vmatprep.subr.mxu0 0.0
  %2665 = vmatpush1.msra.mxu0 %v2602
  %2666 = vmatprep.subr.mxu0 0.0
  %2667 = vmatpush1.msra.mxu0 %v2597
  %2668 = vmatprep.subr.mxu0 0.0
  %2669 = vmatpush1.msra.mxu0 %v2592
  %2670 = vmatprep.subr.mxu0 0.0
  %2671 = vmatpush2.msra.mxu0 0.0
  %2672 = vmatprep.subr.mxu0 0.0
  %2673 = vmatpush2.msra.mxu0 0.0
  %2674 = vmatprep.subr.mxu0 0.0
  %2675 = vmatpush2.msra.mxu0 0.0
  %2676 = vmatprep.subr.mxu0 0.0
  %2677 = vmatpush2.msra.mxu0 0.0
  %2678 = vmatprep.subr.mxu0 0.0
  %2679 = vmatpush2.msra.mxu0 0.0
  %2680 = vmatprep.subr.mxu0 0.0
  %2681 = vmatpush2.msra.mxu0 0.0
  %2682 = vmatprep.subr.mxu0 0.0
  %2683 = vmatpush2.msra.mxu0 0.0
  %2684 = vmatprep.subr.mxu0 0.0
  %2685 = vmatpush2.msra.mxu0 0.0
  %2686 = vmatprep.subr.mxu0 0.0
  %2687 = vmatpush2.msra.mxu0 0.0
  %2688 = vmatprep.subr.mxu0 0.0
  %2689 = vmatpush2.msra.mxu0 0.0
  %2690 = vmatprep.subr.mxu0 0.0
  %2691 = vmatpush2.msra.mxu0 0.0
  %2692 = vmatprep.subr.mxu0 0.0
  %2693 = vmatpush2.msra.mxu0 0.0
  %2694 = vmatprep.subr.mxu0 0.0
  %2695 = vmatpush2.msra.mxu0 0.0
  %2696 = vmatprep.subr.mxu0 0.0
  %2697 = vmatpush2.msra.mxu0 0.0
  %2698 = vmatprep.subr.mxu0 0.0
  %2699 = vmatpush2.msra.mxu0 0.0
  %2700 = vmatprep.subr.mxu0 0.0
  %2701 = vmatpush2.msra.mxu0 0.0
  %2702 = vmatprep.mubr.f32.mxu0 0.0
  %2703 = vmatmul.mubr.f32.gmra.mxu0 %v212
  %v2704 = vpop.f32.mrf.mxu0
  %v2705 = vadd.f32 %v2630, %v2704
  %v2706 = vpop.f32.mrf.mxu0
  %2707 = vmatprep.mubr.f32.mxu0 0.0
  %2708 = vmatmul.mubr.f32.gmra.mxu0 %v215
  %v2709 = vpop.f32.mrf.mxu0
  %v2710 = vadd.f32 %v2631, %v2709
  %v2711 = vpop.f32.mrf.mxu0
  %2712 = vmatprep.mubr.f32.mxu0 0.0
  %2713 = vmatmul.mubr.f32.gmra.mxu0 %v218
  %v2714 = vpop.f32.mrf.mxu0
  %v2715 = vadd.f32 %v2632, %v2714
  %v2716 = vpop.f32.mrf.mxu0
  %2717 = vmatprep.mubr.f32.mxu0 0.0
  %2718 = vmatmul.mubr.f32.gmra.mxu0 %v221
  %v2719 = vpop.f32.mrf.mxu0
  %v2720 = vadd.f32 %v2633, %v2719
  %v2721 = vpop.f32.mrf.mxu0
  %2722 = vmatprep.mubr.f32.mxu0 0.0
  %2723 = vmatmul.mubr.f32.gmra.mxu0 %v224
  %v2724 = vpop.f32.mrf.mxu0
  %v2725 = vadd.f32 %v2634, %v2724
  %v2726 = vpop.f32.mrf.mxu0
  %2727 = vmatprep.mubr.f32.mxu0 0.0
  %2728 = vmatmul.mubr.f32.gmra.mxu0 %v227
  %v2729 = vpop.f32.mrf.mxu0
  %v2730 = vadd.f32 %v2635, %v2729
  %v2731 = vpop.f32.mrf.mxu0
  %2732 = vmatprep.mubr.f32.mxu0 0.0
  %2733 = vmatmul.mubr.f32.gmra.mxu0 %v230
  %v2734 = vpop.f32.mrf.mxu0
  %v2735 = vadd.f32 %v2636, %v2734
  %v2736 = vpop.f32.mrf.mxu0
  %2737 = vmatprep.mubr.f32.mxu0 0.0
  %2738 = vmatmul.mubr.f32.gmra.mxu0 %v233
  %v2739 = vpop.f32.mrf.mxu0
  %v2740 = vadd.f32 %v2637, %v2739
  %v2741 = vpop.f32.mrf.mxu0
  %2742 = vdwg.mxu0
  %2743 = vmatprep.subr.mxu0 0.0
  %2744 = vmatpush1.msra.mxu0 0.0
  %2745 = vmatprep.subr.mxu0 0.0
  %2746 = vmatpush1.msra.mxu0 0.0
  %2747 = vmatprep.subr.mxu0 0.0
  %2748 = vmatpush1.msra.mxu0 0.0
  %2749 = vmatprep.subr.mxu0 0.0
  %2750 = vmatpush1.msra.mxu0 0.0
  %2751 = vmatprep.subr.mxu0 0.0
  %2752 = vmatpush1.msra.mxu0 0.0
  %2753 = vmatprep.subr.mxu0 0.0
  %2754 = vmatpush1.msra.mxu0 0.0
  %2755 = vmatprep.subr.mxu0 0.0
  %2756 = vmatpush1.msra.mxu0 0.0
  %2757 = vmatprep.subr.mxu0 0.0
  %2758 = vmatpush1.msra.mxu0 0.0
  %2759 = vmatprep.subr.mxu0 0.0
  %2760 = vmatpush1.msra.mxu0 %v2740
  %2761 = vmatprep.subr.mxu0 0.0
  %2762 = vmatpush1.msra.mxu0 %v2735
  %2763 = vmatprep.subr.mxu0 0.0
  %2764 = vmatpush1.msra.mxu0 %v2730
  %2765 = vmatprep.subr.mxu0 0.0
  %2766 = vmatpush1.msra.mxu0 %v2725
  %2767 = vmatprep.subr.mxu0 0.0
  %2768 = vmatpush1.msra.mxu0 %v2720
  %2769 = vmatprep.subr.mxu0 0.0
  %2770 = vmatpush1.msra.mxu0 %v2715
  %2771 = vmatprep.subr.mxu0 0.0
  %2772 = vmatpush1.msra.mxu0 %v2710
  %2773 = vmatprep.subr.mxu0 0.0
  %2774 = vmatpush1.msra.mxu0 %v2705
  %2775 = vmatprep.subr.mxu0 0.0
  %2776 = vmatpush2.msra.mxu0 0.0
  %2777 = vmatprep.subr.mxu0 0.0
  %2778 = vmatpush2.msra.mxu0 0.0
  %2779 = vmatprep.subr.mxu0 0.0
  %2780 = vmatpush2.msra.mxu0 0.0
  %2781 = vmatprep.subr.mxu0 0.0
  %2782 = vmatpush2.msra.mxu0 0.0
  %2783 = vmatprep.subr.mxu0 0.0
  %2784 = vmatpush2.msra.mxu0 0.0
  %2785 = vmatprep.subr.mxu0 0.0
  %2786 = vmatpush2.msra.mxu0 0.0
  %2787 = vmatprep.subr.mxu0 0.0
  %2788 = vmatpush2.msra.mxu0 0.0
  %2789 = vmatprep.subr.mxu0 0.0
  %2790 = vmatpush2.msra.mxu0 0.0
  %2791 = vmatprep.subr.mxu0 0.0
  %2792 = vmatpush2.msra.mxu0 0.0
  %2793 = vmatprep.subr.mxu0 0.0
  %2794 = vmatpush2.msra.mxu0 0.0
  %2795 = vmatprep.subr.mxu0 0.0
  %2796 = vmatpush2.msra.mxu0 0.0
  %2797 = vmatprep.subr.mxu0 0.0
  %2798 = vmatpush2.msra.mxu0 0.0
  %2799 = vmatprep.subr.mxu0 0.0
  %2800 = vmatpush2.msra.mxu0 0.0
  %2801 = vmatprep.subr.mxu0 0.0
  %2802 = vmatpush2.msra.mxu0 0.0
  %2803 = vmatprep.subr.mxu0 0.0
  %2804 = vmatpush2.msra.mxu0 0.0
  %2805 = vmatprep.subr.mxu0 0.0
  %2806 = vmatpush2.msra.mxu0 0.0
  %2807 = vmatprep.mubr.f32.mxu0 0.0
  %2808 = vmatmul.mubr.f32.gmra.mxu0 %v212
  %v2809 = vpop.f32.mrf.mxu0
  %v2810 = vadd.f32 %v2630, %v2809
  %v2811 = vpop.f32.mrf.mxu0
  %2812 = vmatprep.mubr.f32.mxu0 0.0
  %2813 = vmatmul.mubr.f32.gmra.mxu0 %v215
  %v2814 = vpop.f32.mrf.mxu0
  %v2815 = vadd.f32 %v2631, %v2814
  %v2816 = vpop.f32.mrf.mxu0
  %2817 = vmatprep.mubr.f32.mxu0 0.0
  %2818 = vmatmul.mubr.f32.gmra.mxu0 %v218
  %v2819 = vpop.f32.mrf.mxu0
  %v2820 = vadd.f32 %v2632, %v2819
  %v2821 = vpop.f32.mrf.mxu0
  %2822 = vmatprep.mubr.f32.mxu0 0.0
  %2823 = vmatmul.mubr.f32.gmra.mxu0 %v221
  %v2824 = vpop.f32.mrf.mxu0
  %v2825 = vadd.f32 %v2633, %v2824
  %v2826 = vpop.f32.mrf.mxu0
  %2827 = vmatprep.mubr.f32.mxu0 0.0
  %2828 = vmatmul.mubr.f32.gmra.mxu0 %v224
  %v2829 = vpop.f32.mrf.mxu0
  %v2830 = vadd.f32 %v2634, %v2829
  %v2831 = vpop.f32.mrf.mxu0
  %2832 = vmatprep.mubr.f32.mxu0 0.0
  %2833 = vmatmul.mubr.f32.gmra.mxu0 %v227
  %v2834 = vpop.f32.mrf.mxu0
  %v2835 = vadd.f32 %v2635, %v2834
  %v2836 = vpop.f32.mrf.mxu0
  %2837 = vmatprep.mubr.f32.mxu0 0.0
  %2838 = vmatmul.mubr.f32.gmra.mxu0 %v230
  %v2839 = vpop.f32.mrf.mxu0
  %v2840 = vadd.f32 %v2636, %v2839
  %v2841 = vpop.f32.mrf.mxu0
  %2842 = vmatprep.mubr.f32.mxu0 0.0
  %2843 = vmatmul.mubr.f32.gmra.mxu0 %v233
  %v2844 = vpop.f32.mrf.mxu0
  %v2845 = vadd.f32 %v2637, %v2844
  %v2846 = vpop.f32.mrf.mxu0
  %2847 = vdwg.mxu0
  %2848 = vmatprep.subr.mxu0 0.0
  %2849 = vmatpush1.msra.mxu0 0.0
  %2850 = vmatprep.subr.mxu0 0.0
  %2851 = vmatpush1.msra.mxu0 0.0
  %2852 = vmatprep.subr.mxu0 0.0
  %2853 = vmatpush1.msra.mxu0 0.0
  %2854 = vmatprep.subr.mxu0 0.0
  %2855 = vmatpush1.msra.mxu0 0.0
  %2856 = vmatprep.subr.mxu0 0.0
  %2857 = vmatpush1.msra.mxu0 0.0
  %2858 = vmatprep.subr.mxu0 0.0
  %2859 = vmatpush1.msra.mxu0 0.0
  %2860 = vmatprep.subr.mxu0 0.0
  %2861 = vmatpush1.msra.mxu0 0.0
  %2862 = vmatprep.subr.mxu0 0.0
  %2863 = vmatpush1.msra.mxu0 0.0
  %2864 = vmatprep.subr.mxu0 0.0
  %2865 = vmatpush1.msra.mxu0 %v2845
  %2866 = vmatprep.subr.mxu0 0.0
  %2867 = vmatpush1.msra.mxu0 %v2840
  %2868 = vmatprep.subr.mxu0 0.0
  %2869 = vmatpush1.msra.mxu0 %v2835
  %2870 = vmatprep.subr.mxu0 0.0
  %2871 = vmatpush1.msra.mxu0 %v2830
  %2872 = vmatprep.subr.mxu0 0.0
  %2873 = vmatpush1.msra.mxu0 %v2825
  %2874 = vmatprep.subr.mxu0 0.0
  %2875 = vmatpush1.msra.mxu0 %v2820
  %2876 = vmatprep.subr.mxu0 0.0
  %2877 = vmatpush1.msra.mxu0 %v2815
  %2878 = vmatprep.subr.mxu0 0.0
  %2879 = vmatpush1.msra.mxu0 %v2810
  %2880 = vmatprep.subr.mxu0 0.0
  %2881 = vmatpush2.msra.mxu0 0.0
  %2882 = vmatprep.subr.mxu0 0.0
  %2883 = vmatpush2.msra.mxu0 0.0
  %2884 = vmatprep.subr.mxu0 0.0
  %2885 = vmatpush2.msra.mxu0 0.0
  %2886 = vmatprep.subr.mxu0 0.0
  %2887 = vmatpush2.msra.mxu0 0.0
  %2888 = vmatprep.subr.mxu0 0.0
  %2889 = vmatpush2.msra.mxu0 0.0
  %2890 = vmatprep.subr.mxu0 0.0
  %2891 = vmatpush2.msra.mxu0 0.0
  %2892 = vmatprep.subr.mxu0 0.0
  %2893 = vmatpush2.msra.mxu0 0.0
  %2894 = vmatprep.subr.mxu0 0.0
  %2895 = vmatpush2.msra.mxu0 0.0
  %2896 = vmatprep.subr.mxu0 0.0
  %2897 = vmatpush2.msra.mxu0 0.0
  %2898 = vmatprep.subr.mxu0 0.0
  %2899 = vmatpush2.msra.mxu0 0.0
  %2900 = vmatprep.subr.mxu0 0.0
  %2901 = vmatpush2.msra.mxu0 0.0
  %2902 = vmatprep.subr.mxu0 0.0
  %2903 = vmatpush2.msra.mxu0 0.0
  %2904 = vmatprep.subr.mxu0 0.0
  %2905 = vmatpush2.msra.mxu0 0.0
  %2906 = vmatprep.subr.mxu0 0.0
  %2907 = vmatpush2.msra.mxu0 0.0
  %2908 = vmatprep.subr.mxu0 0.0
  %2909 = vmatpush2.msra.mxu0 0.0
  %2910 = vmatprep.subr.mxu0 0.0
  %2911 = vmatpush2.msra.mxu0 0.0
  %2912 = vmatprep.mubr.f32.mxu0 0.0
  %2913 = vmatmul.mubr.f32.gmra.mxu0 %v212
  %v2914 = vpop.f32.mrf.mxu0
  %v2915 = vadd.f32 %v2630, %v2914
  %v2916 = vpop.f32.mrf.mxu0
  %2917 = vmatprep.mubr.f32.mxu0 0.0
  %2918 = vmatmul.mubr.f32.gmra.mxu0 %v215
  %v2919 = vpop.f32.mrf.mxu0
  %v2920 = vadd.f32 %v2631, %v2919
  %v2921 = vpop.f32.mrf.mxu0
  %2922 = vmatprep.mubr.f32.mxu0 0.0
  %2923 = vmatmul.mubr.f32.gmra.mxu0 %v218
  %v2924 = vpop.f32.mrf.mxu0
  %v2925 = vadd.f32 %v2632, %v2924
  %v2926 = vpop.f32.mrf.mxu0
  %2927 = vmatprep.mubr.f32.mxu0 0.0
  %2928 = vmatmul.mubr.f32.gmra.mxu0 %v221
  %v2929 = vpop.f32.mrf.mxu0
  %v2930 = vadd.f32 %v2633, %v2929
  %v2931 = vpop.f32.mrf.mxu0
  %2932 = vmatprep.mubr.f32.mxu0 0.0
  %2933 = vmatmul.mubr.f32.gmra.mxu0 %v224
  %v2934 = vpop.f32.mrf.mxu0
  %v2935 = vadd.f32 %v2634, %v2934
  %v2936 = vpop.f32.mrf.mxu0
  %2937 = vmatprep.mubr.f32.mxu0 0.0
  %2938 = vmatmul.mubr.f32.gmra.mxu0 %v227
  %v2939 = vpop.f32.mrf.mxu0
  %v2940 = vadd.f32 %v2635, %v2939
  %v2941 = vpop.f32.mrf.mxu0
  %2942 = vmatprep.mubr.f32.mxu0 0.0
  %2943 = vmatmul.mubr.f32.gmra.mxu0 %v230
  %v2944 = vpop.f32.mrf.mxu0
  %v2945 = vadd.f32 %v2636, %v2944
  %v2946 = vpop.f32.mrf.mxu0
  %2947 = vmatprep.mubr.f32.mxu0 0.0
  %2948 = vmatmul.mubr.f32.gmra.mxu0 %v233
  %v2949 = vpop.f32.mrf.mxu0
  %v2950 = vadd.f32 %v2637, %v2949
  %v2951 = vpop.f32.mrf.mxu0
  %2952 = vdwg.mxu0
  %2953 = vmatprep.subr.mxu0 0.0
  %2954 = vmatpush1.msra.mxu0 0.0
  %2955 = vmatprep.subr.mxu0 0.0
  %2956 = vmatpush1.msra.mxu0 0.0
  %2957 = vmatprep.subr.mxu0 0.0
  %2958 = vmatpush1.msra.mxu0 0.0
  %2959 = vmatprep.subr.mxu0 0.0
  %2960 = vmatpush1.msra.mxu0 0.0
  %2961 = vmatprep.subr.mxu0 0.0
  %2962 = vmatpush1.msra.mxu0 0.0
  %2963 = vmatprep.subr.mxu0 0.0
  %2964 = vmatpush1.msra.mxu0 0.0
  %2965 = vmatprep.subr.mxu0 0.0
  %2966 = vmatpush1.msra.mxu0 0.0
  %2967 = vmatprep.subr.mxu0 0.0
  %2968 = vmatpush1.msra.mxu0 0.0
  %2969 = vmatprep.subr.mxu0 0.0
  %2970 = vmatpush1.msra.mxu0 %v2950
  %2971 = vmatprep.subr.mxu0 0.0
  %2972 = vmatpush1.msra.mxu0 %v2945
  %2973 = vmatprep.subr.mxu0 0.0
  %2974 = vmatpush1.msra.mxu0 %v2940
  %2975 = vmatprep.subr.mxu0 0.0
  %2976 = vmatpush1.msra.mxu0 %v2935
  %2977 = vmatprep.subr.mxu0 0.0
  %2978 = vmatpush1.msra.mxu0 %v2930
  %2979 = vmatprep.subr.mxu0 0.0
  %2980 = vmatpush1.msra.mxu0 %v2925
  %2981 = vmatprep.subr.mxu0 0.0
  %2982 = vmatpush1.msra.mxu0 %v2920
  %2983 = vmatprep.subr.mxu0 0.0
  %2984 = vmatpush1.msra.mxu0 %v2915
  %2985 = vmatprep.subr.mxu0 0.0
  %2986 = vmatpush2.msra.mxu0 0.0
  %2987 = vmatprep.subr.mxu0 0.0
  %2988 = vmatpush2.msra.mxu0 0.0
  %2989 = vmatprep.subr.mxu0 0.0
  %2990 = vmatpush2.msra.mxu0 0.0
  %2991 = vmatprep.subr.mxu0 0.0
  %2992 = vmatpush2.msra.mxu0 0.0
  %2993 = vmatprep.subr.mxu0 0.0
  %2994 = vmatpush2.msra.mxu0 0.0
  %2995 = vmatprep.subr.mxu0 0.0
  %2996 = vmatpush2.msra.mxu0 0.0
  %2997 = vmatprep.subr.mxu0 0.0
  %2998 = vmatpush2.msra.mxu0 0.0
  %2999 = vmatprep.subr.mxu0 0.0
  %3000 = vmatpush2.msra.mxu0 0.0
  %3001 = vmatprep.subr.mxu0 0.0
  %3002 = vmatpush2.msra.mxu0 0.0
  %3003 = vmatprep.subr.mxu0 0.0
  %3004 = vmatpush2.msra.mxu0 0.0
  %3005 = vmatprep.subr.mxu0 0.0
  %3006 = vmatpush2.msra.mxu0 0.0
  %3007 = vmatprep.subr.mxu0 0.0
  %3008 = vmatpush2.msra.mxu0 0.0
  %3009 = vmatprep.subr.mxu0 0.0
  %3010 = vmatpush2.msra.mxu0 0.0
  %3011 = vmatprep.subr.mxu0 0.0
  %3012 = vmatpush2.msra.mxu0 0.0
  %3013 = vmatprep.subr.mxu0 0.0
  %3014 = vmatpush2.msra.mxu0 0.0
  %3015 = vmatprep.subr.mxu0 0.0
  %3016 = vmatpush2.msra.mxu0 0.0
  %3017 = vmatprep.mubr.f32.mxu0 0.0
  %3018 = vmatmul.mubr.f32.gmra.mxu0 %v212
  %v3019 = vpop.f32.mrf.mxu0
  %v3020 = vadd.f32 %v2630, %v3019
  %v3021 = vpop.f32.mrf.mxu0
  %3022 = vmatprep.mubr.f32.mxu0 0.0
  %3023 = vmatmul.mubr.f32.gmra.mxu0 %v215
  %v3024 = vpop.f32.mrf.mxu0
  %v3025 = vadd.f32 %v2631, %v3024
  %v3026 = vpop.f32.mrf.mxu0
  %3027 = vmatprep.mubr.f32.mxu0 0.0
  %3028 = vmatmul.mubr.f32.gmra.mxu0 %v218
  %v3029 = vpop.f32.mrf.mxu0
  %v3030 = vadd.f32 %v2632, %v3029
  %v3031 = vpop.f32.mrf.mxu0
  %3032 = vmatprep.mubr.f32.mxu0 0.0
  %3033 = vmatmul.mubr.f32.gmra.mxu0 %v221
  %v3034 = vpop.f32.mrf.mxu0
  %v3035 = vadd.f32 %v2633, %v3034
  %v3036 = vpop.f32.mrf.mxu0
  %3037 = vmatprep.mubr.f32.mxu0 0.0
  %3038 = vmatmul.mubr.f32.gmra.mxu0 %v224
  %v3039 = vpop.f32.mrf.mxu0
  %v3040 = vadd.f32 %v2634, %v3039
  %v3041 = vpop.f32.mrf.mxu0
  %3042 = vmatprep.mubr.f32.mxu0 0.0
  %3043 = vmatmul.mubr.f32.gmra.mxu0 %v227
  %v3044 = vpop.f32.mrf.mxu0
  %v3045 = vadd.f32 %v2635, %v3044
  %v3046 = vpop.f32.mrf.mxu0
  %3047 = vmatprep.mubr.f32.mxu0 0.0
  %3048 = vmatmul.mubr.f32.gmra.mxu0 %v230
  %v3049 = vpop.f32.mrf.mxu0
  %v3050 = vadd.f32 %v2636, %v3049
  %v3051 = vpop.f32.mrf.mxu0
  %3052 = vmatprep.mubr.f32.mxu0 0.0
  %3053 = vmatmul.mubr.f32.gmra.mxu0 %v233
  %v3054 = vpop.f32.mrf.mxu0
  %v3055 = vadd.f32 %v2637, %v3054
  %v3056 = vpop.f32.mrf.mxu0
  %3057 = vdwg.mxu0
  %3058 = vmatprep.subr.mxu0 0.0
  %3059 = vmatpush1.msra.mxu0 0.0
  %3060 = vmatprep.subr.mxu0 0.0
  %3061 = vmatpush1.msra.mxu0 0.0
  %3062 = vmatprep.subr.mxu0 0.0
  %3063 = vmatpush1.msra.mxu0 0.0
  %3064 = vmatprep.subr.mxu0 0.0
  %3065 = vmatpush1.msra.mxu0 0.0
  %3066 = vmatprep.subr.mxu0 0.0
  %3067 = vmatpush1.msra.mxu0 0.0
  %3068 = vmatprep.subr.mxu0 0.0
  %3069 = vmatpush1.msra.mxu0 0.0
  %3070 = vmatprep.subr.mxu0 0.0
  %3071 = vmatpush1.msra.mxu0 0.0
  %3072 = vmatprep.subr.mxu0 0.0
  %3073 = vmatpush1.msra.mxu0 0.0
  %3074 = vmatprep.subr.mxu0 0.0
  %3075 = vmatpush1.msra.mxu0 %v3055
  %3076 = vmatprep.subr.mxu0 0.0
  %3077 = vmatpush1.msra.mxu0 %v3050
  %3078 = vmatprep.subr.mxu0 0.0
  %3079 = vmatpush1.msra.mxu0 %v3045
  %3080 = vmatprep.subr.mxu0 0.0
  %3081 = vmatpush1.msra.mxu0 %v3040
  %3082 = vmatprep.subr.mxu0 0.0
  %3083 = vmatpush1.msra.mxu0 %v3035
  %3084 = vmatprep.subr.mxu0 0.0
  %3085 = vmatpush1.msra.mxu0 %v3030
  %3086 = vmatprep.subr.mxu0 0.0
  %3087 = vmatpush1.msra.mxu0 %v3025
  %3088 = vmatprep.subr.mxu0 0.0
  %3089 = vmatpush1.msra.mxu0 %v3020
  %3090 = vmatprep.subr.mxu0 0.0
  %3091 = vmatpush2.msra.mxu0 0.0
  %3092 = vmatprep.subr.mxu0 0.0
  %3093 = vmatpush2.msra.mxu0 0.0
  %3094 = vmatprep.subr.mxu0 0.0
  %3095 = vmatpush2.msra.mxu0 0.0
  %3096 = vmatprep.subr.mxu0 0.0
  %3097 = vmatpush2.msra.mxu0 0.0
  %3098 = vmatprep.subr.mxu0 0.0
  %3099 = vmatpush2.msra.mxu0 0.0
  %3100 = vmatprep.subr.mxu0 0.0
  %3101 = vmatpush2.msra.mxu0 0.0
  %3102 = vmatprep.subr.mxu0 0.0
  %3103 = vmatpush2.msra.mxu0 0.0
  %3104 = vmatprep.subr.mxu0 0.0
  %3105 = vmatpush2.msra.mxu0 0.0
  %3106 = vmatprep.subr.mxu0 0.0
  %3107 = vmatpush2.msra.mxu0 0.0
  %3108 = vmatprep.subr.mxu0 0.0
  %3109 = vmatpush2.msra.mxu0 0.0
  %3110 = vmatprep.subr.mxu0 0.0
  %3111 = vmatpush2.msra.mxu0 0.0
  %3112 = vmatprep.subr.mxu0 0.0
  %3113 = vmatpush2.msra.mxu0 0.0
  %3114 = vmatprep.subr.mxu0 0.0
  %3115 = vmatpush2.msra.mxu0 0.0
  %3116 = vmatprep.subr.mxu0 0.0
  %3117 = vmatpush2.msra.mxu0 0.0
  %3118 = vmatprep.subr.mxu0 0.0
  %3119 = vmatpush2.msra.mxu0 0.0
  %3120 = vmatprep.subr.mxu0 0.0
  %3121 = vmatpush2.msra.mxu0 0.0
  %3122 = vmatprep.mubr.f32.mxu0 0.0
  %3123 = vmatmul.mubr.f32.gmra.mxu0 %v212
  %v3124 = vpop.f32.mrf.mxu0
  %v3125 = vadd.f32 %v2630, %v3124
  %v3126 = vpop.f32.mrf.mxu0
  %3127 = vmatprep.mubr.f32.mxu0 0.0
  %3128 = vmatmul.mubr.f32.gmra.mxu0 %v215
  %v3129 = vpop.f32.mrf.mxu0
  %v3130 = vadd.f32 %v2631, %v3129
  %v3131 = vpop.f32.mrf.mxu0
  %3132 = vmatprep.mubr.f32.mxu0 0.0
  %3133 = vmatmul.mubr.f32.gmra.mxu0 %v218
  %v3134 = vpop.f32.mrf.mxu0
  %v3135 = vadd.f32 %v2632, %v3134
  %v3136 = vpop.f32.mrf.mxu0
  %3137 = vmatprep.mubr.f32.mxu0 0.0
  %3138 = vmatmul.mubr.f32.gmra.mxu0 %v221
  %v3139 = vpop.f32.mrf.mxu0
  %v3140 = vadd.f32 %v2633, %v3139
  %v3141 = vpop.f32.mrf.mxu0
  %3142 = vmatprep.mubr.f32.mxu0 0.0
  %3143 = vmatmul.mubr.f32.gmra.mxu0 %v224
  %v3144 = vpop.f32.mrf.mxu0
  %v3145 = vadd.f32 %v2634, %v3144
  %v3146 = vpop.f32.mrf.mxu0
  %3147 = vmatprep.mubr.f32.mxu0 0.0
  %3148 = vmatmul.mubr.f32.gmra.mxu0 %v227
  %v3149 = vpop.f32.mrf.mxu0
  %v3150 = vadd.f32 %v2635, %v3149
  %v3151 = vpop.f32.mrf.mxu0
  %3152 = vmatprep.mubr.f32.mxu0 0.0
  %3153 = vmatmul.mubr.f32.gmra.mxu0 %v230
  %v3154 = vpop.f32.mrf.mxu0
  %v3155 = vadd.f32 %v2636, %v3154
  %v3156 = vpop.f32.mrf.mxu0
  %3157 = vmatprep.mubr.f32.mxu0 0.0
  %3158 = vmatmul.mubr.f32.gmra.mxu0 %v233
  %v3159 = vpop.f32.mrf.mxu0
  %v3160 = vadd.f32 %v2637, %v3159
  %v3161 = vpop.f32.mrf.mxu0
  %3162 = vdwg.mxu0
  %3163 = vmatprep.subr.mxu0 0.0
  %3164 = vmatpush1.msra.mxu0 0.0
  %3165 = vmatprep.subr.mxu0 0.0
  %3166 = vmatpush1.msra.mxu0 0.0
  %3167 = vmatprep.subr.mxu0 0.0
  %3168 = vmatpush1.msra.mxu0 0.0
  %3169 = vmatprep.subr.mxu0 0.0
  %3170 = vmatpush1.msra.mxu0 0.0
  %3171 = vmatprep.subr.mxu0 0.0
  %3172 = vmatpush1.msra.mxu0 0.0
  %3173 = vmatprep.subr.mxu0 0.0
  %3174 = vmatpush1.msra.mxu0 0.0
  %3175 = vmatprep.subr.mxu0 0.0
  %3176 = vmatpush1.msra.mxu0 0.0
  %3177 = vmatprep.subr.mxu0 0.0
  %3178 = vmatpush1.msra.mxu0 0.0
  %3179 = vmatprep.subr.mxu0 0.0
  %3180 = vmatpush1.msra.mxu0 %v3160
  %3181 = vmatprep.subr.mxu0 0.0
  %3182 = vmatpush1.msra.mxu0 %v3155
  %3183 = vmatprep.subr.mxu0 0.0
  %3184 = vmatpush1.msra.mxu0 %v3150
  %3185 = vmatprep.subr.mxu0 0.0
  %3186 = vmatpush1.msra.mxu0 %v3145
  %3187 = vmatprep.subr.mxu0 0.0
  %3188 = vmatpush1.msra.mxu0 %v3140
  %3189 = vmatprep.subr.mxu0 0.0
  %3190 = vmatpush1.msra.mxu0 %v3135
  %3191 = vmatprep.subr.mxu0 0.0
  %3192 = vmatpush1.msra.mxu0 %v3130
  %3193 = vmatprep.subr.mxu0 0.0
  %3194 = vmatpush1.msra.mxu0 %v3125
  %3195 = vmatprep.subr.mxu0 0.0
  %3196 = vmatpush2.msra.mxu0 0.0
  %3197 = vmatprep.subr.mxu0 0.0
  %3198 = vmatpush2.msra.mxu0 0.0
  %3199 = vmatprep.subr.mxu0 0.0
  %3200 = vmatpush2.msra.mxu0 0.0
  %3201 = vmatprep.subr.mxu0 0.0
  %3202 = vmatpush2.msra.mxu0 0.0
  %3203 = vmatprep.subr.mxu0 0.0
  %3204 = vmatpush2.msra.mxu0 0.0
  %3205 = vmatprep.subr.mxu0 0.0
  %3206 = vmatpush2.msra.mxu0 0.0
  %3207 = vmatprep.subr.mxu0 0.0
  %3208 = vmatpush2.msra.mxu0 0.0
  %3209 = vmatprep.subr.mxu0 0.0
  %3210 = vmatpush2.msra.mxu0 0.0
  %3211 = vmatprep.subr.mxu0 0.0
  %3212 = vmatpush2.msra.mxu0 0.0
  %3213 = vmatprep.subr.mxu0 0.0
  %3214 = vmatpush2.msra.mxu0 0.0
  %3215 = vmatprep.subr.mxu0 0.0
  %3216 = vmatpush2.msra.mxu0 0.0
  %3217 = vmatprep.subr.mxu0 0.0
  %3218 = vmatpush2.msra.mxu0 0.0
  %3219 = vmatprep.subr.mxu0 0.0
  %3220 = vmatpush2.msra.mxu0 0.0
  %3221 = vmatprep.subr.mxu0 0.0
  %3222 = vmatpush2.msra.mxu0 0.0
  %3223 = vmatprep.subr.mxu0 0.0
  %3224 = vmatpush2.msra.mxu0 0.0
  %3225 = vmatprep.subr.mxu0 0.0
  %3226 = vmatpush2.msra.mxu0 0.0
  %3227 = vmatprep.mubr.f32.mxu0 0.0
  %3228 = vmatmul.mubr.f32.gmra.mxu0 %v212
  %v3229 = vpop.f32.mrf.mxu0
  %v3230 = vadd.f32 %v2630, %v3229
  %v3231 = vpop.f32.mrf.mxu0
  %3232 = vmatprep.mubr.f32.mxu0 0.0
  %3233 = vmatmul.mubr.f32.gmra.mxu0 %v215
  %v3234 = vpop.f32.mrf.mxu0
  %v3235 = vadd.f32 %v2631, %v3234
  %v3236 = vpop.f32.mrf.mxu0
  %3237 = vmatprep.mubr.f32.mxu0 0.0
  %3238 = vmatmul.mubr.f32.gmra.mxu0 %v218
  %v3239 = vpop.f32.mrf.mxu0
  %v3240 = vadd.f32 %v2632, %v3239
  %v3241 = vpop.f32.mrf.mxu0
  %3242 = vmatprep.mubr.f32.mxu0 0.0
  %3243 = vmatmul.mubr.f32.gmra.mxu0 %v221
  %v3244 = vpop.f32.mrf.mxu0
  %v3245 = vadd.f32 %v2633, %v3244
  %v3246 = vpop.f32.mrf.mxu0
  %3247 = vmatprep.mubr.f32.mxu0 0.0
  %3248 = vmatmul.mubr.f32.gmra.mxu0 %v224
  %v3249 = vpop.f32.mrf.mxu0
  %v3250 = vadd.f32 %v2634, %v3249
  %v3251 = vpop.f32.mrf.mxu0
  %3252 = vmatprep.mubr.f32.mxu0 0.0
  %3253 = vmatmul.mubr.f32.gmra.mxu0 %v227
  %v3254 = vpop.f32.mrf.mxu0
  %v3255 = vadd.f32 %v2635, %v3254
  %v3256 = vpop.f32.mrf.mxu0
  %3257 = vmatprep.mubr.f32.mxu0 0.0
  %3258 = vmatmul.mubr.f32.gmra.mxu0 %v230
  %v3259 = vpop.f32.mrf.mxu0
  %v3260 = vadd.f32 %v2636, %v3259
  %v3261 = vpop.f32.mrf.mxu0
  %3262 = vmatprep.mubr.f32.mxu0 0.0
  %3263 = vmatmul.mubr.f32.gmra.mxu0 %v233
  %v3264 = vpop.f32.mrf.mxu0
  %v3265 = vadd.f32 %v2637, %v3264
  %v3266 = vpop.f32.mrf.mxu0
  %3267 = vdwg.mxu0
  %3268 = vmatprep.subr.mxu0 0.0
  %3269 = vmatpush1.msra.mxu0 0.0
  %3270 = vmatprep.subr.mxu0 0.0
  %3271 = vmatpush1.msra.mxu0 0.0
  %3272 = vmatprep.subr.mxu0 0.0
  %3273 = vmatpush1.msra.mxu0 0.0
  %3274 = vmatprep.subr.mxu0 0.0
  %3275 = vmatpush1.msra.mxu0 0.0
  %3276 = vmatprep.subr.mxu0 0.0
  %3277 = vmatpush1.msra.mxu0 0.0
  %3278 = vmatprep.subr.mxu0 0.0
  %3279 = vmatpush1.msra.mxu0 0.0
  %3280 = vmatprep.subr.mxu0 0.0
  %3281 = vmatpush1.msra.mxu0 0.0
  %3282 = vmatprep.subr.mxu0 0.0
  %3283 = vmatpush1.msra.mxu0 0.0
  %3284 = vmatprep.subr.mxu0 0.0
  %3285 = vmatpush1.msra.mxu0 %v3265
  %3286 = vmatprep.subr.mxu0 0.0
  %3287 = vmatpush1.msra.mxu0 %v3260
  %3288 = vmatprep.subr.mxu0 0.0
  %3289 = vmatpush1.msra.mxu0 %v3255
  %3290 = vmatprep.subr.mxu0 0.0
  %3291 = vmatpush1.msra.mxu0 %v3250
  %3292 = vmatprep.subr.mxu0 0.0
  %3293 = vmatpush1.msra.mxu0 %v3245
  %3294 = vmatprep.subr.mxu0 0.0
  %3295 = vmatpush1.msra.mxu0 %v3240
  %3296 = vmatprep.subr.mxu0 0.0
  %3297 = vmatpush1.msra.mxu0 %v3235
  %3298 = vmatprep.subr.mxu0 0.0
  %3299 = vmatpush1.msra.mxu0 %v3230
  %3300 = vmatprep.subr.mxu0 0.0
  %3301 = vmatpush2.msra.mxu0 0.0
  %3302 = vmatprep.subr.mxu0 0.0
  %3303 = vmatpush2.msra.mxu0 0.0
  %3304 = vmatprep.subr.mxu0 0.0
  %3305 = vmatpush2.msra.mxu0 0.0
  %3306 = vmatprep.subr.mxu0 0.0
  %3307 = vmatpush2.msra.mxu0 0.0
  %3308 = vmatprep.subr.mxu0 0.0
  %3309 = vmatpush2.msra.mxu0 0.0
  %3310 = vmatprep.subr.mxu0 0.0
  %3311 = vmatpush2.msra.mxu0 0.0
  %3312 = vmatprep.subr.mxu0 0.0
  %3313 = vmatpush2.msra.mxu0 0.0
  %3314 = vmatprep.subr.mxu0 0.0
  %3315 = vmatpush2.msra.mxu0 0.0
  %3316 = vmatprep.subr.mxu0 0.0
  %3317 = vmatpush2.msra.mxu0 0.0
  %3318 = vmatprep.subr.mxu0 0.0
  %3319 = vmatpush2.msra.mxu0 0.0
  %3320 = vmatprep.subr.mxu0 0.0
  %3321 = vmatpush2.msra.mxu0 0.0
  %3322 = vmatprep.subr.mxu0 0.0
  %3323 = vmatpush2.msra.mxu0 0.0
  %3324 = vmatprep.subr.mxu0 0.0
  %3325 = vmatpush2.msra.mxu0 0.0
  %3326 = vmatprep.subr.mxu0 0.0
  %3327 = vmatpush2.msra.mxu0 0.0
  %3328 = vmatprep.subr.mxu0 0.0
  %3329 = vmatpush2.msra.mxu0 0.0
  %3330 = vmatprep.subr.mxu0 0.0
  %3331 = vmatpush2.msra.mxu0 0.0
  %3332 = vmatprep.mubr.f32.mxu0 0.0
  %3333 = vmatmul.mubr.f32.gmra.mxu0 %v212
  %v3334 = vpop.f32.mrf.mxu0
  %v3335 = vadd.f32 %v2630, %v3334
  %v3336 = vpop.f32.mrf.mxu0
  %3337 = vmatprep.mubr.f32.mxu0 0.0
  %3338 = vmatmul.mubr.f32.gmra.mxu0 %v215
  %v3339 = vpop.f32.mrf.mxu0
  %v3340 = vadd.f32 %v2631, %v3339
  %v3341 = vpop.f32.mrf.mxu0
  %3342 = vmatprep.mubr.f32.mxu0 0.0
  %3343 = vmatmul.mubr.f32.gmra.mxu0 %v218
  %v3344 = vpop.f32.mrf.mxu0
  %v3345 = vadd.f32 %v2632, %v3344
  %v3346 = vpop.f32.mrf.mxu0
  %3347 = vmatprep.mubr.f32.mxu0 0.0
  %3348 = vmatmul.mubr.f32.gmra.mxu0 %v221
  %v3349 = vpop.f32.mrf.mxu0
  %v3350 = vadd.f32 %v2633, %v3349
  %v3351 = vpop.f32.mrf.mxu0
  %3352 = vmatprep.mubr.f32.mxu0 0.0
  %3353 = vmatmul.mubr.f32.gmra.mxu0 %v224
  %v3354 = vpop.f32.mrf.mxu0
  %v3355 = vadd.f32 %v2634, %v3354
  %v3356 = vpop.f32.mrf.mxu0
  %3357 = vmatprep.mubr.f32.mxu0 0.0
  %3358 = vmatmul.mubr.f32.gmra.mxu0 %v227
  %v3359 = vpop.f32.mrf.mxu0
  %v3360 = vadd.f32 %v2635, %v3359
  %v3361 = vpop.f32.mrf.mxu0
  %3362 = vmatprep.mubr.f32.mxu0 0.0
  %3363 = vmatmul.mubr.f32.gmra.mxu0 %v230
  %v3364 = vpop.f32.mrf.mxu0
  %v3365 = vadd.f32 %v2636, %v3364
  %v3366 = vpop.f32.mrf.mxu0
  %3367 = vmatprep.mubr.f32.mxu0 0.0
  %3368 = vmatmul.mubr.f32.gmra.mxu0 %v233
  %v3369 = vpop.f32.mrf.mxu0
  %v3370 = vadd.f32 %v2637, %v3369
  %v3371 = vpop.f32.mrf.mxu0
  %3372 = vdwg.mxu0
  %3373 = vmatprep.subr.mxu0 0.0
  %3374 = vmatpush1.msra.mxu0 0.0
  %3375 = vmatprep.subr.mxu0 0.0
  %3376 = vmatpush1.msra.mxu0 0.0
  %3377 = vmatprep.subr.mxu0 0.0
  %3378 = vmatpush1.msra.mxu0 0.0
  %3379 = vmatprep.subr.mxu0 0.0
  %3380 = vmatpush1.msra.mxu0 0.0
  %3381 = vmatprep.subr.mxu0 0.0
  %3382 = vmatpush1.msra.mxu0 0.0
  %3383 = vmatprep.subr.mxu0 0.0
  %3384 = vmatpush1.msra.mxu0 0.0
  %3385 = vmatprep.subr.mxu0 0.0
  %3386 = vmatpush1.msra.mxu0 0.0
  %3387 = vmatprep.subr.mxu0 0.0
  %3388 = vmatpush1.msra.mxu0 0.0
  %3389 = vmatprep.subr.mxu0 0.0
  %3390 = vmatpush1.msra.mxu0 %v3370
  %3391 = vmatprep.subr.mxu0 0.0
  %3392 = vmatpush1.msra.mxu0 %v3365
  %3393 = vmatprep.subr.mxu0 0.0
  %3394 = vmatpush1.msra.mxu0 %v3360
  %3395 = vmatprep.subr.mxu0 0.0
  %3396 = vmatpush1.msra.mxu0 %v3355
  %3397 = vmatprep.subr.mxu0 0.0
  %3398 = vmatpush1.msra.mxu0 %v3350
  %3399 = vmatprep.subr.mxu0 0.0
  %3400 = vmatpush1.msra.mxu0 %v3345
  %3401 = vmatprep.subr.mxu0 0.0
  %3402 = vmatpush1.msra.mxu0 %v3340
  %3403 = vmatprep.subr.mxu0 0.0
  %3404 = vmatpush1.msra.mxu0 %v3335
  %3405 = vmatprep.subr.mxu0 0.0
  %3406 = vmatpush2.msra.mxu0 0.0
  %3407 = vmatprep.subr.mxu0 0.0
  %3408 = vmatpush2.msra.mxu0 0.0
  %3409 = vmatprep.subr.mxu0 0.0
  %3410 = vmatpush2.msra.mxu0 0.0
  %3411 = vmatprep.subr.mxu0 0.0
  %3412 = vmatpush2.msra.mxu0 0.0
  %3413 = vmatprep.subr.mxu0 0.0
  %3414 = vmatpush2.msra.mxu0 0.0
  %3415 = vmatprep.subr.mxu0 0.0
  %3416 = vmatpush2.msra.mxu0 0.0
  %3417 = vmatprep.subr.mxu0 0.0
  %3418 = vmatpush2.msra.mxu0 0.0
  %3419 = vmatprep.subr.mxu0 0.0
  %3420 = vmatpush2.msra.mxu0 0.0
  %3421 = vmatprep.subr.mxu0 0.0
  %3422 = vmatpush2.msra.mxu0 0.0
  %3423 = vmatprep.subr.mxu0 0.0
  %3424 = vmatpush2.msra.mxu0 0.0
  %3425 = vmatprep.subr.mxu0 0.0
  %3426 = vmatpush2.msra.mxu0 0.0
  %3427 = vmatprep.subr.mxu0 0.0
  %3428 = vmatpush2.msra.mxu0 0.0
  %3429 = vmatprep.subr.mxu0 0.0
  %3430 = vmatpush2.msra.mxu0 0.0
  %3431 = vmatprep.subr.mxu0 0.0
  %3432 = vmatpush2.msra.mxu0 0.0
  %3433 = vmatprep.subr.mxu0 0.0
  %3434 = vmatpush2.msra.mxu0 0.0
  %3435 = vmatprep.subr.mxu0 0.0
  %3436 = vmatpush2.msra.mxu0 0.0
  %3437 = vmatprep.mubr.f32.mxu0 0.0
  %3438 = vmatmul.mubr.f32.gmra.mxu0 %v212
  %v3439 = vpop.f32.mrf.mxu0
  %v3440 = vadd.f32 %v2630, %v3439
  %v3441 = vpop.f32.mrf.mxu0
  %3442 = vmatprep.mubr.f32.mxu0 0.0
  %3443 = vmatmul.mubr.f32.gmra.mxu0 %v215
  %v3444 = vpop.f32.mrf.mxu0
  %v3445 = vadd.f32 %v2631, %v3444
  %v3446 = vpop.f32.mrf.mxu0
  %3447 = vmatprep.mubr.f32.mxu0 0.0
  %3448 = vmatmul.mubr.f32.gmra.mxu0 %v218
  %v3449 = vpop.f32.mrf.mxu0
  %v3450 = vadd.f32 %v2632, %v3449
  %v3451 = vpop.f32.mrf.mxu0
  %3452 = vmatprep.mubr.f32.mxu0 0.0
  %3453 = vmatmul.mubr.f32.gmra.mxu0 %v221
  %v3454 = vpop.f32.mrf.mxu0
  %v3455 = vadd.f32 %v2633, %v3454
  %v3456 = vpop.f32.mrf.mxu0
  %3457 = vmatprep.mubr.f32.mxu0 0.0
  %3458 = vmatmul.mubr.f32.gmra.mxu0 %v224
  %v3459 = vpop.f32.mrf.mxu0
  %v3460 = vadd.f32 %v2634, %v3459
  %v3461 = vpop.f32.mrf.mxu0
  %3462 = vmatprep.mubr.f32.mxu0 0.0
  %3463 = vmatmul.mubr.f32.gmra.mxu0 %v227
  %v3464 = vpop.f32.mrf.mxu0
  %v3465 = vadd.f32 %v2635, %v3464
  %v3466 = vpop.f32.mrf.mxu0
  %3467 = vmatprep.mubr.f32.mxu0 0.0
  %3468 = vmatmul.mubr.f32.gmra.mxu0 %v230
  %v3469 = vpop.f32.mrf.mxu0
  %v3470 = vadd.f32 %v2636, %v3469
  %v3471 = vpop.f32.mrf.mxu0
  %3472 = vmatprep.mubr.f32.mxu0 0.0
  %3473 = vmatmul.mubr.f32.gmra.mxu0 %v233
  %v3474 = vpop.f32.mrf.mxu0
  %v3475 = vadd.f32 %v2637, %v3474
  %v3476 = vpop.f32.mrf.mxu0
  %3477 = vdwg.mxu0
  %3478 = vmatprep.subr.mxu0 0.0
  %3479 = vmatpush1.msra.mxu0 0.0
  %3480 = vmatprep.subr.mxu0 0.0
  %3481 = vmatpush1.msra.mxu0 0.0
  %3482 = vmatprep.subr.mxu0 0.0
  %3483 = vmatpush1.msra.mxu0 0.0
  %3484 = vmatprep.subr.mxu0 0.0
  %3485 = vmatpush1.msra.mxu0 0.0
  %3486 = vmatprep.subr.mxu0 0.0
  %3487 = vmatpush1.msra.mxu0 0.0
  %3488 = vmatprep.subr.mxu0 0.0
  %3489 = vmatpush1.msra.mxu0 0.0
  %3490 = vmatprep.subr.mxu0 0.0
  %3491 = vmatpush1.msra.mxu0 0.0
  %3492 = vmatprep.subr.mxu0 0.0
  %3493 = vmatpush1.msra.mxu0 0.0
  %3494 = vmatprep.subr.mxu0 0.0
  %3495 = vmatpush1.msra.mxu0 %v3475
  %3496 = vmatprep.subr.mxu0 0.0
  %3497 = vmatpush1.msra.mxu0 %v3470
  %3498 = vmatprep.subr.mxu0 0.0
  %3499 = vmatpush1.msra.mxu0 %v3465
  %3500 = vmatprep.subr.mxu0 0.0
  %3501 = vmatpush1.msra.mxu0 %v3460
  %3502 = vmatprep.subr.mxu0 0.0
  %3503 = vmatpush1.msra.mxu0 %v3455
  %3504 = vmatprep.subr.mxu0 0.0
  %3505 = vmatpush1.msra.mxu0 %v3450
  %3506 = vmatprep.subr.mxu0 0.0
  %3507 = vmatpush1.msra.mxu0 %v3445
  %3508 = vmatprep.subr.mxu0 0.0
  %3509 = vmatpush1.msra.mxu0 %v3440
  %3510 = vmatprep.subr.mxu0 0.0
  %3511 = vmatpush2.msra.mxu0 0.0
  %3512 = vmatprep.subr.mxu0 0.0
  %3513 = vmatpush2.msra.mxu0 0.0
  %3514 = vmatprep.subr.mxu0 0.0
  %3515 = vmatpush2.msra.mxu0 0.0
  %3516 = vmatprep.subr.mxu0 0.0
  %3517 = vmatpush2.msra.mxu0 0.0
  %3518 = vmatprep.subr.mxu0 0.0
  %3519 = vmatpush2.msra.mxu0 0.0
  %3520 = vmatprep.subr.mxu0 0.0
  %3521 = vmatpush2.msra.mxu0 0.0
  %3522 = vmatprep.subr.mxu0 0.0
  %3523 = vmatpush2.msra.mxu0 0.0
  %3524 = vmatprep.subr.mxu0 0.0
  %3525 = vmatpush2.msra.mxu0 0.0
  %3526 = vmatprep.subr.mxu0 0.0
  %3527 = vmatpush2.msra.mxu0 0.0
  %3528 = vmatprep.subr.mxu0 0.0
  %3529 = vmatpush2.msra.mxu0 0.0
  %3530 = vmatprep.subr.mxu0 0.0
  %3531 = vmatpush2.msra.mxu0 0.0
  %3532 = vmatprep.subr.mxu0 0.0
  %3533 = vmatpush2.msra.mxu0 0.0
  %3534 = vmatprep.subr.mxu0 0.0
  %3535 = vmatpush2.msra.mxu0 0.0
  %3536 = vmatprep.subr.mxu0 0.0
  %3537 = vmatpush2.msra.mxu0 0.0
  %3538 = vmatprep.subr.mxu0 0.0
  %3539 = vmatpush2.msra.mxu0 0.0
  %3540 = vmatprep.subr.mxu0 0.0
  %3541 = vmatpush2.msra.mxu0 0.0
  %3542 = vmatprep.mubr.f32.mxu0 0.0
  %3543 = vmatmul.mubr.f32.gmra.mxu0 %v212
  %v3544 = vpop.f32.mrf.mxu0
  %v3545 = vadd.f32 %v2630, %v3544
  %v3546 = vpop.f32.mrf.mxu0
  %3547 = vmatprep.mubr.f32.mxu0 0.0
  %3548 = vmatmul.mubr.f32.gmra.mxu0 %v215
  %v3549 = vpop.f32.mrf.mxu0
  %v3550 = vadd.f32 %v2631, %v3549
  %v3551 = vpop.f32.mrf.mxu0
  %3552 = vmatprep.mubr.f32.mxu0 0.0
  %3553 = vmatmul.mubr.f32.gmra.mxu0 %v218
  %v3554 = vpop.f32.mrf.mxu0
  %v3555 = vadd.f32 %v2632, %v3554
  %v3556 = vpop.f32.mrf.mxu0
  %3557 = vmatprep.mubr.f32.mxu0 0.0
  %3558 = vmatmul.mubr.f32.gmra.mxu0 %v221
  %v3559 = vpop.f32.mrf.mxu0
  %v3560 = vadd.f32 %v2633, %v3559
  %v3561 = vpop.f32.mrf.mxu0
  %3562 = vmatprep.mubr.f32.mxu0 0.0
  %3563 = vmatmul.mubr.f32.gmra.mxu0 %v224
  %v3564 = vpop.f32.mrf.mxu0
  %v3565 = vadd.f32 %v2634, %v3564
  %v3566 = vpop.f32.mrf.mxu0
  %3567 = vmatprep.mubr.f32.mxu0 0.0
  %3568 = vmatmul.mubr.f32.gmra.mxu0 %v227
  %v3569 = vpop.f32.mrf.mxu0
  %v3570 = vadd.f32 %v2635, %v3569
  %v3571 = vpop.f32.mrf.mxu0
  %3572 = vmatprep.mubr.f32.mxu0 0.0
  %3573 = vmatmul.mubr.f32.gmra.mxu0 %v230
  %v3574 = vpop.f32.mrf.mxu0
  %v3575 = vadd.f32 %v2636, %v3574
  %v3576 = vpop.f32.mrf.mxu0
  %3577 = vmatprep.mubr.f32.mxu0 0.0
  %3578 = vmatmul.mubr.f32.gmra.mxu0 %v233
  %v3579 = vpop.f32.mrf.mxu0
  %v3580 = vadd.f32 %v2637, %v3579
  %v3581 = vpop.f32.mrf.mxu0
  %3582 = vdwg.mxu0
  %3583 = vmatprep.subr.mxu0 0.0
  %3584 = vmatpush1.msra.mxu0 0.0
  %3585 = vmatprep.subr.mxu0 0.0
  %3586 = vmatpush1.msra.mxu0 0.0
  %3587 = vmatprep.subr.mxu0 0.0
  %3588 = vmatpush1.msra.mxu0 0.0
  %3589 = vmatprep.subr.mxu0 0.0
  %3590 = vmatpush1.msra.mxu0 0.0
  %3591 = vmatprep.subr.mxu0 0.0
  %3592 = vmatpush1.msra.mxu0 0.0
  %3593 = vmatprep.subr.mxu0 0.0
  %3594 = vmatpush1.msra.mxu0 0.0
  %3595 = vmatprep.subr.mxu0 0.0
  %3596 = vmatpush1.msra.mxu0 0.0
  %3597 = vmatprep.subr.mxu0 0.0
  %3598 = vmatpush1.msra.mxu0 0.0
  %3599 = vmatprep.subr.mxu0 0.0
  %3600 = vmatpush1.msra.mxu0 %v3580
  %3601 = vmatprep.subr.mxu0 0.0
  %3602 = vmatpush1.msra.mxu0 %v3575
  %3603 = vmatprep.subr.mxu0 0.0
  %3604 = vmatpush1.msra.mxu0 %v3570
  %3605 = vmatprep.subr.mxu0 0.0
  %3606 = vmatpush1.msra.mxu0 %v3565
  %3607 = vmatprep.subr.mxu0 0.0
  %3608 = vmatpush1.msra.mxu0 %v3560
  %3609 = vmatprep.subr.mxu0 0.0
  %3610 = vmatpush1.msra.mxu0 %v3555
  %3611 = vmatprep.subr.mxu0 0.0
  %3612 = vmatpush1.msra.mxu0 %v3550
  %3613 = vmatprep.subr.mxu0 0.0
  %3614 = vmatpush1.msra.mxu0 %v3545
  %3615 = vmatprep.subr.mxu0 0.0
  %3616 = vmatpush2.msra.mxu0 0.0
  %3617 = vmatprep.subr.mxu0 0.0
  %3618 = vmatpush2.msra.mxu0 0.0
  %3619 = vmatprep.subr.mxu0 0.0
  %3620 = vmatpush2.msra.mxu0 0.0
  %3621 = vmatprep.subr.mxu0 0.0
  %3622 = vmatpush2.msra.mxu0 0.0
  %3623 = vmatprep.subr.mxu0 0.0
  %3624 = vmatpush2.msra.mxu0 0.0
  %3625 = vmatprep.subr.mxu0 0.0
  %3626 = vmatpush2.msra.mxu0 0.0
  %3627 = vmatprep.subr.mxu0 0.0
  %3628 = vmatpush2.msra.mxu0 0.0
  %3629 = vmatprep.subr.mxu0 0.0
  %3630 = vmatpush2.msra.mxu0 0.0
  %3631 = vmatprep.subr.mxu0 0.0
  %3632 = vmatpush2.msra.mxu0 0.0
  %3633 = vmatprep.subr.mxu0 0.0
  %3634 = vmatpush2.msra.mxu0 0.0
  %3635 = vmatprep.subr.mxu0 0.0
  %3636 = vmatpush2.msra.mxu0 0.0
  %3637 = vmatprep.subr.mxu0 0.0
  %3638 = vmatpush2.msra.mxu0 0.0
  %3639 = vmatprep.subr.mxu0 0.0
  %3640 = vmatpush2.msra.mxu0 0.0
  %3641 = vmatprep.subr.mxu0 0.0
  %3642 = vmatpush2.msra.mxu0 0.0
  %3643 = vmatprep.subr.mxu0 0.0
  %3644 = vmatpush2.msra.mxu0 0.0
  %3645 = vmatprep.subr.mxu0 0.0
  %3646 = vmatpush2.msra.mxu0 0.0
  %3647 = vmatprep.mubr.f32.mxu0 0.0
  %3648 = vmatmul.mubr.f32.gmra.mxu0 %v212
  %v3649 = vpop.f32.mrf.mxu0
  %v3650 = vadd.f32 %v2630, %v3649
  %v3651 = vpop.f32.mrf.mxu0
  %3652 = vmatprep.mubr.f32.mxu0 0.0
  %3653 = vmatmul.mubr.f32.gmra.mxu0 %v215
  %v3654 = vpop.f32.mrf.mxu0
  %v3655 = vadd.f32 %v2631, %v3654
  %v3656 = vpop.f32.mrf.mxu0
  %3657 = vmatprep.mubr.f32.mxu0 0.0
  %3658 = vmatmul.mubr.f32.gmra.mxu0 %v218
  %v3659 = vpop.f32.mrf.mxu0
  %v3660 = vadd.f32 %v2632, %v3659
  %v3661 = vpop.f32.mrf.mxu0
  %3662 = vmatprep.mubr.f32.mxu0 0.0
  %3663 = vmatmul.mubr.f32.gmra.mxu0 %v221
  %v3664 = vpop.f32.mrf.mxu0
  %v3665 = vadd.f32 %v2633, %v3664
  %v3666 = vpop.f32.mrf.mxu0
  %3667 = vmatprep.mubr.f32.mxu0 0.0
  %3668 = vmatmul.mubr.f32.gmra.mxu0 %v224
  %v3669 = vpop.f32.mrf.mxu0
  %v3670 = vadd.f32 %v2634, %v3669
  %v3671 = vpop.f32.mrf.mxu0
  %3672 = vmatprep.mubr.f32.mxu0 0.0
  %3673 = vmatmul.mubr.f32.gmra.mxu0 %v227
  %v3674 = vpop.f32.mrf.mxu0
  %v3675 = vadd.f32 %v2635, %v3674
  %v3676 = vpop.f32.mrf.mxu0
  %3677 = vmatprep.mubr.f32.mxu0 0.0
  %3678 = vmatmul.mubr.f32.gmra.mxu0 %v230
  %v3679 = vpop.f32.mrf.mxu0
  %v3680 = vadd.f32 %v2636, %v3679
  %v3681 = vpop.f32.mrf.mxu0
  %3682 = vmatprep.mubr.f32.mxu0 0.0
  %3683 = vmatmul.mubr.f32.gmra.mxu0 %v233
  %v3684 = vpop.f32.mrf.mxu0
  %v3685 = vadd.f32 %v2637, %v3684
  %v3686 = vpop.f32.mrf.mxu0
  %3687 = vdwg.mxu0
  %vm3688 = vcmask 64512
  %v3689 = vsel %vm3688, %v3650, -inf
  %3690 = vmax.xlane.f32.xlu0 %v3689
  %v3691 = vpop.xlane.xlu0 %3690
  %v3692 = vsel %vm3688, %v3655, -inf
  %3693 = vmax.xlane.f32.xlu0 %v3692
  %v3694 = vpop.xlane.xlu0 %3693
  %v3695 = vsel %vm3688, %v3660, -inf
  %3696 = vmax.xlane.f32.xlu0 %v3695
  %v3697 = vpop.xlane.xlu0 %3696
  %v3698 = vsel %vm3688, %v3665, -inf
  %3699 = vmax.xlane.f32.xlu0 %v3698
  %v3700 = vpop.xlane.xlu0 %3699
  %v3701 = vsel %vm3688, %v3670, -inf
  %3702 = vmax.xlane.f32.xlu0 %v3701
  %v3703 = vpop.xlane.xlu0 %3702
  %v3704 = vsel %vm3688, %v3675, -inf
  %3705 = vmax.xlane.f32.xlu0 %v3704
  %v3706 = vpop.xlane.xlu0 %3705
  %v3707 = vsel %vm3688, %v3680, -inf
  %3708 = vmax.xlane.f32.xlu0 %v3707
  %v3709 = vpop.xlane.xlu0 %3708
  %v3710 = vsel %vm3688, %v3685, -inf
  %3711 = vmax.xlane.f32.xlu0 %v3710
  %v3712 = vpop.xlane.xlu0 %3711
  %v3713 = vsub.f32 %v3650, %v3691
  %v3714 = vsub.f32 %v3655, %v3694
  %v3715 = vsub.f32 %v3660, %v3697
  %v3716 = vsub.f32 %v3665, %v3700
  %v3717 = vsub.f32 %v3670, %v3703
  %v3718 = vsub.f32 %v3675, %v3706
  %v3719 = vsub.f32 %v3680, %v3709
  %v3720 = vsub.f32 %v3685, %v3712
  %v3721 = vmul.f32 %v3713, 1.442695
  %v3722 = vpow.pop %v3721
  %v3723 = vmul.f32 %v3714, 1.442695
  %v3724 = vpow.pop %v3723
  %v3725 = vmul.f32 %v3715, 1.442695
  %v3726 = vpow.pop %v3725
  %v3727 = vmul.f32 %v3716, 1.442695
  %v3728 = vpow.pop %v3727
  %v3729 = vmul.f32 %v3717, 1.442695
  %v3730 = vpow.pop %v3729
  %v3731 = vmul.f32 %v3718, 1.442695
  %v3732 = vpow.pop %v3731
  %v3733 = vmul.f32 %v3719, 1.442695
  %v3734 = vpow.pop %v3733
  %v3735 = vmul.f32 %v3720, 1.442695
  %v3736 = vpow.pop %v3735
  %v3737 = vsel %vm3688, %v3722, 0.0
  %3738 = vadd.xlane.f32.xlu0 %v3737
  %v3739 = vpop.xlane.xlu0 %3738
  %v3740 = vsel %vm3688, %v3724, 0.0
  %3741 = vadd.xlane.f32.xlu0 %v3740
  %v3742 = vpop.xlane.xlu0 %3741
  %v3743 = vsel %vm3688, %v3726, 0.0
  %3744 = vadd.xlane.f32.xlu0 %v3743
  %v3745 = vpop.xlane.xlu0 %3744
  %v3746 = vsel %vm3688, %v3728, 0.0
  %3747 = vadd.xlane.f32.xlu0 %v3746
  %v3748 = vpop.xlane.xlu0 %3747
  %v3749 = vsel %vm3688, %v3730, 0.0
  %3750 = vadd.xlane.f32.xlu0 %v3749
  %v3751 = vpop.xlane.xlu0 %3750
  %v3752 = vsel %vm3688, %v3732, 0.0
  %3753 = vadd.xlane.f32.xlu0 %v3752
  %v3754 = vpop.xlane.xlu0 %3753
  %v3755 = vsel %vm3688, %v3734, 0.0
  %3756 = vadd.xlane.f32.xlu0 %v3755
  %v3757 = vpop.xlane.xlu0 %3756
  %v3758 = vsel %vm3688, %v3736, 0.0
  %3759 = vadd.xlane.f32.xlu0 %v3758
  %v3760 = vpop.xlane.xlu0 %3759
  %v3761 = vlog2.pop %v3739
  %v3762 = vmul.f32 %v3761, 0.6931472
  %v3763 = vlog2.pop %v3742
  %v3764 = vmul.f32 %v3763, 0.6931472
  %v3765 = vlog2.pop %v3745
  %v3766 = vmul.f32 %v3765, 0.6931472
  %v3767 = vlog2.pop %v3748
  %v3768 = vmul.f32 %v3767, 0.6931472
  %v3769 = vlog2.pop %v3751
  %v3770 = vmul.f32 %v3769, 0.6931472
  %v3771 = vlog2.pop %v3754
  %v3772 = vmul.f32 %v3771, 0.6931472
  %v3773 = vlog2.pop %v3757
  %v3774 = vmul.f32 %v3773, 0.6931472
  %v3775 = vlog2.pop %v3760
  %v3776 = vmul.f32 %v3775, 0.6931472
  %v3777 = vadd.f32 %v3762, %v3691
  %v3778 = vadd.f32 %v3764, %v3694
  %v3779 = vadd.f32 %v3766, %v3697
  %v3780 = vadd.f32 %v3768, %v3700
  %v3781 = vadd.f32 %v3770, %v3703
  %v3782 = vadd.f32 %v3772, %v3706
  %v3783 = vadd.f32 %v3774, %v3709
  %v3784 = vadd.f32 %v3776, %v3712
  %v3785 = vsub.f32 %v3650, %v3777
  %v3786 = vsub.f32 %v3655, %v3778
  %v3787 = vsub.f32 %v3660, %v3779
  %v3788 = vsub.f32 %v3665, %v3780
  %v3789 = vsub.f32 %v3670, %v3781
  %v3790 = vsub.f32 %v3675, %v3782
  %v3791 = vsub.f32 %v3680, %v3783
  %v3792 = vsub.f32 %v3685, %v3784
  %3793 = vst.msk [vmem:[%s8] sm:$0xff] %vm3688, %v3785
  %3794 = vst.msk [vmem:[%s8 + $0x8] sm:$0xff] %vm3688, %v3786
  %3795 = vst.msk [vmem:[%s8 + $0x10] sm:$0xff] %vm3688, %v3787
  %3796 = vst.msk [vmem:[%s8 + $0x18] sm:$0xff] %vm3688, %v3788
  %3797 = vst.msk [vmem:[%s8 + $0x20] sm:$0xff] %vm3688, %v3789
  %3798 = vst.msk [vmem:[%s8 + $0x28] sm:$0xff] %vm3688, %v3790
  %3799 = vst.msk [vmem:[%s8 + $0x30] sm:$0xff] %vm3688, %v3791
  %3800 = vst.msk [vmem:[%s8 + $0x38] sm:$0xff] %vm3688, %v3792
  // Predicated region
  $region34: #{tpu_custom_call.1} parent=0 // pred_check
    _
  $region35: #{tpu_custom_call.1} parent=0 // pred_check_branch
    %3802 = sbr.rel (0) target = $region37
  $region36: #{tpu_custom_call.1} parent=0 // pred_region
    _
  $region37: #{tpu_custom_call.1} parent=0 // pred_fallthru
    _
  // Predicated region
  $region38: #{tpu_custom_call.1} parent=0 // pred_check
    _
  $region39: #{tpu_custom_call.1} parent=0 // pred_check_branch
    %3804 = sbr.rel (0) target = $region41
  $region40: #{tpu_custom_call.1} parent=0 // pred_region
    _
  $region41: #{tpu_custom_call.1} parent=0 // pred_fallthru
    _

</llo_original>
